<compile_context>
chip_gen: v5e
topology: v5e:2x2
jax: 0.10.0
libtpu: 0.0.40
codegen_flags: <defaults>
</compile_context>

<pallas_src>
import functools
import math

import jax
import jax.numpy as jnp
from jax.experimental import pallas as pl
from jax.experimental.pallas import tpu as pltpu


def _vmem_limit_bytes():
    """Per-generation scoped-VMEM budget with headroom (v7x: ~48 MiB, v5e/v6e: ~96 MiB)."""
    cap = 128 * 1024 * 1024
    try:
        info = pltpu.get_tpu_info()
        cap = int(getattr(info, "vmem_capacity_bytes", cap))
    except Exception:
        pass
    return max(32 * 1024 * 1024, min((cap * 3) // 4, 96 * 1024 * 1024))


_VMEM_LIMIT = _vmem_limit_bytes()


def _pick_tile(dim, cands):
    """Largest candidate that evenly divides `dim`; fall back to the full extent
    (a full-extent block is always a legal TPU block shape)."""
    for c in cands:
        if dim >= c and dim % c == 0:
            return c
    return dim


_ROW_TILES = (512, 256, 128, 64, 32, 16)   # multiples of 16 (bf16 sublane packing)


# ---------------------------------------------------------------------------
# Fused self-attention sub-layer:  LN(x + W_o * MHA(x W_qkv))   (one call/layer)
# ---------------------------------------------------------------------------

def _mha_heads(q, k_src, v_src, n_heads, dh, k_off, v_off, scale):
    """Per-head attention; returns a lane-dense (Sq, n_heads*dh) f32 array."""
    heads = []
    for h in range(n_heads):      # static unroll; per-head state is tiny (Sq x Sk)
        qh = q[:, h * dh:(h + 1) * dh]
        kh = k_src[:, k_off + h * dh:k_off + (h + 1) * dh]
        vh = v_src[:, v_off + h * dh:v_off + (h + 1) * dh]
        s = jax.lax.dot_general(qh, kh, (((1,), (1,)), ((), ())),
                                preferred_element_type=jnp.float32) * scale
        m = jnp.max(s, axis=-1, keepdims=True)
        p = jnp.exp(s - m)
        p = p / jnp.sum(p, axis=-1, keepdims=True)            # exact softmax
        heads.append(jnp.dot(p.astype(vh.dtype), vh,
                             preferred_element_type=jnp.float32))
    return jnp.concatenate(heads, axis=-1)                    # single dense slab


def _add_layer_norm(y, g, b, eps):
    mu = jnp.mean(y, axis=-1, keepdims=True)
    yc = y - mu
    var = jnp.mean(yc * yc, axis=-1, keepdims=True)
    return yc * jax.lax.rsqrt(var + eps) * g + b


def _sa_block_kernel(x_ref, wqkv_ref, bqkv_ref, wo_ref, bo_ref, g_ref, beta_ref,
                     o_ref, *, n_heads, dh, d_model, scale, eps):
    x = x_ref[0]                                              # (S, D) bf16
    qkv = jnp.dot(x, wqkv_ref[...], preferred_element_type=jnp.float32)
    qkv = (qkv + bqkv_ref[...]).astype(x.dtype)               # (S, 3D) bf16, fused QKV
    attn = _mha_heads(qkv, qkv, qkv, n_heads, dh,
                      k_off=d_model, v_off=2 * d_model, scale=scale)
    out = jnp.dot(attn.astype(x.dtype), wo_ref[...],
                  preferred_element_type=jnp.float32) + bo_ref[...]
    y = out + x.astype(jnp.float32)                           # residual
    o_ref[0] = _add_layer_norm(y, g_ref[...], beta_ref[...], eps).astype(o_ref.dtype)


def self_attn_block(x3d, ap, ln_w, ln_b, n_heads, eps=1e-5):
    B, S, D = x3d.shape
    dh = D // n_heads
    kern = functools.partial(_sa_block_kernel, n_heads=n_heads, dh=dh,
                             d_model=D, scale=1.0 / math.sqrt(dh), eps=eps)
    return pl.pallas_call(
        kern,
        out_shape=jax.ShapeDtypeStruct((B, S, D), jnp.bfloat16),
        grid=(B,),
        in_specs=[
            pl.BlockSpec((1, S, D), lambda b: (b, 0, 0)),
            pl.BlockSpec((D, 3 * D), lambda b: (0, 0)),
            pl.BlockSpec((1, 3 * D), lambda b: (0, 0)),
            pl.BlockSpec((D, D), lambda b: (0, 0)),
            pl.BlockSpec((1, D), lambda b: (0, 0)),
            pl.BlockSpec((1, D), lambda b: (0, 0)),
            pl.BlockSpec((1, D), lambda b: (0, 0)),
        ],
        out_specs=pl.BlockSpec((1, S, D), lambda b: (b, 0, 0)),
        compiler_params=pltpu.CompilerParams(
            dimension_semantics=("parallel",), vmem_limit_bytes=_VMEM_LIMIT),
    )(x3d, ap["w_qkv"], ap["b_qkv"].reshape(1, 3 * D), ap["w_o"],
      ap["b_o"].reshape(1, D), ln_w.reshape(1, D), ln_b.reshape(1, D))


# ---------------------------------------------------------------------------
# Fused cross-attention sub-layer:  LN(y + W_o * MHA(y W_q, mem W_kv))
# ---------------------------------------------------------------------------

def _ca_block_kernel(y_ref, m_ref, wq_ref, bq_ref, wkv_ref, bkv_ref, wo_ref,
                     bo_ref, g_ref, beta_ref, o_ref, *, n_heads, dh, d_model,
                     scale, eps):
    y = y_ref[0]                                              # (St, D) bf16
    mem = m_ref[0]                                            # (Ss, D) bf16
    q = (jnp.dot(y, wq_ref[...], preferred_element_type=jnp.float32)
         + bq_ref[...]).astype(y.dtype)
    kv = (jnp.dot(mem, wkv_ref[...], preferred_element_type=jnp.float32)
          + bkv_ref[...]).astype(mem.dtype)                   # fused KV (Ss, 2D)
    attn = _mha_heads(q, kv, kv, n_heads, dh, k_off=0, v_off=d_model, scale=scale)
    out = jnp.dot(attn.astype(y.dtype), wo_ref[...],
                  preferred_element_type=jnp.float32) + bo_ref[...]
    z = out + y.astype(jnp.float32)                           # residual
    o_ref[0] = _add_layer_norm(z, g_ref[...], beta_ref[...], eps).astype(o_ref.dtype)


def cross_attn_block(y3d, mem3d, ap, ln_w, ln_b, n_heads, eps=1e-5):
    B, St, D = y3d.shape
    Ss = mem3d.shape[1]
    dh = D // n_heads
    kern = functools.partial(_ca_block_kernel, n_heads=n_heads, dh=dh,
                             d_model=D, scale=1.0 / math.sqrt(dh), eps=eps)
    return pl.pallas_call(
        kern,
        out_shape=jax.ShapeDtypeStruct((B, St, D), jnp.bfloat16),
        grid=(B,),
        in_specs=[
            pl.BlockSpec((1, St, D), lambda b: (b, 0, 0)),
            pl.BlockSpec((1, Ss, D), lambda b: (b, 0, 0)),
            pl.BlockSpec((D, D), lambda b: (0, 0)),
            pl.BlockSpec((1, D), lambda b: (0, 0)),
            pl.BlockSpec((D, 2 * D), lambda b: (0, 0)),
            pl.BlockSpec((1, 2 * D), lambda b: (0, 0)),
            pl.BlockSpec((D, D), lambda b: (0, 0)),
            pl.BlockSpec((1, D), lambda b: (0, 0)),
            pl.BlockSpec((1, D), lambda b: (0, 0)),
            pl.BlockSpec((1, D), lambda b: (0, 0)),
        ],
        out_specs=pl.BlockSpec((1, St, D), lambda b: (b, 0, 0)),
        compiler_params=pltpu.CompilerParams(
            dimension_semantics=("parallel",), vmem_limit_bytes=_VMEM_LIMIT),
    )(y3d, mem3d, ap["w_q"], ap["b_q"].reshape(1, D),
      ap["w_kv"], ap["b_kv"].reshape(1, 2 * D),
      ap["w_o"], ap["b_o"].reshape(1, D),
      ln_w.reshape(1, D), ln_b.reshape(1, D))


# ---------------------------------------------------------------------------
# Fused FFN + residual + LayerNorm, with d_ff as an "arbitrary" reduction axis
# (bounded live intermediate: only a (tm, d_ff_chunk) slab is ever live).
# ---------------------------------------------------------------------------

def _ffn_add_ln_kernel(x_ref, w1_ref, b1_ref, w2_ref, b2_ref, g_ref, beta_ref,
                       o_ref, acc_ref, *, eps):
    c = pl.program_id(1)

    @pl.when(c == 0)
    def _init():
        acc_ref[...] = jnp.zeros_like(acc_ref)

    x = x_ref[...]                                            # (tm, D) bf16
    h = jnp.dot(x, w1_ref[...], preferred_element_type=jnp.float32) + b1_ref[...]
    h = jnp.maximum(h, 0.0).astype(x.dtype)                   # (tm, d_ff_chunk)
    acc_ref[...] += jnp.dot(h, w2_ref[...], preferred_element_type=jnp.float32)

    @pl.when(c == pl.num_programs(1) - 1)
    def _finalize():
        y = acc_ref[...] + b2_ref[...] + x.astype(jnp.float32)   # + residual
        o_ref[...] = _add_layer_norm(y, g_ref[...], beta_ref[...], eps).astype(o_ref.dtype)


def ffn_add_layer_norm(x2d, w1, b1, w2, b2, gamma, beta, eps=1e-5):
    M, D = x2d.shape
    d_ff = w1.shape[1]
    tm = _pick_tile(M, _ROW_TILES)
    tc = _pick_tile(d_ff, (512, 256, 128))
    kern = functools.partial(_ffn_add_ln_kernel, eps=eps)
    return pl.pallas_call(
        kern,
        out_shape=jax.ShapeDtypeStruct((M, D), jnp.bfloat16),
        grid=(M // tm, d_ff // tc),
        in_specs=[
            pl.BlockSpec((tm, D), lambda i, c: (i, 0)),
            pl.BlockSpec((D, tc), lambda i, c: (0, c)),
            pl.BlockSpec((1, tc), lambda i, c: (0, c)),
            pl.BlockSpec((tc, D), lambda i, c: (c, 0)),
            pl.BlockSpec((1, D), lambda i, c: (0, 0)),
            pl.BlockSpec((1, D), lambda i, c: (0, 0)),
            pl.BlockSpec((1, D), lambda i, c: (0, 0)),
        ],
        out_specs=pl.BlockSpec((tm, D), lambda i, c: (i, 0)),
        scratch_shapes=[pltpu.VMEM((tm, D), jnp.float32)],
        compiler_params=pltpu.CompilerParams(
            dimension_semantics=("parallel", "arbitrary"),
            vmem_limit_bytes=_VMEM_LIMIT),
    )(x2d, w1, b1.reshape(1, d_ff), w2, b2.reshape(1, D),
      gamma.reshape(1, D), beta.reshape(1, D))


# ---------------------------------------------------------------------------
# Standalone LayerNorm (encoder final norm) and fused LayerNorm + output Linear
# ---------------------------------------------------------------------------

def _layernorm_kernel(x_ref, g_ref, b_ref, o_ref, *, eps):
    x = x_ref[...].astype(jnp.float32)
    o_ref[...] = _add_layer_norm(x, g_ref[...], b_ref[...], eps).astype(o_ref.dtype)


def layer_norm(x2d, gamma, beta, eps=1e-5):
    M, D = x2d.shape
    tm = _pick_tile(M, _ROW_TILES)
    kern = functools.partial(_layernorm_kernel, eps=eps)
    return pl.pallas_call(
        kern,
        out_shape=jax.ShapeDtypeStruct((M, D), jnp.bfloat16),
        grid=(M // tm,),
        in_specs=[
            pl.BlockSpec((tm, D), lambda i: (i, 0)),
            pl.BlockSpec((1, D), lambda i: (0, 0)),
            pl.BlockSpec((1, D), lambda i: (0, 0)),
        ],
        out_specs=pl.BlockSpec((tm, D), lambda i: (i, 0)),
        compiler_params=pltpu.CompilerParams(
            dimension_semantics=("parallel",), vmem_limit_bytes=_VMEM_LIMIT),
    )(x2d, gamma.reshape(1, D), beta.reshape(1, D))


def _ln_linear_kernel(x_ref, g_ref, beta_ref, w_ref, b_ref, o_ref, *, eps):
    x = x_ref[...].astype(jnp.float32)
    y = _add_layer_norm(x, g_ref[...], beta_ref[...], eps)
    out = jnp.dot(y.astype(w_ref.dtype), w_ref[...],
                  preferred_element_type=jnp.float32) + b_ref[...]
    o_ref[...] = out.astype(o_ref.dtype)


def layer_norm_linear(x2d, gamma, beta, w, b, eps=1e-5):
    M, D = x2d.shape
    N = w.shape[1]
    tm = _pick_tile(M, _ROW_TILES)
    kern = functools.partial(_ln_linear_kernel, eps=eps)
    return pl.pallas_call(
        kern,
        out_shape=jax.ShapeDtypeStruct((M, N), jnp.float32),
        grid=(M // tm,),
        in_specs=[
            pl.BlockSpec((tm, D), lambda i: (i, 0)),
            pl.BlockSpec((1, D), lambda i: (0, 0)),
            pl.BlockSpec((1, D), lambda i: (0, 0)),
            pl.BlockSpec((D, N), lambda i: (0, 0)),
            pl.BlockSpec((1, N), lambda i: (0, 0)),
        ],
        out_specs=pl.BlockSpec((tm, N), lambda i: (i, 0)),
        compiler_params=pltpu.CompilerParams(
            dimension_semantics=("parallel",), vmem_limit_bytes=_VMEM_LIMIT),
    )(x2d, gamma.reshape(1, D), beta.reshape(1, D), w, b.reshape(1, N))


# ---------------------------------------------------------------------------
# Model wiring (post-norm nn.Transformer semantics, eval mode, no masks)
# ---------------------------------------------------------------------------

def encoder_layer(p, x3d, n_heads):
    B, S, D = x3d.shape
    x = self_attn_block(x3d, p["sa"], p["ln1_w"], p["ln1_b"], n_heads)
    x = ffn_add_layer_norm(x.reshape(B * S, D), p["ff_w1"], p["ff_b1"],
                           p["ff_w2"], p["ff_b2"], p["ln2_w"], p["ln2_b"])
    return x.reshape(B, S, D)


def decoder_layer(p, y3d, mem3d, n_heads):
    B, St, D = y3d.shape
    y = self_attn_block(y3d, p["sa"], p["ln1_w"], p["ln1_b"], n_heads)
    y = cross_attn_block(y, mem3d, p["ca"], p["ln2_w"], p["ln2_b"], n_heads)
    y = ffn_add_layer_norm(y.reshape(B * St, D), p["ff_w1"], p["ff_b1"],
                           p["ff_w2"], p["ff_b2"], p["ln3_w"], p["ln3_b"])
    return y.reshape(B, St, D)


def transformer_v1_forward(params, src, tgt, n_heads):
    # src/tgt: (B, S, input_size) -> tiled to d_model = input_size * n_heads
    src = jnp.tile(src, (1, 1, n_heads)).astype(jnp.bfloat16)
    tgt = jnp.tile(tgt, (1, 1, n_heads)).astype(jnp.bfloat16)
    B, Ss, D = src.shape
    St = tgt.shape[1]

    x = src
    for lp in params["encoder"]["layers"]:
        x = encoder_layer(lp, x, n_heads)
    memory = layer_norm(x.reshape(B * Ss, D),
                        params["encoder"]["norm_w"],
                        params["encoder"]["norm_b"]).reshape(B, Ss, D)

    y = tgt
    for lp in params["decoder"]["layers"]:
        y = decoder_layer(lp, y, memory, n_heads)

    out = layer_norm_linear(y.reshape(B * St, D),
                            params["decoder"]["norm_w"],
                            params["decoder"]["norm_b"],
                            params["linear_w"], params["linear_b"])
    n_out = params["linear_w"].shape[1]
    return out.reshape(B, St, n_out)


# ---------------------------------------------------------------------------
# Parameter init
# ---------------------------------------------------------------------------

def _dense_params(key, d_in, d_out, scale=0.05):
    kw, kb = jax.random.split(key)
    w = (scale * jax.random.normal(kw, (d_in, d_out), jnp.float32)).astype(jnp.bfloat16)
    b = scale * jax.random.normal(kb, (d_out,), jnp.float32)
    return w, b


def _init_self_attn(key, d):
    k1, k2 = jax.random.split(key)
    w_qkv, b_qkv = _dense_params(k1, d, 3 * d)
    w_o, b_o = _dense_params(k2, d, d)
    return dict(w_qkv=w_qkv, b_qkv=b_qkv, w_o=w_o, b_o=b_o)


def _init_cross_attn(key, d):
    k1, k2, k3 = jax.random.split(key, 3)
    w_q, b_q = _dense_params(k1, d, d)
    w_kv, b_kv = _dense_params(k2, d, 2 * d)
    w_o, b_o = _dense_params(k3, d, d)
    return dict(w_q=w_q, b_q=b_q, w_kv=w_kv, b_kv=b_kv, w_o=w_o, b_o=b_o)


def _init_enc_layer(key, d, d_ff):
    ks = jax.random.split(key, 3)
    p = dict(sa=_init_self_attn(ks[0], d))
    p["ff_w1"], p["ff_b1"] = _dense_params(ks[1], d, d_ff)
    p["ff_w2"], p["ff_b2"] = _dense_params(ks[2], d_ff, d)
    p["ln1_w"] = jnp.ones((d,), jnp.float32); p["ln1_b"] = jnp.zeros((d,), jnp.float32)
    p["ln2_w"] = jnp.ones((d,), jnp.float32); p["ln2_b"] = jnp.zeros((d,), jnp.float32)
    return p


def _init_dec_layer(key, d, d_ff):
    ks = jax.random.split(key, 4)
    p = dict(sa=_init_self_attn(ks[0], d), ca=_init_cross_attn(ks[1], d))
    p["ff_w1"], p["ff_b1"] = _dense_params(ks[2], d, d_ff)
    p["ff_w2"], p["ff_b2"] = _dense_params(ks[3], d_ff, d)
    for n in ("ln1", "ln2", "ln3"):
        p[n + "_w"] = jnp.ones((d,), jnp.float32)
        p[n + "_b"] = jnp.zeros((d,), jnp.float32)
    return p


def init_transformer_v1(key, input_size, output_size, n_heads=8,
                        num_enc_layers=6, num_dec_layers=6, d_ff=2048):
    d = input_size * n_heads
    keys = jax.random.split(key, num_enc_layers + num_dec_layers + 1)
    enc = dict(
        layers=[_init_enc_layer(keys[i], d, d_ff) for i in range(num_enc_layers)],
        norm_w=jnp.ones((d,), jnp.float32), norm_b=jnp.zeros((d,), jnp.float32))
    dec = dict(
        layers=[_init_dec_layer(keys[num_enc_layers + i], d, d_ff)
                for i in range(num_dec_layers)],
        norm_w=jnp.ones((d,), jnp.float32), norm_b=jnp.zeros((d,), jnp.float32))
    lw, lb = _dense_params(keys[-1], d, output_size)
    return dict(encoder=enc, decoder=dec, linear_w=lw, linear_b=lb)


# ---------------------------------------------------------------------------
# Demo
# ---------------------------------------------------------------------------

if __name__ == "__main__":
    input_size = 4
    output_size = 4
    n_heads = 8            # d_model = 32, head_dim = 4
    num_enc_layers = 2
    num_dec_layers = 2
    B, S_src, S_tgt = 2, 8, 8

    root = jax.random.PRNGKey(0)
    kp, ks, kt = jax.random.split(root, 3)
    params = init_transformer_v1(kp, input_size, output_size, n_heads,
                                 num_enc_layers, num_dec_layers)

    src = jax.random.normal(ks, (B, S_src, input_size), jnp.float32)
    tgt = jax.random.normal(kt, (B, S_tgt, input_size), jnp.float32)

    fwd = jax.jit(functools.partial(transformer_v1_forward, n_heads=n_heads))
    out = fwd(params, src, tgt)
    out = jax.block_until_ready(out)

    assert out.shape == (B, S_tgt, output_size)
    assert jnp.all(jnp.isfinite(out))
    print("KERNEL_OK")
</pallas_src>

<mosaic_0001>
module attributes {stable_mosaic.version = 11 : i64} {
  func.func @_sa_block_kernel(%arg0: i32, %arg1: memref<1x8x32xbf16, #tpu.memory_space<vmem>>, %arg2: memref<32x96xbf16, #tpu.memory_space<vmem>>, %arg3: memref<1x96xf32, #tpu.memory_space<vmem>>, %arg4: memref<32x32xbf16, #tpu.memory_space<vmem>>, %arg5: memref<1x32xf32, #tpu.memory_space<vmem>>, %arg6: memref<1x32xf32, #tpu.memory_space<vmem>>, %arg7: memref<1x32xf32, #tpu.memory_space<vmem>>, %arg8: memref<1x8x32xbf16, #tpu.memory_space<vmem>>) attributes {dimension_semantics = [#tpu.dimension_semantics<parallel>], iteration_bounds = array<i64: 2>, scalar_prefetch = 0 : i64, scratch_operands = 0 : i64, tpu.core_type = #tpu.core_type<tc>, window_params = [{transform_indices = @transform_0, window_bounds = array<i64: 1, 8, 32>}, {pipeline_mode = #tpu.pipeline_mode<synchronous>, transform_indices = @transform_1, window_bounds = array<i64: 32, 96>}, {pipeline_mode = #tpu.pipeline_mode<synchronous>, transform_indices = @transform_2, window_bounds = array<i64: 1, 96>}, {pipeline_mode = #tpu.pipeline_mode<synchronous>, transform_indices = @transform_3, window_bounds = array<i64: 32, 32>}, {pipeline_mode = #tpu.pipeline_mode<synchronous>, transform_indices = @transform_4, window_bounds = array<i64: 1, 32>}, {pipeline_mode = #tpu.pipeline_mode<synchronous>, transform_indices = @transform_5, window_bounds = array<i64: 1, 32>}, {pipeline_mode = #tpu.pipeline_mode<synchronous>, transform_indices = @transform_6, window_bounds = array<i64: 1, 32>}, {transform_indices = @transform_7, window_bounds = array<i64: 1, 8, 32>}]} {
    %c0 = arith.constant 0 : index
    %c0_0 = arith.constant 0 : index
    %c0_1 = arith.constant 0 : index
    %0 = vector.load %arg1[%c0, %c0_0, %c0_1] : memref<1x8x32xbf16, #tpu.memory_space<vmem>>, vector<1x8x32xbf16>
    %1 = vector.shape_cast %0 : vector<1x8x32xbf16> to vector<8x32xbf16>
    %c0_2 = arith.constant 0 : index
    %c0_3 = arith.constant 0 : index
    %2 = vector.load %arg2[%c0_2, %c0_3] : memref<32x96xbf16, #tpu.memory_space<vmem>>, vector<32x96xbf16>
    %cst = arith.constant dense<0.000000e+00> : vector<8x96xf32>
    %3 = tpu.matmul %1, %2, %cst {dimension_numbers = #tpu.dot_dimension_numbers<[1], [0], [0], [1], [0, 0, 1, 1], [], []>} : vector<8x32xbf16>, vector<32x96xbf16>, vector<8x96xf32> -> vector<8x96xf32>
    %c0_4 = arith.constant 0 : index
    %c0_5 = arith.constant 0 : index
    %4 = vector.load %arg3[%c0_4, %c0_5] : memref<1x96xf32, #tpu.memory_space<vmem>>, vector<1x96xf32>
    %5 = vector.broadcast %4 : vector<1x96xf32> to vector<8x96xf32>
    %6 = arith.addf %3, %5 : vector<8x96xf32>
    %7 = arith.truncf %6 : vector<8x96xf32> to vector<8x96xbf16>
    %8 = vector.extract_strided_slice %7 {offsets = [0, 0], sizes = [8, 4], strides = [1, 1]} : vector<8x96xbf16> to vector<8x4xbf16>
    %9 = vector.extract_strided_slice %7 {offsets = [0, 32], sizes = [8, 4], strides = [1, 1]} : vector<8x96xbf16> to vector<8x4xbf16>
    %10 = vector.extract_strided_slice %7 {offsets = [0, 64], sizes = [8, 4], strides = [1, 1]} : vector<8x96xbf16> to vector<8x4xbf16>
    %cst_6 = arith.constant dense<0.000000e+00> : vector<8x8xf32>
    %11 = tpu.matmul %8, %9, %cst_6 {dimension_numbers = #tpu.dot_dimension_numbers<[1], [1], [0], [0], [0, 0, 1, 0], [], []>} : vector<8x4xbf16>, vector<8x4xbf16>, vector<8x8xf32> -> vector<8x8xf32>
    %cst_7 = arith.constant 5.000000e-01 : f32
    %12 = vector.broadcast %cst_7 : f32 to vector<8x8xf32>
    %13 = arith.mulf %11, %12 : vector<8x8xf32>
    %cst_8 = arith.constant dense<0xFF800000> : vector<8xf32>
    %14 = vector.multi_reduction <maximumf>, %13, %cst_8 [1] : vector<8x8xf32> to vector<8xf32>
    %15 = vector.shape_cast %14 : vector<8xf32> to vector<8x1xf32>
    %16 = vector.broadcast %15 : vector<8x1xf32> to vector<8x8xf32>
    %17 = arith.subf %13, %16 : vector<8x8xf32>
    %18 = math.exp %17 : vector<8x8xf32>
    %cst_9 = arith.constant dense<0.000000e+00> : vector<8xf32>
    %19 = vector.multi_reduction <add>, %18, %cst_9 [1] : vector<8x8xf32> to vector<8xf32>
    %20 = vector.shape_cast %19 : vector<8xf32> to vector<8x1xf32>
    %21 = vector.broadcast %20 : vector<8x1xf32> to vector<8x8xf32>
    %22 = arith.divf %18, %21 : vector<8x8xf32>
    %23 = arith.truncf %22 : vector<8x8xf32> to vector<8x8xbf16>
    %cst_10 = arith.constant dense<0.000000e+00> : vector<8x4xf32>
    %24 = tpu.matmul %23, %10, %cst_10 {dimension_numbers = #tpu.dot_dimension_numbers<[1], [0], [0], [1], [0, 0, 1, 1], [], []>} : vector<8x8xbf16>, vector<8x4xbf16>, vector<8x4xf32> -> vector<8x4xf32>
    %25 = vector.extract_strided_slice %7 {offsets = [0, 4], sizes = [8, 4], strides = [1, 1]} : vector<8x96xbf16> to vector<8x4xbf16>
    %26 = vector.extract_strided_slice %7 {offsets = [0, 36], sizes = [8, 4], strides = [1, 1]} : vector<8x96xbf16> to vector<8x4xbf16>
    %27 = vector.extract_strided_slice %7 {offsets = [0, 68], sizes = [8, 4], strides = [1, 1]} : vector<8x96xbf16> to vector<8x4xbf16>
    %cst_11 = arith.constant dense<0.000000e+00> : vector<8x8xf32>
    %28 = tpu.matmul %25, %26, %cst_11 {dimension_numbers = #tpu.dot_dimension_numbers<[1], [1], [0], [0], [0, 0, 1, 0], [], []>} : vector<8x4xbf16>, vector<8x4xbf16>, vector<8x8xf32> -> vector<8x8xf32>
    %cst_12 = arith.constant 5.000000e-01 : f32
    %29 = vector.broadcast %cst_12 : f32 to vector<8x8xf32>
    %30 = arith.mulf %28, %29 : vector<8x8xf32>
    %cst_13 = arith.constant dense<0xFF800000> : vector<8xf32>
    %31 = vector.multi_reduction <maximumf>, %30, %cst_13 [1] : vector<8x8xf32> to vector<8xf32>
    %32 = vector.shape_cast %31 : vector<8xf32> to vector<8x1xf32>
    %33 = vector.broadcast %32 : vector<8x1xf32> to vector<8x8xf32>
    %34 = arith.subf %30, %33 : vector<8x8xf32>
    %35 = math.exp %34 : vector<8x8xf32>
    %cst_14 = arith.constant dense<0.000000e+00> : vector<8xf32>
    %36 = vector.multi_reduction <add>, %35, %cst_14 [1] : vector<8x8xf32> to vector<8xf32>
    %37 = vector.shape_cast %36 : vector<8xf32> to vector<8x1xf32>
    %38 = vector.broadcast %37 : vector<8x1xf32> to vector<8x8xf32>
    %39 = arith.divf %35, %38 : vector<8x8xf32>
    %40 = arith.truncf %39 : vector<8x8xf32> to vector<8x8xbf16>
    %cst_15 = arith.constant dense<0.000000e+00> : vector<8x4xf32>
    %41 = tpu.matmul %40, %27, %cst_15 {dimension_numbers = #tpu.dot_dimension_numbers<[1], [0], [0], [1], [0, 0, 1, 1], [], []>} : vector<8x8xbf16>, vector<8x4xbf16>, vector<8x4xf32> -> vector<8x4xf32>
    %42 = vector.extract_strided_slice %7 {offsets = [0, 8], sizes = [8, 4], strides = [1, 1]} : vector<8x96xbf16> to vector<8x4xbf16>
    %43 = vector.extract_strided_slice %7 {offsets = [0, 40], sizes = [8, 4], strides = [1, 1]} : vector<8x96xbf16> to vector<8x4xbf16>
    %44 = vector.extract_strided_slice %7 {offsets = [0, 72], sizes = [8, 4], strides = [1, 1]} : vector<8x96xbf16> to vector<8x4xbf16>
    %cst_16 = arith.constant dense<0.000000e+00> : vector<8x8xf32>
    %45 = tpu.matmul %42, %43, %cst_16 {dimension_numbers = #tpu.dot_dimension_numbers<[1], [1], [0], [0], [0, 0, 1, 0], [], []>} : vector<8x4xbf16>, vector<8x4xbf16>, vector<8x8xf32> -> vector<8x8xf32>
    %cst_17 = arith.constant 5.000000e-01 : f32
    %46 = vector.broadcast %cst_17 : f32 to vector<8x8xf32>
    %47 = arith.mulf %45, %46 : vector<8x8xf32>
    %cst_18 = arith.constant dense<0xFF800000> : vector<8xf32>
    %48 = vector.multi_reduction <maximumf>, %47, %cst_18 [1] : vector<8x8xf32> to vector<8xf32>
    %49 = vector.shape_cast %48 : vector<8xf32> to vector<8x1xf32>
    %50 = vector.broadcast %49 : vector<8x1xf32> to vector<8x8xf32>
    %51 = arith.subf %47, %50 : vector<8x8xf32>
    %52 = math.exp %51 : vector<8x8xf32>
    %cst_19 = arith.constant dense<0.000000e+00> : vector<8xf32>
    %53 = vector.multi_reduction <add>, %52, %cst_19 [1] : vector<8x8xf32> to vector<8xf32>
    %54 = vector.shape_cast %53 : vector<8xf32> to vector<8x1xf32>
    %55 = vector.broadcast %54 : vector<8x1xf32> to vector<8x8xf32>
    %56 = arith.divf %52, %55 : vector<8x8xf32>
    %57 = arith.truncf %56 : vector<8x8xf32> to vector<8x8xbf16>
    %cst_20 = arith.constant dense<0.000000e+00> : vector<8x4xf32>
    %58 = tpu.matmul %57, %44, %cst_20 {dimension_numbers = #tpu.dot_dimension_numbers<[1], [0], [0], [1], [0, 0, 1, 1], [], []>} : vector<8x8xbf16>, vector<8x4xbf16>, vector<8x4xf32> -> vector<8x4xf32>
    %59 = vector.extract_strided_slice %7 {offsets = [0, 12], sizes = [8, 4], strides = [1, 1]} : vector<8x96xbf16> to vector<8x4xbf16>
    %60 = vector.extract_strided_slice %7 {offsets = [0, 44], sizes = [8, 4], strides = [1, 1]} : vector<8x96xbf16> to vector<8x4xbf16>
    %61 = vector.extract_strided_slice %7 {offsets = [0, 76], sizes = [8, 4], strides = [1, 1]} : vector<8x96xbf16> to vector<8x4xbf16>
    %cst_21 = arith.constant dense<0.000000e+00> : vector<8x8xf32>
    %62 = tpu.matmul %59, %60, %cst_21 {dimension_numbers = #tpu.dot_dimension_numbers<[1], [1], [0], [0], [0, 0, 1, 0], [], []>} : vector<8x4xbf16>, vector<8x4xbf16>, vector<8x8xf32> -> vector<8x8xf32>
    %cst_22 = arith.constant 5.000000e-01 : f32
    %63 = vector.broadcast %cst_22 : f32 to vector<8x8xf32>
    %64 = arith.mulf %62, %63 : vector<8x8xf32>
    %cst_23 = arith.constant dense<0xFF800000> : vector<8xf32>
    %65 = vector.multi_reduction <maximumf>, %64, %cst_23 [1] : vector<8x8xf32> to vector<8xf32>
    %66 = vector.shape_cast %65 : vector<8xf32> to vector<8x1xf32>
    %67 = vector.broadcast %66 : vector<8x1xf32> to vector<8x8xf32>
    %68 = arith.subf %64, %67 : vector<8x8xf32>
    %69 = math.exp %68 : vector<8x8xf32>
    %cst_24 = arith.constant dense<0.000000e+00> : vector<8xf32>
    %70 = vector.multi_reduction <add>, %69, %cst_24 [1] : vector<8x8xf32> to vector<8xf32>
    %71 = vector.shape_cast %70 : vector<8xf32> to vector<8x1xf32>
    %72 = vector.broadcast %71 : vector<8x1xf32> to vector<8x8xf32>
    %73 = arith.divf %69, %72 : vector<8x8xf32>
    %74 = arith.truncf %73 : vector<8x8xf32> to vector<8x8xbf16>
    %cst_25 = arith.constant dense<0.000000e+00> : vector<8x4xf32>
    %75 = tpu.matmul %74, %61, %cst_25 {dimension_numbers = #tpu.dot_dimension_numbers<[1], [0], [0], [1], [0, 0, 1, 1], [], []>} : vector<8x8xbf16>, vector<8x4xbf16>, vector<8x4xf32> -> vector<8x4xf32>
    %76 = vector.extract_strided_slice %7 {offsets = [0, 16], sizes = [8, 4], strides = [1, 1]} : vector<8x96xbf16> to vector<8x4xbf16>
    %77 = vector.extract_strided_slice %7 {offsets = [0, 48], sizes = [8, 4], strides = [1, 1]} : vector<8x96xbf16> to vector<8x4xbf16>
    %78 = vector.extract_strided_slice %7 {offsets = [0, 80], sizes = [8, 4], strides = [1, 1]} : vector<8x96xbf16> to vector<8x4xbf16>
    %cst_26 = arith.constant dense<0.000000e+00> : vector<8x8xf32>
    %79 = tpu.matmul %76, %77, %cst_26 {dimension_numbers = #tpu.dot_dimension_numbers<[1], [1], [0], [0], [0, 0, 1, 0], [], []>} : vector<8x4xbf16>, vector<8x4xbf16>, vector<8x8xf32> -> vector<8x8xf32>
    %cst_27 = arith.constant 5.000000e-01 : f32
    %80 = vector.broadcast %cst_27 : f32 to vector<8x8xf32>
    %81 = arith.mulf %79, %80 : vector<8x8xf32>
    %cst_28 = arith.constant dense<0xFF800000> : vector<8xf32>
    %82 = vector.multi_reduction <maximumf>, %81, %cst_28 [1] : vector<8x8xf32> to vector<8xf32>
    %83 = vector.shape_cast %82 : vector<8xf32> to vector<8x1xf32>
    %84 = vector.broadcast %83 : vector<8x1xf32> to vector<8x8xf32>
    %85 = arith.subf %81, %84 : vector<8x8xf32>
    %86 = math.exp %85 : vector<8x8xf32>
    %cst_29 = arith.constant dense<0.000000e+00> : vector<8xf32>
    %87 = vector.multi_reduction <add>, %86, %cst_29 [1] : vector<8x8xf32> to vector<8xf32>
    %88 = vector.shape_cast %87 : vector<8xf32> to vector<8x1xf32>
    %89 = vector.broadcast %88 : vector<8x1xf32> to vector<8x8xf32>
    %90 = arith.divf %86, %89 : vector<8x8xf32>
    %91 = arith.truncf %90 : vector<8x8xf32> to vector<8x8xbf16>
    %cst_30 = arith.constant dense<0.000000e+00> : vector<8x4xf32>
    %92 = tpu.matmul %91, %78, %cst_30 {dimension_numbers = #tpu.dot_dimension_numbers<[1], [0], [0], [1], [0, 0, 1, 1], [], []>} : vector<8x8xbf16>, vector<8x4xbf16>, vector<8x4xf32> -> vector<8x4xf32>
    %93 = vector.extract_strided_slice %7 {offsets = [0, 20], sizes = [8, 4], strides = [1, 1]} : vector<8x96xbf16> to vector<8x4xbf16>
    %94 = vector.extract_strided_slice %7 {offsets = [0, 52], sizes = [8, 4], strides = [1, 1]} : vector<8x96xbf16> to vector<8x4xbf16>
    %95 = vector.extract_strided_slice %7 {offsets = [0, 84], sizes = [8, 4], strides = [1, 1]} : vector<8x96xbf16> to vector<8x4xbf16>
    %cst_31 = arith.constant dense<0.000000e+00> : vector<8x8xf32>
    %96 = tpu.matmul %93, %94, %cst_31 {dimension_numbers = #tpu.dot_dimension_numbers<[1], [1], [0], [0], [0, 0, 1, 0], [], []>} : vector<8x4xbf16>, vector<8x4xbf16>, vector<8x8xf32> -> vector<8x8xf32>
    %cst_32 = arith.constant 5.000000e-01 : f32
    %97 = vector.broadcast %cst_32 : f32 to vector<8x8xf32>
    %98 = arith.mulf %96, %97 : vector<8x8xf32>
    %cst_33 = arith.constant dense<0xFF800000> : vector<8xf32>
    %99 = vector.multi_reduction <maximumf>, %98, %cst_33 [1] : vector<8x8xf32> to vector<8xf32>
    %100 = vector.shape_cast %99 : vector<8xf32> to vector<8x1xf32>
    %101 = vector.broadcast %100 : vector<8x1xf32> to vector<8x8xf32>
    %102 = arith.subf %98, %101 : vector<8x8xf32>
    %103 = math.exp %102 : vector<8x8xf32>
    %cst_34 = arith.constant dense<0.000000e+00> : vector<8xf32>
    %104 = vector.multi_reduction <add>, %103, %cst_34 [1] : vector<8x8xf32> to vector<8xf32>
    %105 = vector.shape_cast %104 : vector<8xf32> to vector<8x1xf32>
    %106 = vector.broadcast %105 : vector<8x1xf32> to vector<8x8xf32>
    %107 = arith.divf %103, %106 : vector<8x8xf32>
    %108 = arith.truncf %107 : vector<8x8xf32> to vector<8x8xbf16>
    %cst_35 = arith.constant dense<0.000000e+00> : vector<8x4xf32>
    %109 = tpu.matmul %108, %95, %cst_35 {dimension_numbers = #tpu.dot_dimension_numbers<[1], [0], [0], [1], [0, 0, 1, 1], [], []>} : vector<8x8xbf16>, vector<8x4xbf16>, vector<8x4xf32> -> vector<8x4xf32>
    %110 = vector.extract_strided_slice %7 {offsets = [0, 24], sizes = [8, 4], strides = [1, 1]} : vector<8x96xbf16> to vector<8x4xbf16>
    %111 = vector.extract_strided_slice %7 {offsets = [0, 56], sizes = [8, 4], strides = [1, 1]} : vector<8x96xbf16> to vector<8x4xbf16>
    %112 = vector.extract_strided_slice %7 {offsets = [0, 88], sizes = [8, 4], strides = [1, 1]} : vector<8x96xbf16> to vector<8x4xbf16>
    %cst_36 = arith.constant dense<0.000000e+00> : vector<8x8xf32>
    %113 = tpu.matmul %110, %111, %cst_36 {dimension_numbers = #tpu.dot_dimension_numbers<[1], [1], [0], [0], [0, 0, 1, 0], [], []>} : vector<8x4xbf16>, vector<8x4xbf16>, vector<8x8xf32> -> vector<8x8xf32>
    %cst_37 = arith.constant 5.000000e-01 : f32
    %114 = vector.broadcast %cst_37 : f32 to vector<8x8xf32>
    %115 = arith.mulf %113, %114 : vector<8x8xf32>
    %cst_38 = arith.constant dense<0xFF800000> : vector<8xf32>
    %116 = vector.multi_reduction <maximumf>, %115, %cst_38 [1] : vector<8x8xf32> to vector<8xf32>
    %117 = vector.shape_cast %116 : vector<8xf32> to vector<8x1xf32>
    %118 = vector.broadcast %117 : vector<8x1xf32> to vector<8x8xf32>
    %119 = arith.subf %115, %118 : vector<8x8xf32>
    %120 = math.exp %119 : vector<8x8xf32>
    %cst_39 = arith.constant dense<0.000000e+00> : vector<8xf32>
    %121 = vector.multi_reduction <add>, %120, %cst_39 [1] : vector<8x8xf32> to vector<8xf32>
    %122 = vector.shape_cast %121 : vector<8xf32> to vector<8x1xf32>
    %123 = vector.broadcast %122 : vector<8x1xf32> to vector<8x8xf32>
    %124 = arith.divf %120, %123 : vector<8x8xf32>
    %125 = arith.truncf %124 : vector<8x8xf32> to vector<8x8xbf16>
    %cst_40 = arith.constant dense<0.000000e+00> : vector<8x4xf32>
    %126 = tpu.matmul %125, %112, %cst_40 {dimension_numbers = #tpu.dot_dimension_numbers<[1], [0], [0], [1], [0, 0, 1, 1], [], []>} : vector<8x8xbf16>, vector<8x4xbf16>, vector<8x4xf32> -> vector<8x4xf32>
    %127 = vector.extract_strided_slice %7 {offsets = [0, 28], sizes = [8, 4], strides = [1, 1]} : vector<8x96xbf16> to vector<8x4xbf16>
    %128 = vector.extract_strided_slice %7 {offsets = [0, 60], sizes = [8, 4], strides = [1, 1]} : vector<8x96xbf16> to vector<8x4xbf16>
    %129 = vector.extract_strided_slice %7 {offsets = [0, 92], sizes = [8, 4], strides = [1, 1]} : vector<8x96xbf16> to vector<8x4xbf16>
    %cst_41 = arith.constant dense<0.000000e+00> : vector<8x8xf32>
    %130 = tpu.matmul %127, %128, %cst_41 {dimension_numbers = #tpu.dot_dimension_numbers<[1], [1], [0], [0], [0, 0, 1, 0], [], []>} : vector<8x4xbf16>, vector<8x4xbf16>, vector<8x8xf32> -> vector<8x8xf32>
    %cst_42 = arith.constant 5.000000e-01 : f32
    %131 = vector.broadcast %cst_42 : f32 to vector<8x8xf32>
    %132 = arith.mulf %130, %131 : vector<8x8xf32>
    %cst_43 = arith.constant dense<0xFF800000> : vector<8xf32>
    %133 = vector.multi_reduction <maximumf>, %132, %cst_43 [1] : vector<8x8xf32> to vector<8xf32>
    %134 = vector.shape_cast %133 : vector<8xf32> to vector<8x1xf32>
    %135 = vector.broadcast %134 : vector<8x1xf32> to vector<8x8xf32>
    %136 = arith.subf %132, %135 : vector<8x8xf32>
    %137 = math.exp %136 : vector<8x8xf32>
    %cst_44 = arith.constant dense<0.000000e+00> : vector<8xf32>
    %138 = vector.multi_reduction <add>, %137, %cst_44 [1] : vector<8x8xf32> to vector<8xf32>
    %139 = vector.shape_cast %138 : vector<8xf32> to vector<8x1xf32>
    %140 = vector.broadcast %139 : vector<8x1xf32> to vector<8x8xf32>
    %141 = arith.divf %137, %140 : vector<8x8xf32>
    %142 = arith.truncf %141 : vector<8x8xf32> to vector<8x8xbf16>
    %cst_45 = arith.constant dense<0.000000e+00> : vector<8x4xf32>
    %143 = tpu.matmul %142, %129, %cst_45 {dimension_numbers = #tpu.dot_dimension_numbers<[1], [0], [0], [1], [0, 0, 1, 1], [], []>} : vector<8x8xbf16>, vector<8x4xbf16>, vector<8x4xf32> -> vector<8x4xf32>
    %144 = tpu.concatenate %24, %41, %58, %75, %92, %109, %126, %143 in 1 : vector<8x4xf32>, vector<8x4xf32>, vector<8x4xf32>, vector<8x4xf32>, vector<8x4xf32>, vector<8x4xf32>, vector<8x4xf32>, vector<8x4xf32> -> vector<8x32xf32>
    %145 = arith.truncf %144 : vector<8x32xf32> to vector<8x32xbf16>
    %c0_46 = arith.constant 0 : index
    %c0_47 = arith.constant 0 : index
    %146 = vector.load %arg4[%c0_46, %c0_47] : memref<32x32xbf16, #tpu.memory_space<vmem>>, vector<32x32xbf16>
    %cst_48 = arith.constant dense<0.000000e+00> : vector<8x32xf32>
    %147 = tpu.matmul %145, %146, %cst_48 {dimension_numbers = #tpu.dot_dimension_numbers<[1], [0], [0], [1], [0, 0, 1, 1], [], []>} : vector<8x32xbf16>, vector<32x32xbf16>, vector<8x32xf32> -> vector<8x32xf32>
    %c0_49 = arith.constant 0 : index
    %c0_50 = arith.constant 0 : index
    %148 = vector.load %arg5[%c0_49, %c0_50] : memref<1x32xf32, #tpu.memory_space<vmem>>, vector<1x32xf32>
    %149 = vector.broadcast %148 : vector<1x32xf32> to vector<8x32xf32>
    %150 = arith.addf %147, %149 : vector<8x32xf32>
    %151 = arith.extf %1 : vector<8x32xbf16> to vector<8x32xf32>
    %152 = arith.addf %150, %151 : vector<8x32xf32>
    %c0_51 = arith.constant 0 : index
    %c0_52 = arith.constant 0 : index
    %153 = vector.load %arg6[%c0_51, %c0_52] : memref<1x32xf32, #tpu.memory_space<vmem>>, vector<1x32xf32>
    %c0_53 = arith.constant 0 : index
    %c0_54 = arith.constant 0 : index
    %154 = vector.load %arg7[%c0_53, %c0_54] : memref<1x32xf32, #tpu.memory_space<vmem>>, vector<1x32xf32>
    %cst_55 = arith.constant dense<0.000000e+00> : vector<8xf32>
    %155 = vector.multi_reduction <add>, %152, %cst_55 [1] : vector<8x32xf32> to vector<8xf32>
    %156 = vector.shape_cast %155 : vector<8xf32> to vector<8x1xf32>
    %cst_56 = arith.constant 3.200000e+01 : f32
    %157 = vector.broadcast %cst_56 : f32 to vector<8x1xf32>
    %158 = arith.divf %156, %157 : vector<8x1xf32>
    %159 = vector.broadcast %158 : vector<8x1xf32> to vector<8x32xf32>
    %160 = arith.subf %152, %159 : vector<8x32xf32>
    %161 = arith.mulf %160, %160 : vector<8x32xf32>
    %cst_57 = arith.constant dense<0.000000e+00> : vector<8xf32>
    %162 = vector.multi_reduction <add>, %161, %cst_57 [1] : vector<8x32xf32> to vector<8xf32>
    %163 = vector.shape_cast %162 : vector<8xf32> to vector<8x1xf32>
    %cst_58 = arith.constant 3.200000e+01 : f32
    %164 = vector.broadcast %cst_58 : f32 to vector<8x1xf32>
    %165 = arith.divf %163, %164 : vector<8x1xf32>
    %cst_59 = arith.constant 9.99999974E-6 : f32
    %166 = vector.broadcast %cst_59 : f32 to vector<8x1xf32>
    %167 = arith.addf %165, %166 : vector<8x1xf32>
    %168 = math.rsqrt %167 : vector<8x1xf32>
    %169 = vector.broadcast %168 : vector<8x1xf32> to vector<8x32xf32>
    %170 = arith.mulf %160, %169 : vector<8x32xf32>
    %171 = vector.broadcast %153 : vector<1x32xf32> to vector<8x32xf32>
    %172 = arith.mulf %170, %171 : vector<8x32xf32>
    %173 = vector.broadcast %154 : vector<1x32xf32> to vector<8x32xf32>
    %174 = arith.addf %172, %173 : vector<8x32xf32>
    %175 = arith.truncf %174 : vector<8x32xf32> to vector<8x32xbf16>
    %c0_60 = arith.constant 0 : index
    %c0_61 = arith.constant 0 : index
    %c0_62 = arith.constant 0 : index
    %176 = vector.load %arg8[%c0_60, %c0_61, %c0_62] : memref<1x8x32xbf16, #tpu.memory_space<vmem>>, vector<1x8x32xbf16>
    %177 = vector.shape_cast %176 : vector<1x8x32xbf16> to vector<8x32xbf16>
    %178 = vector.shape_cast %175 : vector<8x32xbf16> to vector<1x8x32xbf16>
    tpu.vector_store %arg8[%c0_60, %c0_61, %c0_62], %178 {strides = array<i32>} : memref<1x8x32xbf16, #tpu.memory_space<vmem>>, vector<1x8x32xbf16>,
    return
  }
  func.func @transform_0(%arg0: i32) -> (i32, i32, i32) {
    %c0_i32 = arith.constant 0 : i32
    %c0_i32_0 = arith.constant 0 : i32
    %c0_i32_1 = arith.constant 0 : i32
    return %arg0, %c0_i32, %c0_i32_0 : i32, i32, i32
  }
  func.func @transform_1(%arg0: i32) -> (i32, i32) {
    %c0_i32 = arith.constant 0 : i32
    %c0_i32_0 = arith.constant 0 : i32
    %c0_i32_1 = arith.constant 0 : i32
    return %c0_i32, %c0_i32_0 : i32, i32
  }
  func.func @transform_2(%arg0: i32) -> (i32, i32) {
    %c0_i32 = arith.constant 0 : i32
    %c0_i32_0 = arith.constant 0 : i32
    %c0_i32_1 = arith.constant 0 : i32
    return %c0_i32, %c0_i32_0 : i32, i32
  }
  func.func @transform_3(%arg0: i32) -> (i32, i32) {
    %c0_i32 = arith.constant 0 : i32
    %c0_i32_0 = arith.constant 0 : i32
    %c0_i32_1 = arith.constant 0 : i32
    return %c0_i32, %c0_i32_0 : i32, i32
  }
  func.func @transform_4(%arg0: i32) -> (i32, i32) {
    %c0_i32 = arith.constant 0 : i32
    %c0_i32_0 = arith.constant 0 : i32
    %c0_i32_1 = arith.constant 0 : i32
    return %c0_i32, %c0_i32_0 : i32, i32
  }
  func.func @transform_5(%arg0: i32) -> (i32, i32) {
    %c0_i32 = arith.constant 0 : i32
    %c0_i32_0 = arith.constant 0 : i32
    %c0_i32_1 = arith.constant 0 : i32
    return %c0_i32, %c0_i32_0 : i32, i32
  }
  func.func @transform_6(%arg0: i32) -> (i32, i32) {
    %c0_i32 = arith.constant 0 : i32
    %c0_i32_0 = arith.constant 0 : i32
    %c0_i32_1 = arith.constant 0 : i32
    return %c0_i32, %c0_i32_0 : i32, i32
  }
  func.func @transform_7(%arg0: i32) -> (i32, i32, i32) {
    %c0_i32 = arith.constant 0 : i32
    %c0_i32_0 = arith.constant 0 : i32
    %c0_i32_1 = arith.constant 0 : i32
    return %arg0, %c0_i32, %c0_i32_0 : i32, i32, i32
  }
}

module attributes {stable_mosaic.version = 11 : i64} {
  func.func @_ffn_add_ln_kernel(%arg0: i32, %arg1: i32, %arg2: memref<16x32xbf16, #tpu.memory_space<vmem>>, %arg3: memref<32x512xbf16, #tpu.memory_space<vmem>>, %arg4: memref<1x512xf32, #tpu.memory_space<vmem>>, %arg5: memref<512x32xbf16, #tpu.memory_space<vmem>>, %arg6: memref<1x32xf32, #tpu.memory_space<vmem>>, %arg7: memref<1x32xf32, #tpu.memory_space<vmem>>, %arg8: memref<1x32xf32, #tpu.memory_space<vmem>>, %arg9: memref<16x32xbf16, #tpu.memory_space<vmem>>, %arg10: memref<16x32xf32, #tpu.memory_space<vmem>>) attributes {dimension_semantics = [#tpu.dimension_semantics<parallel>, #tpu.dimension_semantics<arbitrary>], iteration_bounds = array<i64: 1, 4>, scalar_prefetch = 0 : i64, scratch_operands = 1 : i64, tpu.core_type = #tpu.core_type<tc>, window_params = [{transform_indices = @transform_0, window_bounds = array<i64: 16, 32>}, {transform_indices = @transform_1, window_bounds = array<i64: 32, 512>}, {transform_indices = @transform_2, window_bounds = array<i64: 1, 512>}, {transform_indices = @transform_3, window_bounds = array<i64: 512, 32>}, {pipeline_mode = #tpu.pipeline_mode<synchronous>, transform_indices = @transform_4, window_bounds = array<i64: 1, 32>}, {pipeline_mode = #tpu.pipeline_mode<synchronous>, transform_indices = @transform_5, window_bounds = array<i64: 1, 32>}, {pipeline_mode = #tpu.pipeline_mode<synchronous>, transform_indices = @transform_6, window_bounds = array<i64: 1, 32>}, {transform_indices = @transform_7, window_bounds = array<i64: 16, 32>}]} {
    %c0_i32 = arith.constant 0 : i32
    %0 = arith.cmpi eq, %arg1, %c0_i32 : i32
    %1 = arith.extui %0 : i1 to i32
    %c0_i32_0 = arith.constant 0 : i32
    %2 = arith.cmpi ne, %1, %c0_i32_0 : i32
    scf.if %2 {
      %cst_15 = arith.constant 0.000000e+00 : f32
      %20 = vector.broadcast %cst_15 : f32 to vector<16x32xf32>
      %c0_16 = arith.constant 0 : index
      %c0_17 = arith.constant 0 : index
      %21 = vector.load %arg10[%c0_16, %c0_17] : memref<16x32xf32, #tpu.memory_space<vmem>>, vector<16x32xf32>
      tpu.vector_store %arg10[%c0_16, %c0_17], %20 {strides = array<i32>} : memref<16x32xf32, #tpu.memory_space<vmem>>, vector<16x32xf32>,
    } else {
    }
    %c0 = arith.constant 0 : index
    %c0_1 = arith.constant 0 : index
    %3 = vector.load %arg2[%c0, %c0_1] : memref<16x32xbf16, #tpu.memory_space<vmem>>, vector<16x32xbf16>
    %c0_2 = arith.constant 0 : index
    %c0_3 = arith.constant 0 : index
    %4 = vector.load %arg3[%c0_2, %c0_3] : memref<32x512xbf16, #tpu.memory_space<vmem>>, vector<32x512xbf16>
    %cst = arith.constant dense<0.000000e+00> : vector<16x512xf32>
    %5 = tpu.matmul %3, %4, %cst {dimension_numbers = #tpu.dot_dimension_numbers<[1], [0], [0], [1], [0, 0, 1, 1], [], []>} : vector<16x32xbf16>, vector<32x512xbf16>, vector<16x512xf32> -> vector<16x512xf32>
    %c0_4 = arith.constant 0 : index
    %c0_5 = arith.constant 0 : index
    %6 = vector.load %arg4[%c0_4, %c0_5] : memref<1x512xf32, #tpu.memory_space<vmem>>, vector<1x512xf32>
    %7 = vector.broadcast %6 : vector<1x512xf32> to vector<16x512xf32>
    %8 = arith.addf %5, %7 : vector<16x512xf32>
    %cst_6 = arith.constant 0.000000e+00 : f32
    %9 = vector.broadcast %cst_6 : f32 to vector<16x512xf32>
    %10 = arith.maximumf %8, %9 : vector<16x512xf32>
    %11 = arith.truncf %10 : vector<16x512xf32> to vector<16x512xbf16>
    %c0_7 = arith.constant 0 : index
    %c0_8 = arith.constant 0 : index
    %12 = vector.load %arg10[%c0_7, %c0_8] : memref<16x32xf32, #tpu.memory_space<vmem>>, vector<16x32xf32>
    %c0_9 = arith.constant 0 : index
    %c0_10 = arith.constant 0 : index
    %13 = vector.load %arg5[%c0_9, %c0_10] : memref<512x32xbf16, #tpu.memory_space<vmem>>, vector<512x32xbf16>
    %cst_11 = arith.constant dense<0.000000e+00> : vector<16x32xf32>
    %14 = tpu.matmul %11, %13, %cst_11 {dimension_numbers = #tpu.dot_dimension_numbers<[1], [0], [0], [1], [0, 0, 1, 1], [], []>} : vector<16x512xbf16>, vector<512x32xbf16>, vector<16x32xf32> -> vector<16x32xf32>
    %15 = arith.addf %12, %14 : vector<16x32xf32>
    %c0_12 = arith.constant 0 : index
    %c0_13 = arith.constant 0 : index
    %16 = vector.load %arg10[%c0_12, %c0_13] : memref<16x32xf32, #tpu.memory_space<vmem>>, vector<16x32xf32>
    tpu.vector_store %arg10[%c0_12, %c0_13], %15 {strides = array<i32>} : memref<16x32xf32, #tpu.memory_space<vmem>>, vector<16x32xf32>,
    %c3_i32 = arith.constant 3 : i32
    %17 = arith.cmpi eq, %arg1, %c3_i32 : i32
    %18 = arith.extui %17 : i1 to i32
    %c0_i32_14 = arith.constant 0 : i32
    %19 = arith.cmpi ne, %18, %c0_i32_14 : i32
    scf.if %19 {
      %c0_15 = arith.constant 0 : index
      %c0_16 = arith.constant 0 : index
      %20 = vector.load %arg10[%c0_15, %c0_16] : memref<16x32xf32, #tpu.memory_space<vmem>>, vector<16x32xf32>
      %c0_17 = arith.constant 0 : index
      %c0_18 = arith.constant 0 : index
      %21 = vector.load %arg6[%c0_17, %c0_18] : memref<1x32xf32, #tpu.memory_space<vmem>>, vector<1x32xf32>
      %22 = vector.broadcast %21 : vector<1x32xf32> to vector<16x32xf32>
      %23 = arith.addf %20, %22 : vector<16x32xf32>
      %24 = arith.extf %3 : vector<16x32xbf16> to vector<16x32xf32>
      %25 = arith.addf %23, %24 : vector<16x32xf32>
      %c0_19 = arith.constant 0 : index
      %c0_20 = arith.constant 0 : index
      %26 = vector.load %arg7[%c0_19, %c0_20] : memref<1x32xf32, #tpu.memory_space<vmem>>, vector<1x32xf32>
      %c0_21 = arith.constant 0 : index
      %c0_22 = arith.constant 0 : index
      %27 = vector.load %arg8[%c0_21, %c0_22] : memref<1x32xf32, #tpu.memory_space<vmem>>, vector<1x32xf32>
      %cst_23 = arith.constant dense<0.000000e+00> : vector<16xf32>
      %28 = vector.multi_reduction <add>, %25, %cst_23 [1] : vector<16x32xf32> to vector<16xf32>
      %29 = vector.shape_cast %28 : vector<16xf32> to vector<16x1xf32>
      %cst_24 = arith.constant 3.200000e+01 : f32
      %30 = vector.broadcast %cst_24 : f32 to vector<16x1xf32>
      %31 = arith.divf %29, %30 : vector<16x1xf32>
      %32 = vector.broadcast %31 : vector<16x1xf32> to vector<16x32xf32>
      %33 = arith.subf %25, %32 : vector<16x32xf32>
      %34 = arith.mulf %33, %33 : vector<16x32xf32>
      %cst_25 = arith.constant dense<0.000000e+00> : vector<16xf32>
      %35 = vector.multi_reduction <add>, %34, %cst_25 [1] : vector<16x32xf32> to vector<16xf32>
      %36 = vector.shape_cast %35 : vector<16xf32> to vector<16x1xf32>
      %cst_26 = arith.constant 3.200000e+01 : f32
      %37 = vector.broadcast %cst_26 : f32 to vector<16x1xf32>
      %38 = arith.divf %36, %37 : vector<16x1xf32>
      %cst_27 = arith.constant 9.99999974E-6 : f32
      %39 = vector.broadcast %cst_27 : f32 to vector<16x1xf32>
      %40 = arith.addf %38, %39 : vector<16x1xf32>
      %41 = math.rsqrt %40 : vector<16x1xf32>
      %42 = vector.broadcast %41 : vector<16x1xf32> to vector<16x32xf32>
      %43 = arith.mulf %33, %42 : vector<16x32xf32>
      %44 = vector.broadcast %26 : vector<1x32xf32> to vector<16x32xf32>
      %45 = arith.mulf %43, %44 : vector<16x32xf32>
      %46 = vector.broadcast %27 : vector<1x32xf32> to vector<16x32xf32>
      %47 = arith.addf %45, %46 : vector<16x32xf32>
      %48 = arith.truncf %47 : vector<16x32xf32> to vector<16x32xbf16>
      %c0_28 = arith.constant 0 : index
      %c0_29 = arith.constant 0 : index
      %49 = vector.load %arg9[%c0_28, %c0_29] : memref<16x32xbf16, #tpu.memory_space<vmem>>, vector<16x32xbf16>
      tpu.vector_store %arg9[%c0_28, %c0_29], %48 {strides = array<i32>} : memref<16x32xbf16, #tpu.memory_space<vmem>>, vector<16x32xbf16>,
    } else {
    }
    return
  }
  func.func @transform_0(%arg0: i32, %arg1: i32) -> (i32, i32) {
    %c0_i32 = arith.constant 0 : i32
    %c0_i32_0 = arith.constant 0 : i32
    return %arg0, %c0_i32 : i32, i32
  }
  func.func @transform_1(%arg0: i32, %arg1: i32) -> (i32, i32) {
    %c0_i32 = arith.constant 0 : i32
    %c0_i32_0 = arith.constant 0 : i32
    return %c0_i32, %arg1 : i32, i32
  }
  func.func @transform_2(%arg0: i32, %arg1: i32) -> (i32, i32) {
    %c0_i32 = arith.constant 0 : i32
    %c0_i32_0 = arith.constant 0 : i32
    return %c0_i32, %arg1 : i32, i32
  }
  func.func @transform_3(%arg0: i32, %arg1: i32) -> (i32, i32) {
    %c0_i32 = arith.constant 0 : i32
    %c0_i32_0 = arith.constant 0 : i32
    return %arg1, %c0_i32 : i32, i32
  }
  func.func @transform_4(%arg0: i32, %arg1: i32) -> (i32, i32) {
    %c0_i32 = arith.constant 0 : i32
    %c0_i32_0 = arith.constant 0 : i32
    %c0_i32_1 = arith.constant 0 : i32
    return %c0_i32, %c0_i32_0 : i32, i32
  }
  func.func @transform_5(%arg0: i32, %arg1: i32) -> (i32, i32) {
    %c0_i32 = arith.constant 0 : i32
    %c0_i32_0 = arith.constant 0 : i32
    %c0_i32_1 = arith.constant 0 : i32
    return %c0_i32, %c0_i32_0 : i32, i32
  }
  func.func @transform_6(%arg0: i32, %arg1: i32) -> (i32, i32) {
    %c0_i32 = arith.constant 0 : i32
    %c0_i32_0 = arith.constant 0 : i32
    %c0_i32_1 = arith.constant 0 : i32
    return %c0_i32, %c0_i32_0 : i32, i32
  }
  func.func @transform_7(%arg0: i32, %arg1: i32) -> (i32, i32) {
    %c0_i32 = arith.constant 0 : i32
    %c0_i32_0 = arith.constant 0 : i32
    return %arg0, %c0_i32 : i32, i32
  }
}

module attributes {stable_mosaic.version = 11 : i64} {
  func.func @_layernorm_kernel(%arg0: i32, %arg1: memref<16x32xbf16, #tpu.memory_space<vmem>>, %arg2: memref<1x32xf32, #tpu.memory_space<vmem>>, %arg3: memref<1x32xf32, #tpu.memory_space<vmem>>, %arg4: memref<16x32xbf16, #tpu.memory_space<vmem>>) attributes {dimension_semantics = [#tpu.dimension_semantics<parallel>], iteration_bounds = array<i64: 1>, scalar_prefetch = 0 : i64, scratch_operands = 0 : i64, tpu.core_type = #tpu.core_type<tc>, window_params = [{transform_indices = @transform_0, window_bounds = array<i64: 16, 32>}, {pipeline_mode = #tpu.pipeline_mode<synchronous>, transform_indices = @transform_1, window_bounds = array<i64: 1, 32>}, {pipeline_mode = #tpu.pipeline_mode<synchronous>, transform_indices = @transform_2, window_bounds = array<i64: 1, 32>}, {transform_indices = @transform_3, window_bounds = array<i64: 16, 32>}]} {
    %c0 = arith.constant 0 : index
    %c0_0 = arith.constant 0 : index
    %0 = vector.load %arg1[%c0, %c0_0] : memref<16x32xbf16, #tpu.memory_space<vmem>>, vector<16x32xbf16>
    %1 = arith.extf %0 : vector<16x32xbf16> to vector<16x32xf32>
    %c0_1 = arith.constant 0 : index
    %c0_2 = arith.constant 0 : index
    %2 = vector.load %arg2[%c0_1, %c0_2] : memref<1x32xf32, #tpu.memory_space<vmem>>, vector<1x32xf32>
    %c0_3 = arith.constant 0 : index
    %c0_4 = arith.constant 0 : index
    %3 = vector.load %arg3[%c0_3, %c0_4] : memref<1x32xf32, #tpu.memory_space<vmem>>, vector<1x32xf32>
    %cst = arith.constant dense<0.000000e+00> : vector<16xf32>
    %4 = vector.multi_reduction <add>, %1, %cst [1] : vector<16x32xf32> to vector<16xf32>
    %5 = vector.shape_cast %4 : vector<16xf32> to vector<16x1xf32>
    %cst_5 = arith.constant 3.200000e+01 : f32
    %6 = vector.broadcast %cst_5 : f32 to vector<16x1xf32>
    %7 = arith.divf %5, %6 : vector<16x1xf32>
    %8 = vector.broadcast %7 : vector<16x1xf32> to vector<16x32xf32>
    %9 = arith.subf %1, %8 : vector<16x32xf32>
    %10 = arith.mulf %9, %9 : vector<16x32xf32>
    %cst_6 = arith.constant dense<0.000000e+00> : vector<16xf32>
    %11 = vector.multi_reduction <add>, %10, %cst_6 [1] : vector<16x32xf32> to vector<16xf32>
    %12 = vector.shape_cast %11 : vector<16xf32> to vector<16x1xf32>
    %cst_7 = arith.constant 3.200000e+01 : f32
    %13 = vector.broadcast %cst_7 : f32 to vector<16x1xf32>
    %14 = arith.divf %12, %13 : vector<16x1xf32>
    %cst_8 = arith.constant 9.99999974E-6 : f32
    %15 = vector.broadcast %cst_8 : f32 to vector<16x1xf32>
    %16 = arith.addf %14, %15 : vector<16x1xf32>
    %17 = math.rsqrt %16 : vector<16x1xf32>
    %18 = vector.broadcast %17 : vector<16x1xf32> to vector<16x32xf32>
    %19 = arith.mulf %9, %18 : vector<16x32xf32>
    %20 = vector.broadcast %2 : vector<1x32xf32> to vector<16x32xf32>
    %21 = arith.mulf %19, %20 : vector<16x32xf32>
    %22 = vector.broadcast %3 : vector<1x32xf32> to vector<16x32xf32>
    %23 = arith.addf %21, %22 : vector<16x32xf32>
    %24 = arith.truncf %23 : vector<16x32xf32> to vector<16x32xbf16>
    %c0_9 = arith.constant 0 : index
    %c0_10 = arith.constant 0 : index
    %25 = vector.load %arg4[%c0_9, %c0_10] : memref<16x32xbf16, #tpu.memory_space<vmem>>, vector<16x32xbf16>
    tpu.vector_store %arg4[%c0_9, %c0_10], %24 {strides = array<i32>} : memref<16x32xbf16, #tpu.memory_space<vmem>>, vector<16x32xbf16>,
    return
  }
  func.func @transform_0(%arg0: i32) -> (i32, i32) {
    %c0_i32 = arith.constant 0 : i32
    %c0_i32_0 = arith.constant 0 : i32
    return %arg0, %c0_i32 : i32, i32
  }
  func.func @transform_1(%arg0: i32) -> (i32, i32) {
    %c0_i32 = arith.constant 0 : i32
    %c0_i32_0 = arith.constant 0 : i32
    %c0_i32_1 = arith.constant 0 : i32
    return %c0_i32, %c0_i32_0 : i32, i32
  }
  func.func @transform_2(%arg0: i32) -> (i32, i32) {
    %c0_i32 = arith.constant 0 : i32
    %c0_i32_0 = arith.constant 0 : i32
    %c0_i32_1 = arith.constant 0 : i32
    return %c0_i32, %c0_i32_0 : i32, i32
  }
  func.func @transform_3(%arg0: i32) -> (i32, i32) {
    %c0_i32 = arith.constant 0 : i32
    %c0_i32_0 = arith.constant 0 : i32
    return %arg0, %c0_i32 : i32, i32
  }
}

module attributes {stable_mosaic.version = 11 : i64} {
  func.func @_ca_block_kernel(%arg0: i32, %arg1: memref<1x8x32xbf16, #tpu.memory_space<vmem>>, %arg2: memref<1x8x32xbf16, #tpu.memory_space<vmem>>, %arg3: memref<32x32xbf16, #tpu.memory_space<vmem>>, %arg4: memref<1x32xf32, #tpu.memory_space<vmem>>, %arg5: memref<32x64xbf16, #tpu.memory_space<vmem>>, %arg6: memref<1x64xf32, #tpu.memory_space<vmem>>, %arg7: memref<32x32xbf16, #tpu.memory_space<vmem>>, %arg8: memref<1x32xf32, #tpu.memory_space<vmem>>, %arg9: memref<1x32xf32, #tpu.memory_space<vmem>>, %arg10: memref<1x32xf32, #tpu.memory_space<vmem>>, %arg11: memref<1x8x32xbf16, #tpu.memory_space<vmem>>) attributes {dimension_semantics = [#tpu.dimension_semantics<parallel>], iteration_bounds = array<i64: 2>, scalar_prefetch = 0 : i64, scratch_operands = 0 : i64, tpu.core_type = #tpu.core_type<tc>, window_params = [{transform_indices = @transform_0, window_bounds = array<i64: 1, 8, 32>}, {transform_indices = @transform_1, window_bounds = array<i64: 1, 8, 32>}, {pipeline_mode = #tpu.pipeline_mode<synchronous>, transform_indices = @transform_2, window_bounds = array<i64: 32, 32>}, {pipeline_mode = #tpu.pipeline_mode<synchronous>, transform_indices = @transform_3, window_bounds = array<i64: 1, 32>}, {pipeline_mode = #tpu.pipeline_mode<synchronous>, transform_indices = @transform_4, window_bounds = array<i64: 32, 64>}, {pipeline_mode = #tpu.pipeline_mode<synchronous>, transform_indices = @transform_5, window_bounds = array<i64: 1, 64>}, {pipeline_mode = #tpu.pipeline_mode<synchronous>, transform_indices = @transform_6, window_bounds = array<i64: 32, 32>}, {pipeline_mode = #tpu.pipeline_mode<synchronous>, transform_indices = @transform_7, window_bounds = array<i64: 1, 32>}, {pipeline_mode = #tpu.pipeline_mode<synchronous>, transform_indices = @transform_8, window_bounds = array<i64: 1, 32>}, {pipeline_mode = #tpu.pipeline_mode<synchronous>, transform_indices = @transform_9, window_bounds = array<i64: 1, 32>}, {transform_indices = @transform_10, window_bounds = array<i64: 1, 8, 32>}]} {
    %c0 = arith.constant 0 : index
    %c0_0 = arith.constant 0 : index
    %c0_1 = arith.constant 0 : index
    %0 = vector.load %arg1[%c0, %c0_0, %c0_1] : memref<1x8x32xbf16, #tpu.memory_space<vmem>>, vector<1x8x32xbf16>
    %1 = vector.shape_cast %0 : vector<1x8x32xbf16> to vector<8x32xbf16>
    %c0_2 = arith.constant 0 : index
    %c0_3 = arith.constant 0 : index
    %c0_4 = arith.constant 0 : index
    %2 = vector.load %arg2[%c0_2, %c0_3, %c0_4] : memref<1x8x32xbf16, #tpu.memory_space<vmem>>, vector<1x8x32xbf16>
    %3 = vector.shape_cast %2 : vector<1x8x32xbf16> to vector<8x32xbf16>
    %c0_5 = arith.constant 0 : index
    %c0_6 = arith.constant 0 : index
    %4 = vector.load %arg3[%c0_5, %c0_6] : memref<32x32xbf16, #tpu.memory_space<vmem>>, vector<32x32xbf16>
    %cst = arith.constant dense<0.000000e+00> : vector<8x32xf32>
    %5 = tpu.matmul %1, %4, %cst {dimension_numbers = #tpu.dot_dimension_numbers<[1], [0], [0], [1], [0, 0, 1, 1], [], []>} : vector<8x32xbf16>, vector<32x32xbf16>, vector<8x32xf32> -> vector<8x32xf32>
    %c0_7 = arith.constant 0 : index
    %c0_8 = arith.constant 0 : index
    %6 = vector.load %arg4[%c0_7, %c0_8] : memref<1x32xf32, #tpu.memory_space<vmem>>, vector<1x32xf32>
    %7 = vector.broadcast %6 : vector<1x32xf32> to vector<8x32xf32>
    %8 = arith.addf %5, %7 : vector<8x32xf32>
    %9 = arith.truncf %8 : vector<8x32xf32> to vector<8x32xbf16>
    %c0_9 = arith.constant 0 : index
    %c0_10 = arith.constant 0 : index
    %10 = vector.load %arg5[%c0_9, %c0_10] : memref<32x64xbf16, #tpu.memory_space<vmem>>, vector<32x64xbf16>
    %cst_11 = arith.constant dense<0.000000e+00> : vector<8x64xf32>
    %11 = tpu.matmul %3, %10, %cst_11 {dimension_numbers = #tpu.dot_dimension_numbers<[1], [0], [0], [1], [0, 0, 1, 1], [], []>} : vector<8x32xbf16>, vector<32x64xbf16>, vector<8x64xf32> -> vector<8x64xf32>
    %c0_12 = arith.constant 0 : index
    %c0_13 = arith.constant 0 : index
    %12 = vector.load %arg6[%c0_12, %c0_13] : memref<1x64xf32, #tpu.memory_space<vmem>>, vector<1x64xf32>
    %13 = vector.broadcast %12 : vector<1x64xf32> to vector<8x64xf32>
    %14 = arith.addf %11, %13 : vector<8x64xf32>
    %15 = arith.truncf %14 : vector<8x64xf32> to vector<8x64xbf16>
    %16 = vector.extract_strided_slice %9 {offsets = [0, 0], sizes = [8, 4], strides = [1, 1]} : vector<8x32xbf16> to vector<8x4xbf16>
    %17 = vector.extract_strided_slice %15 {offsets = [0, 0], sizes = [8, 4], strides = [1, 1]} : vector<8x64xbf16> to vector<8x4xbf16>
    %18 = vector.extract_strided_slice %15 {offsets = [0, 32], sizes = [8, 4], strides = [1, 1]} : vector<8x64xbf16> to vector<8x4xbf16>
    %cst_14 = arith.constant dense<0.000000e+00> : vector<8x8xf32>
    %19 = tpu.matmul %16, %17, %cst_14 {dimension_numbers = #tpu.dot_dimension_numbers<[1], [1], [0], [0], [0, 0, 1, 0], [], []>} : vector<8x4xbf16>, vector<8x4xbf16>, vector<8x8xf32> -> vector<8x8xf32>
    %cst_15 = arith.constant 5.000000e-01 : f32
    %20 = vector.broadcast %cst_15 : f32 to vector<8x8xf32>
    %21 = arith.mulf %19, %20 : vector<8x8xf32>
    %cst_16 = arith.constant dense<0xFF800000> : vector<8xf32>
    %22 = vector.multi_reduction <maximumf>, %21, %cst_16 [1] : vector<8x8xf32> to vector<8xf32>
    %23 = vector.shape_cast %22 : vector<8xf32> to vector<8x1xf32>
    %24 = vector.broadcast %23 : vector<8x1xf32> to vector<8x8xf32>
    %25 = arith.subf %21, %24 : vector<8x8xf32>
    %26 = math.exp %25 : vector<8x8xf32>
    %cst_17 = arith.constant dense<0.000000e+00> : vector<8xf32>
    %27 = vector.multi_reduction <add>, %26, %cst_17 [1] : vector<8x8xf32> to vector<8xf32>
    %28 = vector.shape_cast %27 : vector<8xf32> to vector<8x1xf32>
    %29 = vector.broadcast %28 : vector<8x1xf32> to vector<8x8xf32>
    %30 = arith.divf %26, %29 : vector<8x8xf32>
    %31 = arith.truncf %30 : vector<8x8xf32> to vector<8x8xbf16>
    %cst_18 = arith.constant dense<0.000000e+00> : vector<8x4xf32>
    %32 = tpu.matmul %31, %18, %cst_18 {dimension_numbers = #tpu.dot_dimension_numbers<[1], [0], [0], [1], [0, 0, 1, 1], [], []>} : vector<8x8xbf16>, vector<8x4xbf16>, vector<8x4xf32> -> vector<8x4xf32>
    %33 = vector.extract_strided_slice %9 {offsets = [0, 4], sizes = [8, 4], strides = [1, 1]} : vector<8x32xbf16> to vector<8x4xbf16>
    %34 = vector.extract_strided_slice %15 {offsets = [0, 4], sizes = [8, 4], strides = [1, 1]} : vector<8x64xbf16> to vector<8x4xbf16>
    %35 = vector.extract_strided_slice %15 {offsets = [0, 36], sizes = [8, 4], strides = [1, 1]} : vector<8x64xbf16> to vector<8x4xbf16>
    %cst_19 = arith.constant dense<0.000000e+00> : vector<8x8xf32>
    %36 = tpu.matmul %33, %34, %cst_19 {dimension_numbers = #tpu.dot_dimension_numbers<[1], [1], [0], [0], [0, 0, 1, 0], [], []>} : vector<8x4xbf16>, vector<8x4xbf16>, vector<8x8xf32> -> vector<8x8xf32>
    %cst_20 = arith.constant 5.000000e-01 : f32
    %37 = vector.broadcast %cst_20 : f32 to vector<8x8xf32>
    %38 = arith.mulf %36, %37 : vector<8x8xf32>
    %cst_21 = arith.constant dense<0xFF800000> : vector<8xf32>
    %39 = vector.multi_reduction <maximumf>, %38, %cst_21 [1] : vector<8x8xf32> to vector<8xf32>
    %40 = vector.shape_cast %39 : vector<8xf32> to vector<8x1xf32>
    %41 = vector.broadcast %40 : vector<8x1xf32> to vector<8x8xf32>
    %42 = arith.subf %38, %41 : vector<8x8xf32>
    %43 = math.exp %42 : vector<8x8xf32>
    %cst_22 = arith.constant dense<0.000000e+00> : vector<8xf32>
    %44 = vector.multi_reduction <add>, %43, %cst_22 [1] : vector<8x8xf32> to vector<8xf32>
    %45 = vector.shape_cast %44 : vector<8xf32> to vector<8x1xf32>
    %46 = vector.broadcast %45 : vector<8x1xf32> to vector<8x8xf32>
    %47 = arith.divf %43, %46 : vector<8x8xf32>
    %48 = arith.truncf %47 : vector<8x8xf32> to vector<8x8xbf16>
    %cst_23 = arith.constant dense<0.000000e+00> : vector<8x4xf32>
    %49 = tpu.matmul %48, %35, %cst_23 {dimension_numbers = #tpu.dot_dimension_numbers<[1], [0], [0], [1], [0, 0, 1, 1], [], []>} : vector<8x8xbf16>, vector<8x4xbf16>, vector<8x4xf32> -> vector<8x4xf32>
    %50 = vector.extract_strided_slice %9 {offsets = [0, 8], sizes = [8, 4], strides = [1, 1]} : vector<8x32xbf16> to vector<8x4xbf16>
    %51 = vector.extract_strided_slice %15 {offsets = [0, 8], sizes = [8, 4], strides = [1, 1]} : vector<8x64xbf16> to vector<8x4xbf16>
    %52 = vector.extract_strided_slice %15 {offsets = [0, 40], sizes = [8, 4], strides = [1, 1]} : vector<8x64xbf16> to vector<8x4xbf16>
    %cst_24 = arith.constant dense<0.000000e+00> : vector<8x8xf32>
    %53 = tpu.matmul %50, %51, %cst_24 {dimension_numbers = #tpu.dot_dimension_numbers<[1], [1], [0], [0], [0, 0, 1, 0], [], []>} : vector<8x4xbf16>, vector<8x4xbf16>, vector<8x8xf32> -> vector<8x8xf32>
    %cst_25 = arith.constant 5.000000e-01 : f32
    %54 = vector.broadcast %cst_25 : f32 to vector<8x8xf32>
    %55 = arith.mulf %53, %54 : vector<8x8xf32>
    %cst_26 = arith.constant dense<0xFF800000> : vector<8xf32>
    %56 = vector.multi_reduction <maximumf>, %55, %cst_26 [1] : vector<8x8xf32> to vector<8xf32>
    %57 = vector.shape_cast %56 : vector<8xf32> to vector<8x1xf32>
    %58 = vector.broadcast %57 : vector<8x1xf32> to vector<8x8xf32>
    %59 = arith.subf %55, %58 : vector<8x8xf32>
    %60 = math.exp %59 : vector<8x8xf32>
    %cst_27 = arith.constant dense<0.000000e+00> : vector<8xf32>
    %61 = vector.multi_reduction <add>, %60, %cst_27 [1] : vector<8x8xf32> to vector<8xf32>
    %62 = vector.shape_cast %61 : vector<8xf32> to vector<8x1xf32>
    %63 = vector.broadcast %62 : vector<8x1xf32> to vector<8x8xf32>
    %64 = arith.divf %60, %63 : vector<8x8xf32>
    %65 = arith.truncf %64 : vector<8x8xf32> to vector<8x8xbf16>
    %cst_28 = arith.constant dense<0.000000e+00> : vector<8x4xf32>
    %66 = tpu.matmul %65, %52, %cst_28 {dimension_numbers = #tpu.dot_dimension_numbers<[1], [0], [0], [1], [0, 0, 1, 1], [], []>} : vector<8x8xbf16>, vector<8x4xbf16>, vector<8x4xf32> -> vector<8x4xf32>
    %67 = vector.extract_strided_slice %9 {offsets = [0, 12], sizes = [8, 4], strides = [1, 1]} : vector<8x32xbf16> to vector<8x4xbf16>
    %68 = vector.extract_strided_slice %15 {offsets = [0, 12], sizes = [8, 4], strides = [1, 1]} : vector<8x64xbf16> to vector<8x4xbf16>
    %69 = vector.extract_strided_slice %15 {offsets = [0, 44], sizes = [8, 4], strides = [1, 1]} : vector<8x64xbf16> to vector<8x4xbf16>
    %cst_29 = arith.constant dense<0.000000e+00> : vector<8x8xf32>
    %70 = tpu.matmul %67, %68, %cst_29 {dimension_numbers = #tpu.dot_dimension_numbers<[1], [1], [0], [0], [0, 0, 1, 0], [], []>} : vector<8x4xbf16>, vector<8x4xbf16>, vector<8x8xf32> -> vector<8x8xf32>
    %cst_30 = arith.constant 5.000000e-01 : f32
    %71 = vector.broadcast %cst_30 : f32 to vector<8x8xf32>
    %72 = arith.mulf %70, %71 : vector<8x8xf32>
    %cst_31 = arith.constant dense<0xFF800000> : vector<8xf32>
    %73 = vector.multi_reduction <maximumf>, %72, %cst_31 [1] : vector<8x8xf32> to vector<8xf32>
    %74 = vector.shape_cast %73 : vector<8xf32> to vector<8x1xf32>
    %75 = vector.broadcast %74 : vector<8x1xf32> to vector<8x8xf32>
    %76 = arith.subf %72, %75 : vector<8x8xf32>
    %77 = math.exp %76 : vector<8x8xf32>
    %cst_32 = arith.constant dense<0.000000e+00> : vector<8xf32>
    %78 = vector.multi_reduction <add>, %77, %cst_32 [1] : vector<8x8xf32> to vector<8xf32>
    %79 = vector.shape_cast %78 : vector<8xf32> to vector<8x1xf32>
    %80 = vector.broadcast %79 : vector<8x1xf32> to vector<8x8xf32>
    %81 = arith.divf %77, %80 : vector<8x8xf32>
    %82 = arith.truncf %81 : vector<8x8xf32> to vector<8x8xbf16>
    %cst_33 = arith.constant dense<0.000000e+00> : vector<8x4xf32>
    %83 = tpu.matmul %82, %69, %cst_33 {dimension_numbers = #tpu.dot_dimension_numbers<[1], [0], [0], [1], [0, 0, 1, 1], [], []>} : vector<8x8xbf16>, vector<8x4xbf16>, vector<8x4xf32> -> vector<8x4xf32>
    %84 = vector.extract_strided_slice %9 {offsets = [0, 16], sizes = [8, 4], strides = [1, 1]} : vector<8x32xbf16> to vector<8x4xbf16>
    %85 = vector.extract_strided_slice %15 {offsets = [0, 16], sizes = [8, 4], strides = [1, 1]} : vector<8x64xbf16> to vector<8x4xbf16>
    %86 = vector.extract_strided_slice %15 {offsets = [0, 48], sizes = [8, 4], strides = [1, 1]} : vector<8x64xbf16> to vector<8x4xbf16>
    %cst_34 = arith.constant dense<0.000000e+00> : vector<8x8xf32>
    %87 = tpu.matmul %84, %85, %cst_34 {dimension_numbers = #tpu.dot_dimension_numbers<[1], [1], [0], [0], [0, 0, 1, 0], [], []>} : vector<8x4xbf16>, vector<8x4xbf16>, vector<8x8xf32> -> vector<8x8xf32>
    %cst_35 = arith.constant 5.000000e-01 : f32
    %88 = vector.broadcast %cst_35 : f32 to vector<8x8xf32>
    %89 = arith.mulf %87, %88 : vector<8x8xf32>
    %cst_36 = arith.constant dense<0xFF800000> : vector<8xf32>
    %90 = vector.multi_reduction <maximumf>, %89, %cst_36 [1] : vector<8x8xf32> to vector<8xf32>
    %91 = vector.shape_cast %90 : vector<8xf32> to vector<8x1xf32>
    %92 = vector.broadcast %91 : vector<8x1xf32> to vector<8x8xf32>
    %93 = arith.subf %89, %92 : vector<8x8xf32>
    %94 = math.exp %93 : vector<8x8xf32>
    %cst_37 = arith.constant dense<0.000000e+00> : vector<8xf32>
    %95 = vector.multi_reduction <add>, %94, %cst_37 [1] : vector<8x8xf32> to vector<8xf32>
    %96 = vector.shape_cast %95 : vector<8xf32> to vector<8x1xf32>
    %97 = vector.broadcast %96 : vector<8x1xf32> to vector<8x8xf32>
    %98 = arith.divf %94, %97 : vector<8x8xf32>
    %99 = arith.truncf %98 : vector<8x8xf32> to vector<8x8xbf16>
    %cst_38 = arith.constant dense<0.000000e+00> : vector<8x4xf32>
    %100 = tpu.matmul %99, %86, %cst_38 {dimension_numbers = #tpu.dot_dimension_numbers<[1], [0], [0], [1], [0, 0, 1, 1], [], []>} : vector<8x8xbf16>, vector<8x4xbf16>, vector<8x4xf32> -> vector<8x4xf32>
    %101 = vector.extract_strided_slice %9 {offsets = [0, 20], sizes = [8, 4], strides = [1, 1]} : vector<8x32xbf16> to vector<8x4xbf16>
    %102 = vector.extract_strided_slice %15 {offsets = [0, 20], sizes = [8, 4], strides = [1, 1]} : vector<8x64xbf16> to vector<8x4xbf16>
    %103 = vector.extract_strided_slice %15 {offsets = [0, 52], sizes = [8, 4], strides = [1, 1]} : vector<8x64xbf16> to vector<8x4xbf16>
    %cst_39 = arith.constant dense<0.000000e+00> : vector<8x8xf32>
    %104 = tpu.matmul %101, %102, %cst_39 {dimension_numbers = #tpu.dot_dimension_numbers<[1], [1], [0], [0], [0, 0, 1, 0], [], []>} : vector<8x4xbf16>, vector<8x4xbf16>, vector<8x8xf32> -> vector<8x8xf32>
    %cst_40 = arith.constant 5.000000e-01 : f32
    %105 = vector.broadcast %cst_40 : f32 to vector<8x8xf32>
    %106 = arith.mulf %104, %105 : vector<8x8xf32>
    %cst_41 = arith.constant dense<0xFF800000> : vector<8xf32>
    %107 = vector.multi_reduction <maximumf>, %106, %cst_41 [1] : vector<8x8xf32> to vector<8xf32>
    %108 = vector.shape_cast %107 : vector<8xf32> to vector<8x1xf32>
    %109 = vector.broadcast %108 : vector<8x1xf32> to vector<8x8xf32>
    %110 = arith.subf %106, %109 : vector<8x8xf32>
    %111 = math.exp %110 : vector<8x8xf32>
    %cst_42 = arith.constant dense<0.000000e+00> : vector<8xf32>
    %112 = vector.multi_reduction <add>, %111, %cst_42 [1] : vector<8x8xf32> to vector<8xf32>
    %113 = vector.shape_cast %112 : vector<8xf32> to vector<8x1xf32>
    %114 = vector.broadcast %113 : vector<8x1xf32> to vector<8x8xf32>
    %115 = arith.divf %111, %114 : vector<8x8xf32>
    %116 = arith.truncf %115 : vector<8x8xf32> to vector<8x8xbf16>
    %cst_43 = arith.constant dense<0.000000e+00> : vector<8x4xf32>
    %117 = tpu.matmul %116, %103, %cst_43 {dimension_numbers = #tpu.dot_dimension_numbers<[1], [0], [0], [1], [0, 0, 1, 1], [], []>} : vector<8x8xbf16>, vector<8x4xbf16>, vector<8x4xf32> -> vector<8x4xf32>
    %118 = vector.extract_strided_slice %9 {offsets = [0, 24], sizes = [8, 4], strides = [1, 1]} : vector<8x32xbf16> to vector<8x4xbf16>
    %119 = vector.extract_strided_slice %15 {offsets = [0, 24], sizes = [8, 4], strides = [1, 1]} : vector<8x64xbf16> to vector<8x4xbf16>
    %120 = vector.extract_strided_slice %15 {offsets = [0, 56], sizes = [8, 4], strides = [1, 1]} : vector<8x64xbf16> to vector<8x4xbf16>
    %cst_44 = arith.constant dense<0.000000e+00> : vector<8x8xf32>
    %121 = tpu.matmul %118, %119, %cst_44 {dimension_numbers = #tpu.dot_dimension_numbers<[1], [1], [0], [0], [0, 0, 1, 0], [], []>} : vector<8x4xbf16>, vector<8x4xbf16>, vector<8x8xf32> -> vector<8x8xf32>
    %cst_45 = arith.constant 5.000000e-01 : f32
    %122 = vector.broadcast %cst_45 : f32 to vector<8x8xf32>
    %123 = arith.mulf %121, %122 : vector<8x8xf32>
    %cst_46 = arith.constant dense<0xFF800000> : vector<8xf32>
    %124 = vector.multi_reduction <maximumf>, %123, %cst_46 [1] : vector<8x8xf32> to vector<8xf32>
    %125 = vector.shape_cast %124 : vector<8xf32> to vector<8x1xf32>
    %126 = vector.broadcast %125 : vector<8x1xf32> to vector<8x8xf32>
    %127 = arith.subf %123, %126 : vector<8x8xf32>
    %128 = math.exp %127 : vector<8x8xf32>
    %cst_47 = arith.constant dense<0.000000e+00> : vector<8xf32>
    %129 = vector.multi_reduction <add>, %128, %cst_47 [1] : vector<8x8xf32> to vector<8xf32>
    %130 = vector.shape_cast %129 : vector<8xf32> to vector<8x1xf32>
    %131 = vector.broadcast %130 : vector<8x1xf32> to vector<8x8xf32>
    %132 = arith.divf %128, %131 : vector<8x8xf32>
    %133 = arith.truncf %132 : vector<8x8xf32> to vector<8x8xbf16>
    %cst_48 = arith.constant dense<0.000000e+00> : vector<8x4xf32>
    %134 = tpu.matmul %133, %120, %cst_48 {dimension_numbers = #tpu.dot_dimension_numbers<[1], [0], [0], [1], [0, 0, 1, 1], [], []>} : vector<8x8xbf16>, vector<8x4xbf16>, vector<8x4xf32> -> vector<8x4xf32>
    %135 = vector.extract_strided_slice %9 {offsets = [0, 28], sizes = [8, 4], strides = [1, 1]} : vector<8x32xbf16> to vector<8x4xbf16>
    %136 = vector.extract_strided_slice %15 {offsets = [0, 28], sizes = [8, 4], strides = [1, 1]} : vector<8x64xbf16> to vector<8x4xbf16>
    %137 = vector.extract_strided_slice %15 {offsets = [0, 60], sizes = [8, 4], strides = [1, 1]} : vector<8x64xbf16> to vector<8x4xbf16>
    %cst_49 = arith.constant dense<0.000000e+00> : vector<8x8xf32>
    %138 = tpu.matmul %135, %136, %cst_49 {dimension_numbers = #tpu.dot_dimension_numbers<[1], [1], [0], [0], [0, 0, 1, 0], [], []>} : vector<8x4xbf16>, vector<8x4xbf16>, vector<8x8xf32> -> vector<8x8xf32>
    %cst_50 = arith.constant 5.000000e-01 : f32
    %139 = vector.broadcast %cst_50 : f32 to vector<8x8xf32>
    %140 = arith.mulf %138, %139 : vector<8x8xf32>
    %cst_51 = arith.constant dense<0xFF800000> : vector<8xf32>
    %141 = vector.multi_reduction <maximumf>, %140, %cst_51 [1] : vector<8x8xf32> to vector<8xf32>
    %142 = vector.shape_cast %141 : vector<8xf32> to vector<8x1xf32>
    %143 = vector.broadcast %142 : vector<8x1xf32> to vector<8x8xf32>
    %144 = arith.subf %140, %143 : vector<8x8xf32>
    %145 = math.exp %144 : vector<8x8xf32>
    %cst_52 = arith.constant dense<0.000000e+00> : vector<8xf32>
    %146 = vector.multi_reduction <add>, %145, %cst_52 [1] : vector<8x8xf32> to vector<8xf32>
    %147 = vector.shape_cast %146 : vector<8xf32> to vector<8x1xf32>
    %148 = vector.broadcast %147 : vector<8x1xf32> to vector<8x8xf32>
    %149 = arith.divf %145, %148 : vector<8x8xf32>
    %150 = arith.truncf %149 : vector<8x8xf32> to vector<8x8xbf16>
    %cst_53 = arith.constant dense<0.000000e+00> : vector<8x4xf32>
    %151 = tpu.matmul %150, %137, %cst_53 {dimension_numbers = #tpu.dot_dimension_numbers<[1], [0], [0], [1], [0, 0, 1, 1], [], []>} : vector<8x8xbf16>, vector<8x4xbf16>, vector<8x4xf32> -> vector<8x4xf32>
    %152 = tpu.concatenate %32, %49, %66, %83, %100, %117, %134, %151 in 1 : vector<8x4xf32>, vector<8x4xf32>, vector<8x4xf32>, vector<8x4xf32>, vector<8x4xf32>, vector<8x4xf32>, vector<8x4xf32>, vector<8x4xf32> -> vector<8x32xf32>
    %153 = arith.truncf %152 : vector<8x32xf32> to vector<8x32xbf16>
    %c0_54 = arith.constant 0 : index
    %c0_55 = arith.constant 0 : index
    %154 = vector.load %arg7[%c0_54, %c0_55] : memref<32x32xbf16, #tpu.memory_space<vmem>>, vector<32x32xbf16>
    %cst_56 = arith.constant dense<0.000000e+00> : vector<8x32xf32>
    %155 = tpu.matmul %153, %154, %cst_56 {dimension_numbers = #tpu.dot_dimension_numbers<[1], [0], [0], [1], [0, 0, 1, 1], [], []>} : vector<8x32xbf16>, vector<32x32xbf16>, vector<8x32xf32> -> vector<8x32xf32>
    %c0_57 = arith.constant 0 : index
    %c0_58 = arith.constant 0 : index
    %156 = vector.load %arg8[%c0_57, %c0_58] : memref<1x32xf32, #tpu.memory_space<vmem>>, vector<1x32xf32>
    %157 = vector.broadcast %156 : vector<1x32xf32> to vector<8x32xf32>
    %158 = arith.addf %155, %157 : vector<8x32xf32>
    %159 = arith.extf %1 : vector<8x32xbf16> to vector<8x32xf32>
    %160 = arith.addf %158, %159 : vector<8x32xf32>
    %c0_59 = arith.constant 0 : index
    %c0_60 = arith.constant 0 : index
    %161 = vector.load %arg9[%c0_59, %c0_60] : memref<1x32xf32, #tpu.memory_space<vmem>>, vector<1x32xf32>
    %c0_61 = arith.constant 0 : index
    %c0_62 = arith.constant 0 : index
    %162 = vector.load %arg10[%c0_61, %c0_62] : memref<1x32xf32, #tpu.memory_space<vmem>>, vector<1x32xf32>
    %cst_63 = arith.constant dense<0.000000e+00> : vector<8xf32>
    %163 = vector.multi_reduction <add>, %160, %cst_63 [1] : vector<8x32xf32> to vector<8xf32>
    %164 = vector.shape_cast %163 : vector<8xf32> to vector<8x1xf32>
    %cst_64 = arith.constant 3.200000e+01 : f32
    %165 = vector.broadcast %cst_64 : f32 to vector<8x1xf32>
    %166 = arith.divf %164, %165 : vector<8x1xf32>
    %167 = vector.broadcast %166 : vector<8x1xf32> to vector<8x32xf32>
    %168 = arith.subf %160, %167 : vector<8x32xf32>
    %169 = arith.mulf %168, %168 : vector<8x32xf32>
    %cst_65 = arith.constant dense<0.000000e+00> : vector<8xf32>
    %170 = vector.multi_reduction <add>, %169, %cst_65 [1] : vector<8x32xf32> to vector<8xf32>
    %171 = vector.shape_cast %170 : vector<8xf32> to vector<8x1xf32>
    %cst_66 = arith.constant 3.200000e+01 : f32
    %172 = vector.broadcast %cst_66 : f32 to vector<8x1xf32>
    %173 = arith.divf %171, %172 : vector<8x1xf32>
    %cst_67 = arith.constant 9.99999974E-6 : f32
    %174 = vector.broadcast %cst_67 : f32 to vector<8x1xf32>
    %175 = arith.addf %173, %174 : vector<8x1xf32>
    %176 = math.rsqrt %175 : vector<8x1xf32>
    %177 = vector.broadcast %176 : vector<8x1xf32> to vector<8x32xf32>
    %178 = arith.mulf %168, %177 : vector<8x32xf32>
    %179 = vector.broadcast %161 : vector<1x32xf32> to vector<8x32xf32>
    %180 = arith.mulf %178, %179 : vector<8x32xf32>
    %181 = vector.broadcast %162 : vector<1x32xf32> to vector<8x32xf32>
    %182 = arith.addf %180, %181 : vector<8x32xf32>
    %183 = arith.truncf %182 : vector<8x32xf32> to vector<8x32xbf16>
    %c0_68 = arith.constant 0 : index
    %c0_69 = arith.constant 0 : index
    %c0_70 = arith.constant 0 : index
    %184 = vector.load %arg11[%c0_68, %c0_69, %c0_70] : memref<1x8x32xbf16, #tpu.memory_space<vmem>>, vector<1x8x32xbf16>
    %185 = vector.shape_cast %184 : vector<1x8x32xbf16> to vector<8x32xbf16>
    %186 = vector.shape_cast %183 : vector<8x32xbf16> to vector<1x8x32xbf16>
    tpu.vector_store %arg11[%c0_68, %c0_69, %c0_70], %186 {strides = array<i32>} : memref<1x8x32xbf16, #tpu.memory_space<vmem>>, vector<1x8x32xbf16>,
    return
  }
  func.func @transform_0(%arg0: i32) -> (i32, i32, i32) {
    %c0_i32 = arith.constant 0 : i32
    %c0_i32_0 = arith.constant 0 : i32
    %c0_i32_1 = arith.constant 0 : i32
    return %arg0, %c0_i32, %c0_i32_0 : i32, i32, i32
  }
  func.func @transform_1(%arg0: i32) -> (i32, i32, i32) {
    %c0_i32 = arith.constant 0 : i32
    %c0_i32_0 = arith.constant 0 : i32
    %c0_i32_1 = arith.constant 0 : i32
    return %arg0, %c0_i32, %c0_i32_0 : i32, i32, i32
  }
  func.func @transform_2(%arg0: i32) -> (i32, i32) {
    %c0_i32 = arith.constant 0 : i32
    %c0_i32_0 = arith.constant 0 : i32
    %c0_i32_1 = arith.constant 0 : i32
    return %c0_i32, %c0_i32_0 : i32, i32
  }
  func.func @transform_3(%arg0: i32) -> (i32, i32) {
    %c0_i32 = arith.constant 0 : i32
    %c0_i32_0 = arith.constant 0 : i32
    %c0_i32_1 = arith.constant 0 : i32
    return %c0_i32, %c0_i32_0 : i32, i32
  }
  func.func @transform_4(%arg0: i32) -> (i32, i32) {
    %c0_i32 = arith.constant 0 : i32
    %c0_i32_0 = arith.constant 0 : i32
    %c0_i32_1 = arith.constant 0 : i32
    return %c0_i32, %c0_i32_0 : i32, i32
  }
  func.func @transform_5(%arg0: i32) -> (i32, i32) {
    %c0_i32 = arith.constant 0 : i32
    %c0_i32_0 = arith.constant 0 : i32
    %c0_i32_1 = arith.constant 0 : i32
    return %c0_i32, %c0_i32_0 : i32, i32
  }
  func.func @transform_6(%arg0: i32) -> (i32, i32) {
    %c0_i32 = arith.constant 0 : i32
    %c0_i32_0 = arith.constant 0 : i32
    %c0_i32_1 = arith.constant 0 : i32
    return %c0_i32, %c0_i32_0 : i32, i32
  }
  func.func @transform_7(%arg0: i32) -> (i32, i32) {
    %c0_i32 = arith.constant 0 : i32
    %c0_i32_0 = arith.constant 0 : i32
    %c0_i32_1 = arith.constant 0 : i32
    return %c0_i32, %c0_i32_0 : i32, i32
  }
  func.func @transform_8(%arg0: i32) -> (i32, i32) {
    %c0_i32 = arith.constant 0 : i32
    %c0_i32_0 = arith.constant 0 : i32
    %c0_i32_1 = arith.constant 0 : i32
    return %c0_i32, %c0_i32_0 : i32, i32
  }
  func.func @transform_9(%arg0: i32) -> (i32, i32) {
    %c0_i32 = arith.constant 0 : i32
    %c0_i32_0 = arith.constant 0 : i32
    %c0_i32_1 = arith.constant 0 : i32
    return %c0_i32, %c0_i32_0 : i32, i32
  }
  func.func @transform_10(%arg0: i32) -> (i32, i32, i32) {
    %c0_i32 = arith.constant 0 : i32
    %c0_i32_0 = arith.constant 0 : i32
    %c0_i32_1 = arith.constant 0 : i32
    return %arg0, %c0_i32, %c0_i32_0 : i32, i32, i32
  }
}

module attributes {stable_mosaic.version = 11 : i64} {
  func.func @_ln_linear_kernel(%arg0: i32, %arg1: memref<16x32xbf16, #tpu.memory_space<vmem>>, %arg2: memref<1x32xf32, #tpu.memory_space<vmem>>, %arg3: memref<1x32xf32, #tpu.memory_space<vmem>>, %arg4: memref<32x4xbf16, #tpu.memory_space<vmem>>, %arg5: memref<1x4xf32, #tpu.memory_space<vmem>>, %arg6: memref<16x4xf32, #tpu.memory_space<vmem>>) attributes {dimension_semantics = [#tpu.dimension_semantics<parallel>], iteration_bounds = array<i64: 1>, scalar_prefetch = 0 : i64, scratch_operands = 0 : i64, tpu.core_type = #tpu.core_type<tc>, window_params = [{transform_indices = @transform_0, window_bounds = array<i64: 16, 32>}, {pipeline_mode = #tpu.pipeline_mode<synchronous>, transform_indices = @transform_1, window_bounds = array<i64: 1, 32>}, {pipeline_mode = #tpu.pipeline_mode<synchronous>, transform_indices = @transform_2, window_bounds = array<i64: 1, 32>}, {pipeline_mode = #tpu.pipeline_mode<synchronous>, transform_indices = @transform_3, window_bounds = array<i64: 32, 4>}, {pipeline_mode = #tpu.pipeline_mode<synchronous>, transform_indices = @transform_4, window_bounds = array<i64: 1, 4>}, {transform_indices = @transform_5, window_bounds = array<i64: 16, 4>}]} {
    %c0 = arith.constant 0 : index
    %c0_0 = arith.constant 0 : index
    %0 = vector.load %arg1[%c0, %c0_0] : memref<16x32xbf16, #tpu.memory_space<vmem>>, vector<16x32xbf16>
    %1 = arith.extf %0 : vector<16x32xbf16> to vector<16x32xf32>
    %c0_1 = arith.constant 0 : index
    %c0_2 = arith.constant 0 : index
    %2 = vector.load %arg2[%c0_1, %c0_2] : memref<1x32xf32, #tpu.memory_space<vmem>>, vector<1x32xf32>
    %c0_3 = arith.constant 0 : index
    %c0_4 = arith.constant 0 : index
    %3 = vector.load %arg3[%c0_3, %c0_4] : memref<1x32xf32, #tpu.memory_space<vmem>>, vector<1x32xf32>
    %cst = arith.constant dense<0.000000e+00> : vector<16xf32>
    %4 = vector.multi_reduction <add>, %1, %cst [1] : vector<16x32xf32> to vector<16xf32>
    %5 = vector.shape_cast %4 : vector<16xf32> to vector<16x1xf32>
    %cst_5 = arith.constant 3.200000e+01 : f32
    %6 = vector.broadcast %cst_5 : f32 to vector<16x1xf32>
    %7 = arith.divf %5, %6 : vector<16x1xf32>
    %8 = vector.broadcast %7 : vector<16x1xf32> to vector<16x32xf32>
    %9 = arith.subf %1, %8 : vector<16x32xf32>
    %10 = arith.mulf %9, %9 : vector<16x32xf32>
    %cst_6 = arith.constant dense<0.000000e+00> : vector<16xf32>
    %11 = vector.multi_reduction <add>, %10, %cst_6 [1] : vector<16x32xf32> to vector<16xf32>
    %12 = vector.shape_cast %11 : vector<16xf32> to vector<16x1xf32>
    %cst_7 = arith.constant 3.200000e+01 : f32
    %13 = vector.broadcast %cst_7 : f32 to vector<16x1xf32>
    %14 = arith.divf %12, %13 : vector<16x1xf32>
    %cst_8 = arith.constant 9.99999974E-6 : f32
    %15 = vector.broadcast %cst_8 : f32 to vector<16x1xf32>
    %16 = arith.addf %14, %15 : vector<16x1xf32>
    %17 = math.rsqrt %16 : vector<16x1xf32>
    %18 = vector.broadcast %17 : vector<16x1xf32> to vector<16x32xf32>
    %19 = arith.mulf %9, %18 : vector<16x32xf32>
    %20 = vector.broadcast %2 : vector<1x32xf32> to vector<16x32xf32>
    %21 = arith.mulf %19, %20 : vector<16x32xf32>
    %22 = vector.broadcast %3 : vector<1x32xf32> to vector<16x32xf32>
    %23 = arith.addf %21, %22 : vector<16x32xf32>
    %24 = arith.truncf %23 : vector<16x32xf32> to vector<16x32xbf16>
    %c0_9 = arith.constant 0 : index
    %c0_10 = arith.constant 0 : index
    %25 = vector.load %arg4[%c0_9, %c0_10] : memref<32x4xbf16, #tpu.memory_space<vmem>>, vector<32x4xbf16>
    %cst_11 = arith.constant dense<0.000000e+00> : vector<16x4xf32>
    %26 = tpu.matmul %24, %25, %cst_11 {dimension_numbers = #tpu.dot_dimension_numbers<[1], [0], [0], [1], [0, 0, 1, 1], [], []>} : vector<16x32xbf16>, vector<32x4xbf16>, vector<16x4xf32> -> vector<16x4xf32>
    %c0_12 = arith.constant 0 : index
    %c0_13 = arith.constant 0 : index
    %27 = vector.load %arg5[%c0_12, %c0_13] : memref<1x4xf32, #tpu.memory_space<vmem>>, vector<1x4xf32>
    %28 = vector.broadcast %27 : vector<1x4xf32> to vector<16x4xf32>
    %29 = arith.addf %26, %28 : vector<16x4xf32>
    %c0_14 = arith.constant 0 : index
    %c0_15 = arith.constant 0 : index
    %30 = vector.load %arg6[%c0_14, %c0_15] : memref<16x4xf32, #tpu.memory_space<vmem>>, vector<16x4xf32>
    tpu.vector_store %arg6[%c0_14, %c0_15], %29 {strides = array<i32>} : memref<16x4xf32, #tpu.memory_space<vmem>>, vector<16x4xf32>,
    return
  }
  func.func @transform_0(%arg0: i32) -> (i32, i32) {
    %c0_i32 = arith.constant 0 : i32
    %c0_i32_0 = arith.constant 0 : i32
    return %arg0, %c0_i32 : i32, i32
  }
  func.func @transform_1(%arg0: i32) -> (i32, i32) {
    %c0_i32 = arith.constant 0 : i32
    %c0_i32_0 = arith.constant 0 : i32
    %c0_i32_1 = arith.constant 0 : i32
    return %c0_i32, %c0_i32_0 : i32, i32
  }
  func.func @transform_2(%arg0: i32) -> (i32, i32) {
    %c0_i32 = arith.constant 0 : i32
    %c0_i32_0 = arith.constant 0 : i32
    %c0_i32_1 = arith.constant 0 : i32
    return %c0_i32, %c0_i32_0 : i32, i32
  }
  func.func @transform_3(%arg0: i32) -> (i32, i32) {
    %c0_i32 = arith.constant 0 : i32
    %c0_i32_0 = arith.constant 0 : i32
    %c0_i32_1 = arith.constant 0 : i32
    return %c0_i32, %c0_i32_0 : i32, i32
  }
  func.func @transform_4(%arg0: i32) -> (i32, i32) {
    %c0_i32 = arith.constant 0 : i32
    %c0_i32_0 = arith.constant 0 : i32
    %c0_i32_1 = arith.constant 0 : i32
    return %c0_i32, %c0_i32_0 : i32, i32
  }
  func.func @transform_5(%arg0: i32) -> (i32, i32) {
    %c0_i32 = arith.constant 0 : i32
    %c0_i32_0 = arith.constant 0 : i32
    return %arg0, %c0_i32 : i32, i32
  }
}

</mosaic_0001>

<llo_original>
// kernel: transformer_v1_forward.17
$region0: #{transformer_v1_forward.17}
  #allocation0 [shape = 'u32[]', space=smem, size = 0x4, offset = 0x4, fixed_abs, tag = 'smem constant byte address 0x4 - core index']
  #allocation1 [shape = 'u32[72,128]{1,0:T(1,128)}', space=vmem, size = 0x9000, scoped, tag = 'internal scratch']
  %s0 = inlined_call_operand.vmem [shape: bf16[2,8,32], index: 0, kind: input, shape index: {}]
  %s1 = inlined_call_operand.vmem [shape: bf16[32,96], index: 1, kind: input, shape index: {}]
  %s2 = inlined_call_operand.vmem [shape: f32[1,96], index: 2, kind: input, shape index: {}]
  %s3 = inlined_call_operand.vmem [shape: bf16[32,32], index: 3, kind: input, shape index: {}]
  %s4 = inlined_call_operand.vmem [shape: f32[1,32], index: 4, kind: input, shape index: {}]
  %s5 = inlined_call_operand.vmem [shape: f32[1,32], index: 5, kind: input, shape index: {}]
  %s6 = inlined_call_operand.vmem [shape: f32[1,32], index: 6, kind: input, shape index: {}]
  %s7 = inlined_call_operand.vmem [shape: bf16[2,8,32], index: 7, kind: output, shape index: {}]
  %s8 = sld [smem:[#allocation0]]
  $region61: #{transformer_v1_forward.17} parent=0
    _
  %s10 = ssub.s32 1, %s8
  %s11 = scalar_select 0, %s10, %s8
  loop: start=0, step=1, limit=4
  $region2: #{transformer_v1_forward.17} parent=0 // loop_pre_header
    _
  $region3: #{transformer_v1_forward.17} parent=0 // loop_header
    %s13 = sphi 0, %s17
    %p14 = scmp.ge.s32.totalorder %s13, 4
    %s23 = sphi 0, %s25
    %s26 = sphi 0, %s23
    %s27 = sphi 0, %s26
    %s43 = sphi 0, %s27
    %s47 = sphi 0, %s47
    %s49 = sphi 0, %s47
    %s50 = sphi 0, %s49
    %s64 = sphi 0, %s50
    %s68 = sphi 0, %s68
    %s70 = sphi 0, %s68
    %s71 = sphi 0, %s70
    %s85 = sphi 0, %s71
    %s89 = sphi 0, %s89
    %s91 = sphi 0, %s89
    %s92 = sphi 0, %s91
    %s106 = sphi 0, %s92
    %s110 = sphi 0, %s110
    %s112 = sphi 0, %s110
    %s113 = sphi 0, %s112
    %s127 = sphi 0, %s113
    %s131 = sphi 0, %s131
    %s133 = sphi 0, %s131
    %s134 = sphi 0, %s133
    %s148 = sphi 0, %s134
    %s152 = sphi 0, %s152
    %s154 = sphi 0, %s152
    %s155 = sphi 0, %s154
    %s169 = sphi 0, %s155
    %s175 = sphi 0, %s177
    %s178 = sphi 0, %s175
    %s179 = sphi 0, %s178
    %s195 = sphi 0, %s179
  $region4: #{transformer_v1_forward.17} parent=0 // loop_header_branch
    %16 = sbr.rel (%p14) target = $region8
  $region5: #{transformer_v1_forward.17} parent=0 // loop_body
    %s18 = ssub.s32 %s13, 1
    %s19 = ssub.s32 %s13, 2
    %s20 = sadd.s32 %s13, 1
    %s21 = ssub.s32 %s13, %s20
    %p22 = scmp.eq.s32.totalorder %s21, 0
    %s24 = sadd.s32 %s23, 1
    %s25 = scalar_select %p22, %s23, %s24
    %p28 = pneg %p22
    %p29 = scmp.eq.s32.totalorder %s13, 1
    %p30 = por %p28, %p29
    %p31 = scmp.ne.s32.totalorder %s23, %s26
    %p32 = scmp.eq.s32.totalorder %s13, 0
    %p33 = por %p31, %p32
    %p34 = scmp.ne.s32.totalorder %s23, %s26
    %p35 = scmp.eq.s32.totalorder %s18, 1
    %p36 = por %p34, %p35
    %p37 = scmp.ne.s32.totalorder %s26, %s27
    %p38 = scmp.eq.s32.totalorder %s18, 0
    %p39 = por %p37, %p38
    %p40 = scmp.ne.s32.totalorder %s26, %s27
    %p41 = scmp.eq.s32.totalorder %s19, 1
    %p42 = por %p40, %p41
    %p44 = scmp.ne.s32.totalorder %s27, %s43
    %p45 = scmp.eq.s32.totalorder %s19, 0
    %p46 = por %p44, %p45
    %s48 = sadd.s32 %s47, 1
    %p51 = scmp.eq.s32.totalorder %s13, 1
    %p52 = scmp.ne.s32.totalorder %s47, %s49
    %p53 = scmp.eq.s32.totalorder %s13, 0
    %p54 = por %p52, %p53
    %p55 = scmp.ne.s32.totalorder %s47, %s49
    %p56 = scmp.eq.s32.totalorder %s18, 1
    %p57 = por %p55, %p56
    %p58 = scmp.ne.s32.totalorder %s49, %s50
    %p59 = scmp.eq.s32.totalorder %s18, 0
    %p60 = por %p58, %p59
    %p61 = scmp.ne.s32.totalorder %s49, %s50
    %p62 = scmp.eq.s32.totalorder %s19, 1
    %p63 = por %p61, %p62
    %p65 = scmp.ne.s32.totalorder %s50, %s64
    %p66 = scmp.eq.s32.totalorder %s19, 0
    %p67 = por %p65, %p66
    %s69 = sadd.s32 %s68, 1
    %p72 = scmp.eq.s32.totalorder %s13, 1
    %p73 = scmp.ne.s32.totalorder %s68, %s70
    %p74 = scmp.eq.s32.totalorder %s13, 0
    %p75 = por %p73, %p74
    %p76 = scmp.ne.s32.totalorder %s68, %s70
    %p77 = scmp.eq.s32.totalorder %s18, 1
    %p78 = por %p76, %p77
    %p79 = scmp.ne.s32.totalorder %s70, %s71
    %p80 = scmp.eq.s32.totalorder %s18, 0
    %p81 = por %p79, %p80
    %p82 = scmp.ne.s32.totalorder %s70, %s71
    %p83 = scmp.eq.s32.totalorder %s19, 1
    %p84 = por %p82, %p83
    %p86 = scmp.ne.s32.totalorder %s71, %s85
    %p87 = scmp.eq.s32.totalorder %s19, 0
    %p88 = por %p86, %p87
    %s90 = sadd.s32 %s89, 1
    %p93 = scmp.eq.s32.totalorder %s13, 1
    %p94 = scmp.ne.s32.totalorder %s89, %s91
    %p95 = scmp.eq.s32.totalorder %s13, 0
    %p96 = por %p94, %p95
    %p97 = scmp.ne.s32.totalorder %s89, %s91
    %p98 = scmp.eq.s32.totalorder %s18, 1
    %p99 = por %p97, %p98
    %p100 = scmp.ne.s32.totalorder %s91, %s92
    %p101 = scmp.eq.s32.totalorder %s18, 0
    %p102 = por %p100, %p101
    %p103 = scmp.ne.s32.totalorder %s91, %s92
    %p104 = scmp.eq.s32.totalorder %s19, 1
    %p105 = por %p103, %p104
    %p107 = scmp.ne.s32.totalorder %s92, %s106
    %p108 = scmp.eq.s32.totalorder %s19, 0
    %p109 = por %p107, %p108
    %s111 = sadd.s32 %s110, 1
    %p114 = scmp.eq.s32.totalorder %s13, 1
    %p115 = scmp.ne.s32.totalorder %s110, %s112
    %p116 = scmp.eq.s32.totalorder %s13, 0
    %p117 = por %p115, %p116
    %p118 = scmp.ne.s32.totalorder %s110, %s112
    %p119 = scmp.eq.s32.totalorder %s18, 1
    %p120 = por %p118, %p119
    %p121 = scmp.ne.s32.totalorder %s112, %s113
    %p122 = scmp.eq.s32.totalorder %s18, 0
    %p123 = por %p121, %p122
    %p124 = scmp.ne.s32.totalorder %s112, %s113
    %p125 = scmp.eq.s32.totalorder %s19, 1
    %p126 = por %p124, %p125
    %p128 = scmp.ne.s32.totalorder %s113, %s127
    %p129 = scmp.eq.s32.totalorder %s19, 0
    %p130 = por %p128, %p129
    %s132 = sadd.s32 %s131, 1
    %p135 = scmp.eq.s32.totalorder %s13, 1
    %p136 = scmp.ne.s32.totalorder %s131, %s133
    %p137 = scmp.eq.s32.totalorder %s13, 0
    %p138 = por %p136, %p137
    %p139 = scmp.ne.s32.totalorder %s131, %s133
    %p140 = scmp.eq.s32.totalorder %s18, 1
    %p141 = por %p139, %p140
    %p142 = scmp.ne.s32.totalorder %s133, %s134
    %p143 = scmp.eq.s32.totalorder %s18, 0
    %p144 = por %p142, %p143
    %p145 = scmp.ne.s32.totalorder %s133, %s134
    %p146 = scmp.eq.s32.totalorder %s19, 1
    %p147 = por %p145, %p146
    %p149 = scmp.ne.s32.totalorder %s134, %s148
    %p150 = scmp.eq.s32.totalorder %s19, 0
    %p151 = por %p149, %p150
    %s153 = sadd.s32 %s152, 1
    %p156 = scmp.eq.s32.totalorder %s13, 1
    %p157 = scmp.ne.s32.totalorder %s152, %s154
    %p158 = scmp.eq.s32.totalorder %s13, 0
    %p159 = por %p157, %p158
    %p160 = scmp.ne.s32.totalorder %s152, %s154
    %p161 = scmp.eq.s32.totalorder %s18, 1
    %p162 = por %p160, %p161
    %p163 = scmp.ne.s32.totalorder %s154, %s155
    %p164 = scmp.eq.s32.totalorder %s18, 0
    %p165 = por %p163, %p164
    %p166 = scmp.ne.s32.totalorder %s154, %s155
    %p167 = scmp.eq.s32.totalorder %s19, 1
    %p168 = por %p166, %p167
    %p170 = scmp.ne.s32.totalorder %s155, %s169
    %p171 = scmp.eq.s32.totalorder %s19, 0
    %p172 = por %p170, %p171
    %s173 = ssub.s32 %s13, %s20
    %p174 = scmp.eq.s32.totalorder %s173, 0
    %s176 = sadd.s32 %s175, 1
    %s177 = scalar_select %p174, %s175, %s176
    %p180 = pneg %p174
    %p181 = scmp.eq.s32.totalorder %s13, 1
    %p182 = por %p180, %p181
    %p183 = scmp.ne.s32.totalorder %s175, %s178
    %p184 = scmp.eq.s32.totalorder %s13, 0
    %p185 = por %p183, %p184
    %p186 = scmp.ne.s32.totalorder %s175, %s178
    %p187 = scmp.eq.s32.totalorder %s18, 1
    %p188 = por %p186, %p187
    %p189 = scmp.ne.s32.totalorder %s178, %s179
    %p190 = scmp.eq.s32.totalorder %s18, 0
    %p191 = por %p189, %p190
    %p192 = scmp.ne.s32.totalorder %s178, %s179
    %p193 = scmp.eq.s32.totalorder %s19, 1
    %p194 = por %p192, %p193
    %p196 = scmp.ne.s32.totalorder %s179, %s195
    %p197 = scmp.eq.s32.totalorder %s19, 0
    %p198 = por %p196, %p197
    %p199 = scmp.le.s32.totalorder 1, %s13
    %p200 = scmp.lt.s32.totalorder %s13, 3
    %p201 = pnand %p199, %p200
    %p202 = pneg %p201
    // Predicated region
    $region9: #{transformer_v1_forward.17} parent=5 // pred_check
      _
    $region10: #{transformer_v1_forward.17} parent=5 // pred_check_branch
      %204 = sbr.rel (%p201) target = $region12
    $region11: #{transformer_v1_forward.17} parent=5 // pred_region
      %s205 = ssub.s32 %s13, 1
      // Predicated region
      $region13: #{transformer_v1_forward.17} parent=11 // pred_check
        %p206 = pneg %p60
      $region14: #{transformer_v1_forward.17} parent=11 // pred_check_branch
        %208 = sbr.rel (%p206) target = $region16
      $region15: #{transformer_v1_forward.17} parent=11 // pred_region
        _
      $region16: #{transformer_v1_forward.17} parent=11 // pred_fallthru
        _
      // Predicated region
      $region17: #{transformer_v1_forward.17} parent=11 // pred_check
        %p209 = pneg %p81
      $region18: #{transformer_v1_forward.17} parent=11 // pred_check_branch
        %211 = sbr.rel (%p209) target = $region20
      $region19: #{transformer_v1_forward.17} parent=11 // pred_region
        _
      $region20: #{transformer_v1_forward.17} parent=11 // pred_fallthru
        _
      // Predicated region
      $region21: #{transformer_v1_forward.17} parent=11 // pred_check
        %p212 = pneg %p102
      $region22: #{transformer_v1_forward.17} parent=11 // pred_check_branch
        %214 = sbr.rel (%p212) target = $region24
      $region23: #{transformer_v1_forward.17} parent=11 // pred_region
        _
      $region24: #{transformer_v1_forward.17} parent=11 // pred_fallthru
        _
      // Predicated region
      $region25: #{transformer_v1_forward.17} parent=11 // pred_check
        %p215 = pneg %p123
      $region26: #{transformer_v1_forward.17} parent=11 // pred_check_branch
        %217 = sbr.rel (%p215) target = $region28
      $region27: #{transformer_v1_forward.17} parent=11 // pred_region
        _
      $region28: #{transformer_v1_forward.17} parent=11 // pred_fallthru
        _
      // Predicated region
      $region29: #{transformer_v1_forward.17} parent=11 // pred_check
        %p218 = pneg %p144
      $region30: #{transformer_v1_forward.17} parent=11 // pred_check_branch
        %220 = sbr.rel (%p218) target = $region32
      $region31: #{transformer_v1_forward.17} parent=11 // pred_region
        _
      $region32: #{transformer_v1_forward.17} parent=11 // pred_fallthru
        _
      // Predicated region
      $region33: #{transformer_v1_forward.17} parent=11 // pred_check
        %p221 = pneg %p165
      $region34: #{transformer_v1_forward.17} parent=11 // pred_check_branch
        %223 = sbr.rel (%p221) target = $region36
      $region35: #{transformer_v1_forward.17} parent=11 // pred_region
        _
      $region36: #{transformer_v1_forward.17} parent=11 // pred_fallthru
        _
    $region12: #{transformer_v1_forward.17} parent=5 // pred_fallthru
      _
    %p224 = scmp.lt.s32.totalorder %s13, 2
    // Predicated region
    $region37: #{transformer_v1_forward.17} parent=5 // pred_check
      %p225 = pneg %p224
    $region38: #{transformer_v1_forward.17} parent=5 // pred_check_branch
      %227 = sbr.rel (%p225) target = $region40
    $region39: #{transformer_v1_forward.17} parent=5 // pred_region
      // Predicated region
      $region41: #{transformer_v1_forward.17} parent=39 // pred_check
        %p228 = pneg %p33
      $region42: #{transformer_v1_forward.17} parent=39 // pred_check_branch
        %230 = sbr.rel (%p228) target = $region44
      $region43: #{transformer_v1_forward.17} parent=39 // pred_region
        %p231 = scmp.lt.s32.totalorder %s13, 1
        %s232 = scalar_select %p231, %s13, 1
        %s233 = smul.addr %s232, 4
        %s234 = scalar_lea.vmem %s0, %s233
      $region44: #{transformer_v1_forward.17} parent=39 // pred_fallthru
        _
    $region40: #{transformer_v1_forward.17} parent=5 // pred_fallthru
      _
    %p235 = scmp.le.s32.totalorder 1, %s13
    %p236 = scmp.lt.s32.totalorder %s13, 3
    %p237 = pnand %p235, %p236
    %p238 = pneg %p237
    // Predicated region
    $region45: #{transformer_v1_forward.17} parent=5 // pred_check
      _
    $region46: #{transformer_v1_forward.17} parent=5 // pred_check_branch
      %240 = sbr.rel (%p237) target = $region48
    $region47: #{transformer_v1_forward.17} parent=5 // pred_region
      %s241 = ssub.s32 %s13, 1
      %p242 = scmp.lt.s32.totalorder %s18, 1
      %s243 = scalar_select %p242, %s18, 1
      %s244 = smul.addr %s243, 4
      %s245 = scalar_lea.vmem %s0, %s244
      %p246 = pneg %p39
      %p247 = pneg %p36
      %p248 = pneg %p60
      %p249 = pneg %p57
      %p250 = pneg %p81
      %p251 = pneg %p78
      %p252 = pneg %p102
      %p253 = pneg %p99
      %p254 = pneg %p123
      %p255 = pneg %p120
      %p256 = pneg %p144
      %p257 = pneg %p141
      %p258 = pneg %p165
      %p259 = pneg %p162
      %p260 = pneg %p191
      %p261 = pneg %p188
      %p262 = scmp.lt.s32.totalorder %s18, 1
      %s263 = scalar_select %p262, %s18, 1
      %s264 = smul.addr %s263, 4
      %s265 = scalar_lea.vmem %s7, %s264
      %p266 = scmp.lt.s32.totalorder %s18, 1
      %s267 = scalar_select %p266, %s18, 1
      %s268 = smul.addr %s267, 4
      %s269 = scalar_lea.vmem %s0, %s268
      %p270 = scmp.lt.s32.totalorder %s18, 1
      %s271 = scalar_select %p270, %s18, 1
      %s272 = smul.addr %s271, 4
      %s273 = scalar_lea.vmem %s7, %s272
      %v275 = vld [vmem:[%s269] sm:$0xf]
      %v276 = vld [vmem:[%s1] sm:$0xf]
      %v277 = vld [vmem:[%s1 + $0x4] sm:$0xf]
      %v278 = vld [vmem:[%s1 + $0x8] sm:$0xf]
      %v279 = vld [vmem:[%s1 + $0xc] sm:$0xf]
      %v280 = vld [vmem:[%s2] sm:$0x1]
      %v282 = vperm.slane %v280, 0
      %v288 = vunpack.c.l.b16 %v276
      %v289 = vunpack.c.l.b16 %v277
      %v290 = vunpack.c.l.b16 %v278
      %v291 = vunpack.c.l.b16 %v279
      %v292 = vpack.c.b16 %v289, %v288
      %v293 = vpack.c.b16 %v291, %v290
      %vm296 = vcmask 261120
      %v298 = vsel %vm296, %v275, 0
      %300 = vmatpush.bf16.msra.mxu0 0
      %301 = vmatpush.bf16.msra.mxu0 0
      %302 = vmatpush.bf16.msra.mxu0 0
      %303 = vmatpush.bf16.msra.mxu0 0
      %304 = vmatpush.bf16.msra.mxu0 0
      %305 = vmatpush.bf16.msra.mxu0 0
      %306 = vmatpush.bf16.msra.mxu0 %v293
      %307 = vmatpush.bf16.msra.mxu0 %v292
      %308 = vmatmul.bf16.gmra.mxu0 %v298
      %v309 = vpop.f32.mrf.mxu0
      %v310 = vadd.f32 %v282, %v309
      %v311 = vpop.f32.mrf.mxu0
      %312 = vdwg.mxu0
      %v313 = vpack.c.bf16 %v310, %v310
      %v315 = vunpack.c.l.b16 %v313
      %v316 = vpack.c.b16 %v315, %v315
      %317 = vrot.lane.b32.xlu0 %v316, 96
      %v318 = vpop.permute.xlu0 %317
      %vm319 = vcmask 31744
      %v321 = vsel %vm319, %v313, 0
      %v324 = vsel %vm319, %v318, 0
      %326 = vmatpush.bf16.xpose.msra.mxu0 0
      %327 = vmatpush.bf16.xpose.msra.mxu0 0
      %328 = vmatpush.bf16.xpose.msra.mxu0 0
      %329 = vmatpush.bf16.xpose.msra.mxu0 0
      %330 = vmatpush.bf16.xpose.msra.mxu0 0
      %331 = vmatpush.bf16.xpose.msra.mxu0 0
      %332 = vmatpush.bf16.xpose.msra.mxu0 0
      %333 = vmatpush.bf16.xpose.msra.mxu0 %v324
      %334 = vmatmul.bf16.gmra.mxu0 %v321
      %v335 = vpop.f32.mrf.mxu0
      %v336 = vadd.f32 0.0, %v335
      %v337 = vpop.f32.mrf.mxu0
      %338 = vdwg.mxu0
      %v339 = vmul.f32 %v336, 0.5
      %vm340 = vcmask 64512
      %v341 = vsel %vm340, %v339, -inf
      %342 = vmax.xlane.f32.xlu0 %v341
      %v343 = vpop.xlane.xlu0 %342
      %v344 = vsub.f32 %v339, %v343
      %v345 = vmul.f32 %v344, 1.442695
      %v346 = vpow.pop %v345
      %v347 = vsel %vm340, %v346, 0.0
      %348 = vadd.xlane.f32.xlu0 %v347
      %v349 = vpop.xlane.xlu0 %348
      %v350 = vrcp.pop %v349
      %v351 = vmul.f32 %v349, %v350
      %v352 = vsub.f32 1.0, %v351
      %v353 = vmul.f32 %v350, %v352
      %v354 = vadd.f32 %v350, %v353
      %vm355 = vweird.f32 %v349
      %vm356 = vweird.f32 %v350
      %vm357 = vmor %vm355, %vm356
      %v358 = vsel %vm357, %v350, %v354
      %v359 = vand.u32 2147483647, %v349
      %vm360 = vcmp.eq.f32.partialorder %v359, 8.507059e+37
      %v361 = vand.u32 %v349, 2147483648
      %v362 = vor.u32 1.1754944e-38, %v361
      %v363 = vsel %vm360, %v362, %v358
      %v364 = vmul.f32 %v346, %v363
      %v365 = vpack.c.bf16 %v364, %v364
      %366 = vrot.lane.b32.xlu0 %v316, 64
      %v367 = vpop.permute.xlu0 %366
      %v369 = vsel %vm340, %v365, 0
      %vm371 = vcmask 1043456
      %v373 = vsel %vm371, %v367, 0
      %375 = vmatpush.bf16.msra.mxu0 0
      %376 = vmatpush.bf16.msra.mxu0 0
      %377 = vmatpush.bf16.msra.mxu0 0
      %378 = vmatpush.bf16.msra.mxu0 0
      %379 = vmatpush.bf16.msra.mxu0 0
      %380 = vmatpush.bf16.msra.mxu0 0
      %381 = vmatpush.bf16.msra.mxu0 0
      %382 = vmatpush.bf16.msra.mxu0 %v373
      %383 = vmatmul.bf16.gmra.mxu0 %v369
      %v384 = vpop.f32.mrf.mxu0
      %v385 = vadd.f32 0.0, %v384
      %v386 = vpop.f32.mrf.mxu0
      %387 = vdwg.mxu0
      %388 = vrot.lane.b32.xlu0 %v316, 124
      %v389 = vpop.permute.xlu0 %388
      %390 = vrot.lane.b32.xlu0 %v316, 92
      %v391 = vpop.permute.xlu0 %390
      %v393 = vsel %vm319, %v389, 0
      %v396 = vsel %vm319, %v391, 0
      %398 = vmatpush.bf16.xpose.msra.mxu0 0
      %399 = vmatpush.bf16.xpose.msra.mxu0 0
      %400 = vmatpush.bf16.xpose.msra.mxu0 0
      %401 = vmatpush.bf16.xpose.msra.mxu0 0
      %402 = vmatpush.bf16.xpose.msra.mxu0 0
      %403 = vmatpush.bf16.xpose.msra.mxu0 0
      %404 = vmatpush.bf16.xpose.msra.mxu0 0
      %405 = vmatpush.bf16.xpose.msra.mxu0 %v396
      %406 = vmatmul.bf16.gmra.mxu0 %v393
      %v407 = vpop.f32.mrf.mxu0
      %v408 = vadd.f32 0.0, %v407
      %v409 = vpop.f32.mrf.mxu0
      %410 = vdwg.mxu0
      %v411 = vmul.f32 %v408, 0.5
      %v412 = vsel %vm340, %v411, -inf
      %413 = vmax.xlane.f32.xlu0 %v412
      %v414 = vpop.xlane.xlu0 %413
      %v415 = vsub.f32 %v411, %v414
      %v416 = vmul.f32 %v415, 1.442695
      %v417 = vpow.pop %v416
      %v418 = vsel %vm340, %v417, 0.0
      %419 = vadd.xlane.f32.xlu0 %v418
      %v420 = vpop.xlane.xlu0 %419
      %v421 = vrcp.pop %v420
      %v422 = vmul.f32 %v420, %v421
      %v423 = vsub.f32 1.0, %v422
      %v424 = vmul.f32 %v421, %v423
      %v425 = vadd.f32 %v421, %v424
      %vm426 = vweird.f32 %v420
      %vm427 = vweird.f32 %v421
      %vm428 = vmor %vm426, %vm427
      %v429 = vsel %vm428, %v421, %v425
      %v430 = vand.u32 2147483647, %v420
      %vm431 = vcmp.eq.f32.partialorder %v430, 8.507059e+37
      %v432 = vand.u32 %v420, 2147483648
      %v433 = vor.u32 1.1754944e-38, %v432
      %v434 = vsel %vm431, %v433, %v429
      %v435 = vmul.f32 %v417, %v434
      %v436 = vpack.c.bf16 %v435, %v435
      %437 = vrot.lane.b32.xlu0 %v316, 60
      %v438 = vpop.permute.xlu0 %437
      %v440 = vsel %vm340, %v436, 0
      %v443 = vsel %vm371, %v438, 0
      %445 = vmatpush.bf16.msra.mxu0 0
      %446 = vmatpush.bf16.msra.mxu0 0
      %447 = vmatpush.bf16.msra.mxu0 0
      %448 = vmatpush.bf16.msra.mxu0 0
      %449 = vmatpush.bf16.msra.mxu0 0
      %450 = vmatpush.bf16.msra.mxu0 0
      %451 = vmatpush.bf16.msra.mxu0 0
      %452 = vmatpush.bf16.msra.mxu0 %v443
      %453 = vmatmul.bf16.gmra.mxu0 %v440
      %v454 = vpop.f32.mrf.mxu0
      %v455 = vadd.f32 0.0, %v454
      %v456 = vpop.f32.mrf.mxu0
      %457 = vdwg.mxu0
      %458 = vrot.lane.b32.xlu0 %v316, 120
      %v459 = vpop.permute.xlu0 %458
      %460 = vrot.lane.b32.xlu0 %v316, 88
      %v461 = vpop.permute.xlu0 %460
      %v463 = vsel %vm319, %v459, 0
      %v466 = vsel %vm319, %v461, 0
      %468 = vmatpush.bf16.xpose.msra.mxu0 0
      %469 = vmatpush.bf16.xpose.msra.mxu0 0
      %470 = vmatpush.bf16.xpose.msra.mxu0 0
      %471 = vmatpush.bf16.xpose.msra.mxu0 0
      %472 = vmatpush.bf16.xpose.msra.mxu0 0
      %473 = vmatpush.bf16.xpose.msra.mxu0 0
      %474 = vmatpush.bf16.xpose.msra.mxu0 0
      %475 = vmatpush.bf16.xpose.msra.mxu0 %v466
      %476 = vmatmul.bf16.gmra.mxu0 %v463
      %v477 = vpop.f32.mrf.mxu0
      %v478 = vadd.f32 0.0, %v477
      %v479 = vpop.f32.mrf.mxu0
      %480 = vdwg.mxu0
      %v481 = vmul.f32 %v478, 0.5
      %v482 = vsel %vm340, %v481, -inf
      %483 = vmax.xlane.f32.xlu0 %v482
      %v484 = vpop.xlane.xlu0 %483
      %v485 = vsub.f32 %v481, %v484
      %v486 = vmul.f32 %v485, 1.442695
      %v487 = vpow.pop %v486
      %v488 = vsel %vm340, %v487, 0.0
      %489 = vadd.xlane.f32.xlu0 %v488
      %v490 = vpop.xlane.xlu0 %489
      %v491 = vrcp.pop %v490
      %v492 = vmul.f32 %v490, %v491
      %v493 = vsub.f32 1.0, %v492
      %v494 = vmul.f32 %v491, %v493
      %v495 = vadd.f32 %v491, %v494
      %vm496 = vweird.f32 %v490
      %vm497 = vweird.f32 %v491
      %vm498 = vmor %vm496, %vm497
      %v499 = vsel %vm498, %v491, %v495
      %v500 = vand.u32 2147483647, %v490
      %vm501 = vcmp.eq.f32.partialorder %v500, 8.507059e+37
      %v502 = vand.u32 %v490, 2147483648
      %v503 = vor.u32 1.1754944e-38, %v502
      %v504 = vsel %vm501, %v503, %v499
      %v505 = vmul.f32 %v487, %v504
      %v506 = vpack.c.bf16 %v505, %v505
      %507 = vrot.lane.b32.xlu0 %v316, 56
      %v508 = vpop.permute.xlu0 %507
      %v510 = vsel %vm340, %v506, 0
      %v513 = vsel %vm371, %v508, 0
      %515 = vmatpush.bf16.msra.mxu0 0
      %516 = vmatpush.bf16.msra.mxu0 0
      %517 = vmatpush.bf16.msra.mxu0 0
      %518 = vmatpush.bf16.msra.mxu0 0
      %519 = vmatpush.bf16.msra.mxu0 0
      %520 = vmatpush.bf16.msra.mxu0 0
      %521 = vmatpush.bf16.msra.mxu0 0
      %522 = vmatpush.bf16.msra.mxu0 %v513
      %523 = vmatmul.bf16.gmra.mxu0 %v510
      %v524 = vpop.f32.mrf.mxu0
      %v525 = vadd.f32 0.0, %v524
      %v526 = vpop.f32.mrf.mxu0
      %527 = vdwg.mxu0
      %528 = vrot.lane.b32.xlu0 %v316, 116
      %v529 = vpop.permute.xlu0 %528
      %530 = vrot.lane.b32.xlu0 %v316, 84
      %v531 = vpop.permute.xlu0 %530
      %v533 = vsel %vm319, %v529, 0
      %v536 = vsel %vm319, %v531, 0
      %538 = vmatpush.bf16.xpose.msra.mxu0 0
      %539 = vmatpush.bf16.xpose.msra.mxu0 0
      %540 = vmatpush.bf16.xpose.msra.mxu0 0
      %541 = vmatpush.bf16.xpose.msra.mxu0 0
      %542 = vmatpush.bf16.xpose.msra.mxu0 0
      %543 = vmatpush.bf16.xpose.msra.mxu0 0
      %544 = vmatpush.bf16.xpose.msra.mxu0 0
      %545 = vmatpush.bf16.xpose.msra.mxu0 %v536
      %546 = vmatmul.bf16.gmra.mxu0 %v533
      %v547 = vpop.f32.mrf.mxu0
      %v548 = vadd.f32 0.0, %v547
      %v549 = vpop.f32.mrf.mxu0
      %550 = vdwg.mxu0
      %v551 = vmul.f32 %v548, 0.5
      %v552 = vsel %vm340, %v551, -inf
      %553 = vmax.xlane.f32.xlu0 %v552
      %v554 = vpop.xlane.xlu0 %553
      %v555 = vsub.f32 %v551, %v554
      %v556 = vmul.f32 %v555, 1.442695
      %v557 = vpow.pop %v556
      %v558 = vsel %vm340, %v557, 0.0
      %559 = vadd.xlane.f32.xlu0 %v558
      %v560 = vpop.xlane.xlu0 %559
      %v561 = vrcp.pop %v560
      %v562 = vmul.f32 %v560, %v561
      %v563 = vsub.f32 1.0, %v562
      %v564 = vmul.f32 %v561, %v563
      %v565 = vadd.f32 %v561, %v564
      %vm566 = vweird.f32 %v560
      %vm567 = vweird.f32 %v561
      %vm568 = vmor %vm566, %vm567
      %v569 = vsel %vm568, %v561, %v565
      %v570 = vand.u32 2147483647, %v560
      %vm571 = vcmp.eq.f32.partialorder %v570, 8.507059e+37
      %v572 = vand.u32 %v560, 2147483648
      %v573 = vor.u32 1.1754944e-38, %v572
      %v574 = vsel %vm571, %v573, %v569
      %v575 = vmul.f32 %v557, %v574
      %v576 = vpack.c.bf16 %v575, %v575
      %577 = vrot.lane.b32.xlu0 %v316, 52
      %v578 = vpop.permute.xlu0 %577
      %v580 = vsel %vm340, %v576, 0
      %v583 = vsel %vm371, %v578, 0
      %585 = vmatpush.bf16.msra.mxu0 0
      %586 = vmatpush.bf16.msra.mxu0 0
      %587 = vmatpush.bf16.msra.mxu0 0
      %588 = vmatpush.bf16.msra.mxu0 0
      %589 = vmatpush.bf16.msra.mxu0 0
      %590 = vmatpush.bf16.msra.mxu0 0
      %591 = vmatpush.bf16.msra.mxu0 0
      %592 = vmatpush.bf16.msra.mxu0 %v583
      %593 = vmatmul.bf16.gmra.mxu0 %v580
      %v594 = vpop.f32.mrf.mxu0
      %v595 = vadd.f32 0.0, %v594
      %v596 = vpop.f32.mrf.mxu0
      %597 = vdwg.mxu0
      %598 = vrot.lane.b32.xlu0 %v316, 112
      %v599 = vpop.permute.xlu0 %598
      %600 = vrot.lane.b32.xlu0 %v316, 80
      %v601 = vpop.permute.xlu0 %600
      %v603 = vsel %vm319, %v599, 0
      %v606 = vsel %vm319, %v601, 0
      %608 = vmatpush.bf16.xpose.msra.mxu0 0
      %609 = vmatpush.bf16.xpose.msra.mxu0 0
      %610 = vmatpush.bf16.xpose.msra.mxu0 0
      %611 = vmatpush.bf16.xpose.msra.mxu0 0
      %612 = vmatpush.bf16.xpose.msra.mxu0 0
      %613 = vmatpush.bf16.xpose.msra.mxu0 0
      %614 = vmatpush.bf16.xpose.msra.mxu0 0
      %615 = vmatpush.bf16.xpose.msra.mxu0 %v606
      %616 = vmatmul.bf16.gmra.mxu0 %v603
      %v617 = vpop.f32.mrf.mxu0
      %v618 = vadd.f32 0.0, %v617
      %v619 = vpop.f32.mrf.mxu0
      %620 = vdwg.mxu0
      %v621 = vmul.f32 %v618, 0.5
      %v622 = vsel %vm340, %v621, -inf
      %623 = vmax.xlane.f32.xlu0 %v622
      %v624 = vpop.xlane.xlu0 %623
      %v625 = vsub.f32 %v621, %v624
      %v626 = vmul.f32 %v625, 1.442695
      %v627 = vpow.pop %v626
      %v628 = vsel %vm340, %v627, 0.0
      %629 = vadd.xlane.f32.xlu0 %v628
      %v630 = vpop.xlane.xlu0 %629
      %v631 = vrcp.pop %v630
      %v632 = vmul.f32 %v630, %v631
      %v633 = vsub.f32 1.0, %v632
      %v634 = vmul.f32 %v631, %v633
      %v635 = vadd.f32 %v631, %v634
      %vm636 = vweird.f32 %v630
      %vm637 = vweird.f32 %v631
      %vm638 = vmor %vm636, %vm637
      %v639 = vsel %vm638, %v631, %v635
      %v640 = vand.u32 2147483647, %v630
      %vm641 = vcmp.eq.f32.partialorder %v640, 8.507059e+37
      %v642 = vand.u32 %v630, 2147483648
      %v643 = vor.u32 1.1754944e-38, %v642
      %v644 = vsel %vm641, %v643, %v639
      %v645 = vmul.f32 %v627, %v644
      %v646 = vpack.c.bf16 %v645, %v645
      %647 = vrot.lane.b32.xlu0 %v316, 48
      %v648 = vpop.permute.xlu0 %647
      %v650 = vsel %vm340, %v646, 0
      %v653 = vsel %vm371, %v648, 0
      %655 = vmatpush.bf16.msra.mxu0 0
      %656 = vmatpush.bf16.msra.mxu0 0
      %657 = vmatpush.bf16.msra.mxu0 0
      %658 = vmatpush.bf16.msra.mxu0 0
      %659 = vmatpush.bf16.msra.mxu0 0
      %660 = vmatpush.bf16.msra.mxu0 0
      %661 = vmatpush.bf16.msra.mxu0 0
      %662 = vmatpush.bf16.msra.mxu0 %v653
      %663 = vmatmul.bf16.gmra.mxu0 %v650
      %v664 = vpop.f32.mrf.mxu0
      %v665 = vadd.f32 0.0, %v664
      %v666 = vpop.f32.mrf.mxu0
      %667 = vdwg.mxu0
      %668 = vrot.lane.b32.xlu0 %v316, 108
      %v669 = vpop.permute.xlu0 %668
      %670 = vrot.lane.b32.xlu0 %v316, 76
      %v671 = vpop.permute.xlu0 %670
      %v673 = vsel %vm319, %v669, 0
      %v676 = vsel %vm319, %v671, 0
      %678 = vmatpush.bf16.xpose.msra.mxu0 0
      %679 = vmatpush.bf16.xpose.msra.mxu0 0
      %680 = vmatpush.bf16.xpose.msra.mxu0 0
      %681 = vmatpush.bf16.xpose.msra.mxu0 0
      %682 = vmatpush.bf16.xpose.msra.mxu0 0
      %683 = vmatpush.bf16.xpose.msra.mxu0 0
      %684 = vmatpush.bf16.xpose.msra.mxu0 0
      %685 = vmatpush.bf16.xpose.msra.mxu0 %v676
      %686 = vmatmul.bf16.gmra.mxu0 %v673
      %v687 = vpop.f32.mrf.mxu0
      %v688 = vadd.f32 0.0, %v687
      %v689 = vpop.f32.mrf.mxu0
      %690 = vdwg.mxu0
      %v691 = vmul.f32 %v688, 0.5
      %v692 = vsel %vm340, %v691, -inf
      %693 = vmax.xlane.f32.xlu0 %v692
      %v694 = vpop.xlane.xlu0 %693
      %v695 = vsub.f32 %v691, %v694
      %v696 = vmul.f32 %v695, 1.442695
      %v697 = vpow.pop %v696
      %v698 = vsel %vm340, %v697, 0.0
      %699 = vadd.xlane.f32.xlu0 %v698
      %v700 = vpop.xlane.xlu0 %699
      %v701 = vrcp.pop %v700
      %v702 = vmul.f32 %v700, %v701
      %v703 = vsub.f32 1.0, %v702
      %v704 = vmul.f32 %v701, %v703
      %v705 = vadd.f32 %v701, %v704
      %vm706 = vweird.f32 %v700
      %vm707 = vweird.f32 %v701
      %vm708 = vmor %vm706, %vm707
      %v709 = vsel %vm708, %v701, %v705
      %v710 = vand.u32 2147483647, %v700
      %vm711 = vcmp.eq.f32.partialorder %v710, 8.507059e+37
      %v712 = vand.u32 %v700, 2147483648
      %v713 = vor.u32 1.1754944e-38, %v712
      %v714 = vsel %vm711, %v713, %v709
      %v715 = vmul.f32 %v697, %v714
      %v716 = vpack.c.bf16 %v715, %v715
      %717 = vrot.lane.b32.xlu0 %v316, 44
      %v718 = vpop.permute.xlu0 %717
      %v720 = vsel %vm340, %v716, 0
      %v723 = vsel %vm371, %v718, 0
      %725 = vmatpush.bf16.msra.mxu0 0
      %726 = vmatpush.bf16.msra.mxu0 0
      %727 = vmatpush.bf16.msra.mxu0 0
      %728 = vmatpush.bf16.msra.mxu0 0
      %729 = vmatpush.bf16.msra.mxu0 0
      %730 = vmatpush.bf16.msra.mxu0 0
      %731 = vmatpush.bf16.msra.mxu0 0
      %732 = vmatpush.bf16.msra.mxu0 %v723
      %733 = vmatmul.bf16.gmra.mxu0 %v720
      %v734 = vpop.f32.mrf.mxu0
      %v735 = vadd.f32 0.0, %v734
      %v736 = vpop.f32.mrf.mxu0
      %737 = vdwg.mxu0
      %738 = vrot.lane.b32.xlu0 %v316, 104
      %v739 = vpop.permute.xlu0 %738
      %740 = vrot.lane.b32.xlu0 %v316, 72
      %v741 = vpop.permute.xlu0 %740
      %v743 = vsel %vm319, %v739, 0
      %v746 = vsel %vm319, %v741, 0
      %748 = vmatpush.bf16.xpose.msra.mxu0 0
      %749 = vmatpush.bf16.xpose.msra.mxu0 0
      %750 = vmatpush.bf16.xpose.msra.mxu0 0
      %751 = vmatpush.bf16.xpose.msra.mxu0 0
      %752 = vmatpush.bf16.xpose.msra.mxu0 0
      %753 = vmatpush.bf16.xpose.msra.mxu0 0
      %754 = vmatpush.bf16.xpose.msra.mxu0 0
      %755 = vmatpush.bf16.xpose.msra.mxu0 %v746
      %756 = vmatmul.bf16.gmra.mxu0 %v743
      %v757 = vpop.f32.mrf.mxu0
      %v758 = vadd.f32 0.0, %v757
      %v759 = vpop.f32.mrf.mxu0
      %760 = vdwg.mxu0
      %v761 = vmul.f32 %v758, 0.5
      %v762 = vsel %vm340, %v761, -inf
      %763 = vmax.xlane.f32.xlu0 %v762
      %v764 = vpop.xlane.xlu0 %763
      %v765 = vsub.f32 %v761, %v764
      %v766 = vmul.f32 %v765, 1.442695
      %v767 = vpow.pop %v766
      %v768 = vsel %vm340, %v767, 0.0
      %769 = vadd.xlane.f32.xlu0 %v768
      %v770 = vpop.xlane.xlu0 %769
      %v771 = vrcp.pop %v770
      %v772 = vmul.f32 %v770, %v771
      %v773 = vsub.f32 1.0, %v772
      %v774 = vmul.f32 %v771, %v773
      %v775 = vadd.f32 %v771, %v774
      %vm776 = vweird.f32 %v770
      %vm777 = vweird.f32 %v771
      %vm778 = vmor %vm776, %vm777
      %v779 = vsel %vm778, %v771, %v775
      %v780 = vand.u32 2147483647, %v770
      %vm781 = vcmp.eq.f32.partialorder %v780, 8.507059e+37
      %v782 = vand.u32 %v770, 2147483648
      %v783 = vor.u32 1.1754944e-38, %v782
      %v784 = vsel %vm781, %v783, %v779
      %v785 = vmul.f32 %v767, %v784
      %v786 = vpack.c.bf16 %v785, %v785
      %787 = vrot.lane.b32.xlu0 %v316, 40
      %v788 = vpop.permute.xlu0 %787
      %v790 = vsel %vm340, %v786, 0
      %v793 = vsel %vm371, %v788, 0
      %795 = vmatpush.bf16.msra.mxu0 0
      %796 = vmatpush.bf16.msra.mxu0 0
      %797 = vmatpush.bf16.msra.mxu0 0
      %798 = vmatpush.bf16.msra.mxu0 0
      %799 = vmatpush.bf16.msra.mxu0 0
      %800 = vmatpush.bf16.msra.mxu0 0
      %801 = vmatpush.bf16.msra.mxu0 0
      %802 = vmatpush.bf16.msra.mxu0 %v793
      %803 = vmatmul.bf16.gmra.mxu0 %v790
      %v804 = vpop.f32.mrf.mxu0
      %v805 = vadd.f32 0.0, %v804
      %v806 = vpop.f32.mrf.mxu0
      %807 = vdwg.mxu0
      %808 = vrot.lane.b32.xlu0 %v316, 100
      %v809 = vpop.permute.xlu0 %808
      %810 = vrot.lane.b32.xlu0 %v316, 68
      %v811 = vpop.permute.xlu0 %810
      %v813 = vsel %vm319, %v809, 0
      %v816 = vsel %vm319, %v811, 0
      %818 = vmatpush.bf16.xpose.msra.mxu0 0
      %819 = vmatpush.bf16.xpose.msra.mxu0 0
      %820 = vmatpush.bf16.xpose.msra.mxu0 0
      %821 = vmatpush.bf16.xpose.msra.mxu0 0
      %822 = vmatpush.bf16.xpose.msra.mxu0 0
      %823 = vmatpush.bf16.xpose.msra.mxu0 0
      %824 = vmatpush.bf16.xpose.msra.mxu0 0
      %825 = vmatpush.bf16.xpose.msra.mxu0 %v816
      %826 = vmatmul.bf16.gmra.mxu0 %v813
      %v827 = vpop.f32.mrf.mxu0
      %v828 = vadd.f32 0.0, %v827
      %v829 = vpop.f32.mrf.mxu0
      %830 = vdwg.mxu0
      %v831 = vmul.f32 %v828, 0.5
      %v832 = vsel %vm340, %v831, -inf
      %833 = vmax.xlane.f32.xlu0 %v832
      %v834 = vpop.xlane.xlu0 %833
      %v835 = vsub.f32 %v831, %v834
      %v836 = vmul.f32 %v835, 1.442695
      %v837 = vpow.pop %v836
      %v838 = vsel %vm340, %v837, 0.0
      %839 = vadd.xlane.f32.xlu0 %v838
      %v840 = vpop.xlane.xlu0 %839
      %v841 = vrcp.pop %v840
      %v842 = vmul.f32 %v840, %v841
      %v843 = vsub.f32 1.0, %v842
      %v844 = vmul.f32 %v841, %v843
      %v845 = vadd.f32 %v841, %v844
      %vm846 = vweird.f32 %v840
      %vm847 = vweird.f32 %v841
      %vm848 = vmor %vm846, %vm847
      %v849 = vsel %vm848, %v841, %v845
      %v850 = vand.u32 2147483647, %v840
      %vm851 = vcmp.eq.f32.partialorder %v850, 8.507059e+37
      %v852 = vand.u32 %v840, 2147483648
      %v853 = vor.u32 1.1754944e-38, %v852
      %v854 = vsel %vm851, %v853, %v849
      %v855 = vmul.f32 %v837, %v854
      %v856 = vpack.c.bf16 %v855, %v855
      %857 = vrot.lane.b32.xlu0 %v316, 36
      %v858 = vpop.permute.xlu0 %857
      %v860 = vsel %vm340, %v856, 0
      %v863 = vsel %vm371, %v858, 0
      %865 = vmatpush.bf16.msra.mxu0 0
      %866 = vmatpush.bf16.msra.mxu0 0
      %867 = vmatpush.bf16.msra.mxu0 0
      %868 = vmatpush.bf16.msra.mxu0 0
      %869 = vmatpush.bf16.msra.mxu0 0
      %870 = vmatpush.bf16.msra.mxu0 0
      %871 = vmatpush.bf16.msra.mxu0 0
      %872 = vmatpush.bf16.msra.mxu0 %v863
      %873 = vmatmul.bf16.gmra.mxu0 %v860
      %v874 = vpop.f32.mrf.mxu0
      %v875 = vadd.f32 0.0, %v874
      %v876 = vpop.f32.mrf.mxu0
      %877 = vdwg.mxu0
      %879 = vrot.lane.b32.xlu0 %v455, 4
      %v880 = vpop.permute.xlu0 %879
      %883 = vrot.lane.b32.xlu0 %v525, 8
      %v884 = vpop.permute.xlu0 %883
      %887 = vrot.lane.b32.xlu0 %v595, 12
      %v888 = vpop.permute.xlu0 %887
      %891 = vrot.lane.b32.xlu0 %v665, 16
      %v892 = vpop.permute.xlu0 %891
      %895 = vrot.lane.b32.xlu0 %v735, 20
      %v896 = vpop.permute.xlu0 %895
      %899 = vrot.lane.b32.xlu0 %v805, 24
      %v900 = vpop.permute.xlu0 %899
      %903 = vrot.lane.b32.xlu0 %v875, 28
      %v904 = vpop.permute.xlu0 %903
      %v906 = vsel %vm319, %v385, %v880
      %v907 = vsel %vm340, %v906, %v884
      %vm908 = vcmask 97280
      %v909 = vsel %vm908, %v907, %v888
      %vm910 = vcmask 130048
      %v911 = vsel %vm910, %v909, %v892
      %vm912 = vcmask 162816
      %v913 = vsel %vm912, %v911, %v896
      %vm914 = vcmask 195584
      %v915 = vsel %vm914, %v913, %v900
      %vm916 = vcmask 228352
      %v917 = vsel %vm916, %v915, %v904
      %v918 = vpack.c.bf16 %v917, %v917
      %v919 = vld [vmem:[%s3] sm:$0xf]
      %v920 = vld [vmem:[%s3 + $0x4] sm:$0xf]
      %v921 = vld [vmem:[%s3 + $0x8] sm:$0xf]
      %v922 = vld [vmem:[%s3 + $0xc] sm:$0xf]
      %v923 = vld [vmem:[%s4] sm:$0x1]
      %v925 = vperm.slane %v923, 0
      %v931 = vunpack.c.l.b16 %v919
      %v932 = vunpack.c.l.b16 %v920
      %v933 = vunpack.c.l.b16 %v921
      %v934 = vunpack.c.l.b16 %v922
      %v935 = vpack.c.b16 %v932, %v931
      %v936 = vpack.c.b16 %v934, %v933
      %v940 = vsel %vm296, %v918, 0
      %942 = vmatpush.bf16.msra.mxu0 0
      %943 = vmatpush.bf16.msra.mxu0 0
      %944 = vmatpush.bf16.msra.mxu0 0
      %945 = vmatpush.bf16.msra.mxu0 0
      %946 = vmatpush.bf16.msra.mxu0 0
      %947 = vmatpush.bf16.msra.mxu0 0
      %948 = vmatpush.bf16.msra.mxu0 %v936
      %949 = vmatpush.bf16.msra.mxu0 %v935
      %950 = vmatmul.bf16.gmra.mxu0 %v940
      %v951 = vpop.f32.mrf.mxu0
      %v952 = vadd.f32 %v925, %v951
      %v953 = vpop.f32.mrf.mxu0
      %954 = vdwg.mxu0
      %v955 = vunpack.c.l.bf16 %v275
      %v956 = vadd.f32 %v952, %v955
      %v957 = vld [vmem:[%s5] sm:$0x1]
      %v958 = vld [vmem:[%s6] sm:$0x1]
      %v959 = vsel %vm296, %v956, 0.0
      %960 = vadd.xlane.f32.xlu0 %v959
      %v961 = vpop.xlane.xlu0 %960
      %v962 = vrcp.pop 32.0
      %v963 = vmul.f32 32.0, %v962
      %v964 = vsub.f32 1.0, %v963
      %v965 = vmul.f32 %v962, %v964
      %v966 = vadd.f32 %v962, %v965
      %vm967 = vweird.f32 %v962
      %v968 = vsel %vm967, %v962, %v966
      %v969 = vmul.f32 %v961, %v968
      %v970 = vsub.f32 %v956, %v969
      %v971 = vmul.f32 %v970, %v970
      %v972 = vsel %vm296, %v971, 0.0
      %973 = vadd.xlane.f32.xlu0 %v972
      %v974 = vpop.xlane.xlu0 %973
      %v975 = vmul.f32 %v974, %v968
      %v976 = vadd.f32 %v975, 1e-05
      %v977 = vrsqrt.pop %v976
      %v978 = vmul.f32 %v977, %v976
      %v979 = vmul.f32 %v978, %v977
      %v980 = vmul.f32 0.5, %v979
      %v981 = vsub.f32 1.5, %v980
      %v982 = vmul.f32 %v977, %v981
      %vm983 = vweird.f32 %v976
      %vm984 = vweird.f32 %v977
      %vm985 = vmor %vm983, %vm984
      %v986 = vsel %vm985, %v977, %v982
      %v987 = vmul.f32 %v970, %v986
      %v989 = vperm.slane %v957, 0
      %v991 = vmul.f32 %v987, %v989
      %v993 = vperm.slane %v958, 0
      %v995 = vadd.f32 %v991, %v993
      %v996 = vpack.c.bf16 %v995, %v995
      %vm997 = vcmask 257024
      %998 = vst.msk [vmem:[%s273] sm:$0xf] %vm997, %v996
      %p999 = scmp.lt.s32.totalorder %s18, 1
      %s1000 = scalar_select %p999, %s18, 1
      %s1001 = smul.addr %s1000, 4
      %s1002 = scalar_lea.vmem %s7, %s1001
      // Predicated region
      $region49: #{transformer_v1_forward.17} parent=47 // pred_check
        %p1003 = pneg %p188
      $region50: #{transformer_v1_forward.17} parent=47 // pred_check_branch
        %1005 = sbr.rel (%p1003) target = $region52
      $region51: #{transformer_v1_forward.17} parent=47 // pred_region
        _
      $region52: #{transformer_v1_forward.17} parent=47 // pred_fallthru
        _
    $region48: #{transformer_v1_forward.17} parent=5 // pred_fallthru
      _
    %p1006 = scmp.le.s32.totalorder 2, %s13
    // Predicated region
    $region53: #{transformer_v1_forward.17} parent=5 // pred_check
      %p1007 = pneg %p1006
    $region54: #{transformer_v1_forward.17} parent=5 // pred_check_branch
      %1009 = sbr.rel (%p1007) target = $region56
    $region55: #{transformer_v1_forward.17} parent=5 // pred_region
      %s1010 = ssub.s32 %s13, 2
      // Predicated region
      $region57: #{transformer_v1_forward.17} parent=55 // pred_check
        %p1011 = pneg %p194
      $region58: #{transformer_v1_forward.17} parent=55 // pred_check_branch
        %1013 = sbr.rel (%p1011) target = $region60
      $region59: #{transformer_v1_forward.17} parent=55 // pred_region
        %p1014 = scmp.lt.s32.totalorder %s19, 1
        %s1015 = scalar_select %p1014, %s19, 1
        %s1016 = smul.addr %s1015, 4
        %s1017 = scalar_lea.vmem %s7, %s1016
      $region60: #{transformer_v1_forward.17} parent=55 // pred_fallthru
        _
    $region56: #{transformer_v1_forward.17} parent=5 // pred_fallthru
      _
  $region6: #{transformer_v1_forward.17} parent=0 // loop_footer
    %s17 = sadd.s32 1, %s13
  $region7: #{transformer_v1_forward.17} parent=0 // loop_footer_branch
    %12 = sbr.rel target = $region3
  $region8: #{transformer_v1_forward.17} parent=0 // loop_exit
    _

// kernel: transformer_v1_forward.13
$region0: #{transformer_v1_forward.13}
  #allocation0 [shape = 'u32[]', space=smem, size = 0x4, offset = 0x4, fixed_abs, tag = 'smem constant byte address 0x4 - core index']
  #allocation1 [shape = 'u32[72,128]{1,0:T(1,128)}', space=vmem, size = 0x9000, scoped, tag = 'internal scratch']
  #allocation2 [shape = 'f32[16,32]{1,0:T(8,128)}', space=vmem, size = 0x2000, scoped, tag = 'scratch operand']
  %s0 = inlined_call_operand.vmem [shape: bf16[16,32], index: 0, kind: input, shape index: {}]
  %s1 = inlined_call_operand.vmem [shape: bf16[32,2048], index: 1, kind: input, shape index: {}]
  %s2 = inlined_call_operand.vmem [shape: f32[1,2048], index: 2, kind: input, shape index: {}]
  %s3 = inlined_call_operand.vmem [shape: bf16[2048,32], index: 3, kind: input, shape index: {}]
  %s4 = inlined_call_operand.vmem [shape: f32[1,32], index: 4, kind: input, shape index: {}]
  %s5 = inlined_call_operand.vmem [shape: f32[1,32], index: 5, kind: input, shape index: {}]
  %s6 = inlined_call_operand.vmem [shape: f32[1,32], index: 6, kind: input, shape index: {}]
  %s7 = inlined_call_operand.vmem [shape: bf16[16,32], index: 7, kind: output, shape index: {}]
  %s8 = sld [smem:[#allocation0]]
  $region92: #{transformer_v1_forward.13} parent=0
    _
  %s10 = ssub.s32 1, %s8
  %s11 = scalar_select 0, %s10, %s8
  $region1: #{transformer_v1_forward.13} parent=0
    #allocation3 [shape = 'u8[65536]{0}', space=vmem, size = 0x10000, scoped, tag = 'input window, operand 1']
    loop: start=0, step=1, limit=6
    $region2: #{transformer_v1_forward.13} parent=1 // loop_pre_header
      _
    $region3: #{transformer_v1_forward.13} parent=1 // loop_header
      %s13 = sphi 0, %s17
      %p14 = scmp.ge.s32.totalorder %s13, 6
      %s20 = sphi 0, %s32
      %s21 = sphi 0, %s28
      %s22 = sphi 0, %s20
      %s23 = sphi 0, %s21
      %s24 = sphi 0, %s22
      %s25 = sphi 0, %s23
      %s35 = sphi 0, %s37
      %s38 = sphi 0, %s35
      %s39 = sphi 0, %s38
      %s55 = sphi 0, %s39
      %s61 = sphi 0, %s63
      %s64 = sphi 0, %s61
      %s65 = sphi 0, %s64
      %s81 = sphi 0, %s65
      %s87 = sphi 0, %s89
      %s90 = sphi 0, %s87
      %s91 = sphi 0, %s90
      %s107 = sphi 0, %s91
      %s113 = sphi 0, %s115
      %s116 = sphi 0, %s113
      %s117 = sphi 0, %s116
      %s133 = sphi 0, %s117
      %s137 = sphi 0, %s137
      %s139 = sphi 0, %s137
      %s140 = sphi 0, %s139
      %s154 = sphi 0, %s140
      %s158 = sphi 0, %s158
      %s160 = sphi 0, %s158
      %s161 = sphi 0, %s160
      %s175 = sphi 0, %s161
      %s179 = sphi 0, %s179
      %s181 = sphi 0, %s179
      %s182 = sphi 0, %s181
      %s196 = sphi 0, %s182
      %s202 = sphi 0, %s204
      %s205 = sphi 0, %s202
      %s206 = sphi 0, %s205
      %s222 = sphi 0, %s206
    $region4: #{transformer_v1_forward.13} parent=1 // loop_header_branch
      %16 = sbr.rel (%p14) target = $region8
    $region5: #{transformer_v1_forward.13} parent=1 // loop_body
      %s18 = ssub.s32 %s13, 1
      %s19 = ssub.s32 %s13, 2
      %s26 = sadd.s32 1, %s21
      %p27 = scmp.ge.s32.totalorder %s26, 4
      %s28 = scalar_select %p27, 0, %s26
      %s29 = sadd.s32 1, %s20
      %s30 = scalar_select %p27, %s29, %s20
      %p31 = scmp.ge.s32.totalorder %s30, 1
      %s32 = scalar_select %p31, 0, %s30
      %s33 = ssub.s32 %s20, %s32
      %p34 = scmp.eq.s32.totalorder %s33, 0
      %s36 = sadd.s32 %s35, 1
      %s37 = scalar_select %p34, %s35, %s36
      %p40 = pneg %p34
      %p41 = scmp.eq.s32.totalorder %s13, 3
      %p42 = por %p40, %p41
      %p43 = scmp.ne.s32.totalorder %s35, %s38
      %p44 = scmp.eq.s32.totalorder %s13, 0
      %p45 = por %p43, %p44
      %p46 = scmp.ne.s32.totalorder %s35, %s38
      %p47 = scmp.eq.s32.totalorder %s18, 3
      %p48 = por %p46, %p47
      %p49 = scmp.ne.s32.totalorder %s38, %s39
      %p50 = scmp.eq.s32.totalorder %s18, 0
      %p51 = por %p49, %p50
      %p52 = scmp.ne.s32.totalorder %s38, %s39
      %p53 = scmp.eq.s32.totalorder %s19, 3
      %p54 = por %p52, %p53
      %p56 = scmp.ne.s32.totalorder %s39, %s55
      %p57 = scmp.eq.s32.totalorder %s19, 0
      %p58 = por %p56, %p57
      %s59 = ssub.s32 %s21, %s28
      %p60 = scmp.eq.s32.totalorder %s59, 0
      %s62 = sadd.s32 %s61, 1
      %s63 = scalar_select %p60, %s61, %s62
      %p66 = pneg %p60
      %p67 = scmp.eq.s32.totalorder %s13, 3
      %p68 = por %p66, %p67
      %p69 = scmp.ne.s32.totalorder %s61, %s64
      %p70 = scmp.eq.s32.totalorder %s13, 0
      %p71 = por %p69, %p70
      %p72 = scmp.ne.s32.totalorder %s61, %s64
      %p73 = scmp.eq.s32.totalorder %s18, 3
      %p74 = por %p72, %p73
      %p75 = scmp.ne.s32.totalorder %s64, %s65
      %p76 = scmp.eq.s32.totalorder %s18, 0
      %p77 = por %p75, %p76
      %p78 = scmp.ne.s32.totalorder %s64, %s65
      %p79 = scmp.eq.s32.totalorder %s19, 3
      %p80 = por %p78, %p79
      %p82 = scmp.ne.s32.totalorder %s65, %s81
      %p83 = scmp.eq.s32.totalorder %s19, 0
      %p84 = por %p82, %p83
      %s85 = ssub.s32 %s21, %s28
      %p86 = scmp.eq.s32.totalorder %s85, 0
      %s88 = sadd.s32 %s87, 1
      %s89 = scalar_select %p86, %s87, %s88
      %p92 = pneg %p86
      %p93 = scmp.eq.s32.totalorder %s13, 3
      %p94 = por %p92, %p93
      %p95 = scmp.ne.s32.totalorder %s87, %s90
      %p96 = scmp.eq.s32.totalorder %s13, 0
      %p97 = por %p95, %p96
      %p98 = scmp.ne.s32.totalorder %s87, %s90
      %p99 = scmp.eq.s32.totalorder %s18, 3
      %p100 = por %p98, %p99
      %p101 = scmp.ne.s32.totalorder %s90, %s91
      %p102 = scmp.eq.s32.totalorder %s18, 0
      %p103 = por %p101, %p102
      %p104 = scmp.ne.s32.totalorder %s90, %s91
      %p105 = scmp.eq.s32.totalorder %s19, 3
      %p106 = por %p104, %p105
      %p108 = scmp.ne.s32.totalorder %s91, %s107
      %p109 = scmp.eq.s32.totalorder %s19, 0
      %p110 = por %p108, %p109
      %s111 = ssub.s32 %s21, %s28
      %p112 = scmp.eq.s32.totalorder %s111, 0
      %s114 = sadd.s32 %s113, 1
      %s115 = scalar_select %p112, %s113, %s114
      %p118 = pneg %p112
      %p119 = scmp.eq.s32.totalorder %s13, 3
      %p120 = por %p118, %p119
      %p121 = scmp.ne.s32.totalorder %s113, %s116
      %p122 = scmp.eq.s32.totalorder %s13, 0
      %p123 = por %p121, %p122
      %p124 = scmp.ne.s32.totalorder %s113, %s116
      %p125 = scmp.eq.s32.totalorder %s18, 3
      %p126 = por %p124, %p125
      %p127 = scmp.ne.s32.totalorder %s116, %s117
      %p128 = scmp.eq.s32.totalorder %s18, 0
      %p129 = por %p127, %p128
      %p130 = scmp.ne.s32.totalorder %s116, %s117
      %p131 = scmp.eq.s32.totalorder %s19, 3
      %p132 = por %p130, %p131
      %p134 = scmp.ne.s32.totalorder %s117, %s133
      %p135 = scmp.eq.s32.totalorder %s19, 0
      %p136 = por %p134, %p135
      %s138 = sadd.s32 %s137, 1
      %p141 = scmp.eq.s32.totalorder %s13, 3
      %p142 = scmp.ne.s32.totalorder %s137, %s139
      %p143 = scmp.eq.s32.totalorder %s13, 0
      %p144 = por %p142, %p143
      %p145 = scmp.ne.s32.totalorder %s137, %s139
      %p146 = scmp.eq.s32.totalorder %s18, 3
      %p147 = por %p145, %p146
      %p148 = scmp.ne.s32.totalorder %s139, %s140
      %p149 = scmp.eq.s32.totalorder %s18, 0
      %p150 = por %p148, %p149
      %p151 = scmp.ne.s32.totalorder %s139, %s140
      %p152 = scmp.eq.s32.totalorder %s19, 3
      %p153 = por %p151, %p152
      %p155 = scmp.ne.s32.totalorder %s140, %s154
      %p156 = scmp.eq.s32.totalorder %s19, 0
      %p157 = por %p155, %p156
      %s159 = sadd.s32 %s158, 1
      %p162 = scmp.eq.s32.totalorder %s13, 3
      %p163 = scmp.ne.s32.totalorder %s158, %s160
      %p164 = scmp.eq.s32.totalorder %s13, 0
      %p165 = por %p163, %p164
      %p166 = scmp.ne.s32.totalorder %s158, %s160
      %p167 = scmp.eq.s32.totalorder %s18, 3
      %p168 = por %p166, %p167
      %p169 = scmp.ne.s32.totalorder %s160, %s161
      %p170 = scmp.eq.s32.totalorder %s18, 0
      %p171 = por %p169, %p170
      %p172 = scmp.ne.s32.totalorder %s160, %s161
      %p173 = scmp.eq.s32.totalorder %s19, 3
      %p174 = por %p172, %p173
      %p176 = scmp.ne.s32.totalorder %s161, %s175
      %p177 = scmp.eq.s32.totalorder %s19, 0
      %p178 = por %p176, %p177
      %s180 = sadd.s32 %s179, 1
      %p183 = scmp.eq.s32.totalorder %s13, 3
      %p184 = scmp.ne.s32.totalorder %s179, %s181
      %p185 = scmp.eq.s32.totalorder %s13, 0
      %p186 = por %p184, %p185
      %p187 = scmp.ne.s32.totalorder %s179, %s181
      %p188 = scmp.eq.s32.totalorder %s18, 3
      %p189 = por %p187, %p188
      %p190 = scmp.ne.s32.totalorder %s181, %s182
      %p191 = scmp.eq.s32.totalorder %s18, 0
      %p192 = por %p190, %p191
      %p193 = scmp.ne.s32.totalorder %s181, %s182
      %p194 = scmp.eq.s32.totalorder %s19, 3
      %p195 = por %p193, %p194
      %p197 = scmp.ne.s32.totalorder %s182, %s196
      %p198 = scmp.eq.s32.totalorder %s19, 0
      %p199 = por %p197, %p198
      %s200 = ssub.s32 %s20, %s32
      %p201 = scmp.eq.s32.totalorder %s200, 0
      %s203 = sadd.s32 %s202, 1
      %s204 = scalar_select %p201, %s202, %s203
      %p207 = pneg %p201
      %p208 = scmp.eq.s32.totalorder %s13, 3
      %p209 = por %p207, %p208
      %p210 = scmp.ne.s32.totalorder %s202, %s205
      %p211 = scmp.eq.s32.totalorder %s13, 0
      %p212 = por %p210, %p211
      %p213 = scmp.ne.s32.totalorder %s202, %s205
      %p214 = scmp.eq.s32.totalorder %s18, 3
      %p215 = por %p213, %p214
      %p216 = scmp.ne.s32.totalorder %s205, %s206
      %p217 = scmp.eq.s32.totalorder %s18, 0
      %p218 = por %p216, %p217
      %p219 = scmp.ne.s32.totalorder %s205, %s206
      %p220 = scmp.eq.s32.totalorder %s19, 3
      %p221 = por %p219, %p220
      %p223 = scmp.ne.s32.totalorder %s206, %s222
      %p224 = scmp.eq.s32.totalorder %s19, 0
      %p225 = por %p223, %p224
      %p226 = scmp.le.s32.totalorder 1, %s13
      %p227 = scmp.lt.s32.totalorder %s13, 5
      %p228 = pnand %p226, %p227
      %p229 = pneg %p228
      // Predicated region
      $region9: #{transformer_v1_forward.13} parent=5 // pred_check
        _
      $region10: #{transformer_v1_forward.13} parent=5 // pred_check_branch
        %231 = sbr.rel (%p228) target = $region12
      $region11: #{transformer_v1_forward.13} parent=5 // pred_region
        %s232 = ssub.s32 %s13, 1
        // Predicated region
        $region13: #{transformer_v1_forward.13} parent=11 // pred_check
          %p233 = pneg %p51
        $region14: #{transformer_v1_forward.13} parent=11 // pred_check_branch
          %235 = sbr.rel (%p233) target = $region16
        $region15: #{transformer_v1_forward.13} parent=11 // pred_region
          %s236 = smul.u32 2, %s22
          %p237 = scmp.lt.s32.totalorder %s236, 1
          %s238 = scalar_select %p237, %s236, 1
          %s239 = smul.addr %s238, 4
          %s240 = scalar_lea.vmem %s0, %s239
          %s241 = smul.u32 2, %s22
        $region16: #{transformer_v1_forward.13} parent=11 // pred_fallthru
          _
        // Predicated region
        $region17: #{transformer_v1_forward.13} parent=11 // pred_check
          %p242 = pneg %p150
        $region18: #{transformer_v1_forward.13} parent=11 // pred_check_branch
          %244 = sbr.rel (%p242) target = $region20
        $region19: #{transformer_v1_forward.13} parent=11 // pred_region
          _
        $region20: #{transformer_v1_forward.13} parent=11 // pred_fallthru
          _
        // Predicated region
        $region21: #{transformer_v1_forward.13} parent=11 // pred_check
          %p245 = pneg %p171
        $region22: #{transformer_v1_forward.13} parent=11 // pred_check_branch
          %247 = sbr.rel (%p245) target = $region24
        $region23: #{transformer_v1_forward.13} parent=11 // pred_region
          _
        $region24: #{transformer_v1_forward.13} parent=11 // pred_fallthru
          _
        // Predicated region
        $region25: #{transformer_v1_forward.13} parent=11 // pred_check
          %p248 = pneg %p192
        $region26: #{transformer_v1_forward.13} parent=11 // pred_check_branch
          %250 = sbr.rel (%p248) target = $region28
        $region27: #{transformer_v1_forward.13} parent=11 // pred_region
          _
        $region28: #{transformer_v1_forward.13} parent=11 // pred_fallthru
          _
      $region12: #{transformer_v1_forward.13} parent=5 // pred_fallthru
        _
      %p251 = scmp.lt.s32.totalorder %s13, 4
      // Predicated region
      $region29: #{transformer_v1_forward.13} parent=5 // pred_check
        %p252 = pneg %p251
      $region30: #{transformer_v1_forward.13} parent=5 // pred_check_branch
        %254 = sbr.rel (%p252) target = $region32
      $region31: #{transformer_v1_forward.13} parent=5 // pred_region
        // Predicated region
        $region33: #{transformer_v1_forward.13} parent=31 // pred_check
          %p255 = pneg %p71
        $region34: #{transformer_v1_forward.13} parent=31 // pred_check_branch
          %257 = sbr.rel (%p255) target = $region36
        $region35: #{transformer_v1_forward.13} parent=31 // pred_region
          %s258 = sand.u32 %s61, 1
          %s259 = sand.u32 %s61, 1
          %s260 = smul.addr %s259, 64
          %s261 = scalar_lea.vmem [#allocation3], %s260
          %s262 = smul.u32 4, %s21
          %s263 = smul.addr %s262, 4
          %s264 = scalar_lea.vmem %s1, %s263
          // Predicated region
          $region37: #{transformer_v1_forward.13} parent=35 // pred_check
            _
          $region38: #{transformer_v1_forward.13} parent=35 // pred_check_branch
            %266 = sbr.rel (0) target = $region40
          $region39: #{transformer_v1_forward.13} parent=35 // pred_region
            // Predicated region
            $region41: #{transformer_v1_forward.13} parent=39 // pred_check
              _
            $region42: #{transformer_v1_forward.13} parent=39 // pred_check_branch
              %268 = sbr.rel (0) target = $region44
            $region43: #{transformer_v1_forward.13} parent=39 // pred_region
              loop: start=0, step=1, limit=1
              $region45: #{transformer_v1_forward.13} parent=43 // loop_pre_header
                _
              $region46: #{transformer_v1_forward.13} parent=43 // loop_header
                %s270 = sphi 0, %s274
                %p271 = scmp.ge.s32.totalorder %s270, 1
                %s275 = sphi %s264, %s264
                %s276 = sphi %s261, %s261
              $region47: #{transformer_v1_forward.13} parent=43 // loop_header_branch
                %273 = sbr.rel (%p271) target = $region51
              $region48: #{transformer_v1_forward.13} parent=43 // loop_body
                %v277 = vld [vmem:[%s275] sm:$0xff]
                %278 = vst [vmem:[%s276] sm:$0xff] %v277
                %v279 = vld [vmem:[%s275 + $0x8] sm:$0xff]
                %280 = vst [vmem:[%s276 + $0x8] sm:$0xff] %v279
                %v281 = vld [vmem:[%s275 + $0x40] sm:$0xff]
                %282 = vst [vmem:[%s276 + $0x10] sm:$0xff] %v281
                %v283 = vld [vmem:[%s275 + $0x48] sm:$0xff]
                %284 = vst [vmem:[%s276 + $0x18] sm:$0xff] %v283
                %v285 = vld [vmem:[%s275 + $0x80] sm:$0xff]
                %286 = vst [vmem:[%s276 + $0x20] sm:$0xff] %v285
                %v287 = vld [vmem:[%s275 + $0x88] sm:$0xff]
                %288 = vst [vmem:[%s276 + $0x28] sm:$0xff] %v287
                %v289 = vld [vmem:[%s275 + $0xc0] sm:$0xff]
                %290 = vst [vmem:[%s276 + $0x30] sm:$0xff] %v289
                %v291 = vld [vmem:[%s275 + $0xc8] sm:$0xff]
                %292 = vst [vmem:[%s276 + $0x38] sm:$0xff] %v291
              $region49: #{transformer_v1_forward.13} parent=43 // loop_footer
                %s274 = sadd.s32 1, %s270
              $region50: #{transformer_v1_forward.13} parent=43 // loop_footer_branch
                %269 = sbr.rel target = $region46
              $region51: #{transformer_v1_forward.13} parent=43 // loop_exit
                _
            $region44: #{transformer_v1_forward.13} parent=39 // pred_fallthru
              _
            // Predicated region
            $region52: #{transformer_v1_forward.13} parent=39 // pred_check
              _
            $region53: #{transformer_v1_forward.13} parent=39 // pred_check_branch
              %294 = sbr.rel target = $region55
            $region54: #{transformer_v1_forward.13} parent=39 // pred_region
              _
            $region55: #{transformer_v1_forward.13} parent=39 // pred_fallthru
              _
          $region40: #{transformer_v1_forward.13} parent=35 // pred_fallthru
            _
          %295 = vnop
        $region36: #{transformer_v1_forward.13} parent=31 // pred_fallthru
          _
        // Predicated region
        $region56: #{transformer_v1_forward.13} parent=31 // pred_check
          %p296 = pneg %p97
        $region57: #{transformer_v1_forward.13} parent=31 // pred_check_branch
          %298 = sbr.rel (%p296) target = $region59
        $region58: #{transformer_v1_forward.13} parent=31 // pred_region
          %s299 = smul.u32 4, %s21
          %p300 = scmp.lt.s32.totalorder %s299, 15
          %s301 = scalar_select %p300, %s299, 15
          %s302 = scalar_lea.vmem %s2, %s301
          %s303 = smul.u32 4, %s21
        $region59: #{transformer_v1_forward.13} parent=31 // pred_fallthru
          _
        // Predicated region
        $region60: #{transformer_v1_forward.13} parent=31 // pred_check
          %p304 = pneg %p123
        $region61: #{transformer_v1_forward.13} parent=31 // pred_check_branch
          %306 = sbr.rel (%p304) target = $region63
        $region62: #{transformer_v1_forward.13} parent=31 // pred_region
          %s307 = smul.u32 64, %s21
          %p308 = scmp.lt.s32.totalorder %s307, 255
          %s309 = scalar_select %p308, %s307, 255
          %s310 = smul.addr %s309, 4
          %s311 = scalar_lea.vmem %s3, %s310
          %s312 = smul.u32 64, %s21
        $region63: #{transformer_v1_forward.13} parent=31 // pred_fallthru
          _
      $region32: #{transformer_v1_forward.13} parent=5 // pred_fallthru
        _
      %p313 = scmp.le.s32.totalorder 1, %s13
      %p314 = scmp.lt.s32.totalorder %s13, 5
      %p315 = pnand %p313, %p314
      %p316 = pneg %p315
      // Predicated region
      $region64: #{transformer_v1_forward.13} parent=5 // pred_check
        _
      $region65: #{transformer_v1_forward.13} parent=5 // pred_check_branch
        %318 = sbr.rel (%p315) target = $region67
      $region66: #{transformer_v1_forward.13} parent=5 // pred_region
        %s319 = ssub.s32 %s13, 1
        %s320 = sand.u32 %s64, 1
        %s321 = sand.u32 %s64, 1
        %s322 = smul.addr %s321, 64
        %s323 = scalar_lea.vmem [#allocation3], %s322
        // Predicated region
        $region68: #{transformer_v1_forward.13} parent=66 // pred_check
          %p324 = pneg %p77
        $region69: #{transformer_v1_forward.13} parent=66 // pred_check_branch
          %326 = sbr.rel (%p324) target = $region71
        $region70: #{transformer_v1_forward.13} parent=66 // pred_region
          _
        $region71: #{transformer_v1_forward.13} parent=66 // pred_fallthru
          _
        %s327 = smul.u32 2, %s22
        %p328 = scmp.lt.s32.totalorder %s327, 1
        %s329 = scalar_select %p328, %s327, 1
        %s330 = smul.addr %s329, 4
        %s331 = scalar_lea.vmem %s0, %s330
        %p332 = pneg %p51
        %p333 = pneg %p48
        %s334 = sand.u32 %s64, 1
        %s335 = sand.u32 %s64, 1
        %s336 = smul.addr %s335, 64
        %s337 = scalar_lea.vmem [#allocation3], %s336
        %p338 = pneg %p77
        %p339 = pneg %p74
        %s340 = smul.u32 4, %s23
        %p341 = scmp.lt.s32.totalorder %s340, 15
        %s342 = scalar_select %p341, %s340, 15
        %s343 = scalar_lea.vmem %s2, %s342
        %p344 = pneg %p103
        %p345 = pneg %p100
        %s346 = smul.u32 64, %s23
        %p347 = scmp.lt.s32.totalorder %s346, 255
        %s348 = scalar_select %p347, %s346, 255
        %s349 = smul.addr %s348, 4
        %s350 = scalar_lea.vmem %s3, %s349
        %p351 = pneg %p129
        %p352 = pneg %p126
        %p353 = pneg %p150
        %p354 = pneg %p147
        %p355 = pneg %p171
        %p356 = pneg %p168
        %p357 = pneg %p192
        %p358 = pneg %p189
        %p359 = pneg %p218
        %p360 = pneg %p215
        %s361 = smul.u32 2, %s22
        %p362 = scmp.lt.s32.totalorder %s361, 1
        %s363 = scalar_select %p362, %s361, 1
        %s364 = smul.addr %s363, 4
        %s365 = scalar_lea.vmem %s7, %s364
        %s366 = smul.u32 2, %s22
        %p367 = scmp.lt.s32.totalorder %s366, 1
        %s368 = scalar_select %p367, %s366, 1
        %s369 = smul.addr %s368, 4
        %s370 = scalar_lea.vmem %s0, %s369
        %s371 = smul.u32 2, %s22
        %s372 = smul.u32 4, %s23
        %s373 = smul.u32 4, %s23
        %p374 = scmp.lt.s32.totalorder %s373, 15
        %s375 = scalar_select %p374, %s373, 15
        %s376 = scalar_lea.vmem %s2, %s375
        %s377 = smul.u32 4, %s23
        %s378 = smul.u32 64, %s23
        %p379 = scmp.lt.s32.totalorder %s378, 255
        %s380 = scalar_select %p379, %s378, 255
        %s381 = smul.addr %s380, 4
        %s382 = scalar_lea.vmem %s3, %s381
        %s383 = smul.u32 64, %s23
        %s384 = smul.u32 2, %s22
        %p385 = scmp.lt.s32.totalorder %s384, 1
        %s386 = scalar_select %p385, %s384, 1
        %s387 = smul.addr %s386, 4
        %s388 = scalar_lea.vmem %s7, %s387
        %s389 = smul.u32 2, %s22
        %p391 = scmp.eq.s32.totalorder %s23, 0
        // Predicated region
        $region72: #{transformer_v1_forward.13} parent=66 // pred_check
          %p392 = pneg %p391
        $region73: #{transformer_v1_forward.13} parent=66 // pred_check_branch
          %394 = sbr.rel (%p392) target = $region75
        $region74: #{transformer_v1_forward.13} parent=66 // pred_region
          %vm395 = vcmask 261120
          %396 = vst.msk [vmem:[#allocation2] sm:$0xff] %vm395, 0.0
          %397 = vst.msk [vmem:[#allocation2 + $0x8] sm:$0xff] %vm395, 0.0
        $region75: #{transformer_v1_forward.13} parent=66 // pred_fallthru
          _
        %v398 = vld [vmem:[%s370] sm:$0xf]
        %v399 = vld [vmem:[%s370 + $0x4] sm:$0xf]
        %v400 = vld [vmem:[%s323] sm:$0xff]
        %v401 = vld [vmem:[%s323 + $0x8] sm:$0xff]
        %v402 = vld [vmem:[%s323 + $0x10] sm:$0xff]
        %v403 = vld [vmem:[%s323 + $0x18] sm:$0xff]
        %v404 = vld [vmem:[%s323 + $0x20] sm:$0xff]
        %v405 = vld [vmem:[%s323 + $0x28] sm:$0xff]
        %v406 = vld [vmem:[%s323 + $0x30] sm:$0xff]
        %v407 = vld [vmem:[%s323 + $0x38] sm:$0xff]
        %v408 = vld [vmem:[%s376] sm:$0xf]
        %v410 = vperm.slane %v408, 0
        %v411 = vperm.slane %v408, 1
        %v412 = vperm.slane %v408, 2
        %v413 = vperm.slane %v408, 3
        %v420 = vunpack.c.l.b16 %v398
        %v421 = vunpack.c.l.b16 %v399
        %v422 = vpack.c.b16 %v421, %v420
        %v431 = vunpack.c.l.b16 %v400
        %v432 = vunpack.c.h.b16 %v400
        %v433 = vunpack.c.l.b16 %v401
        %v434 = vunpack.c.h.b16 %v401
        %v435 = vunpack.c.l.b16 %v402
        %v436 = vunpack.c.h.b16 %v402
        %v437 = vunpack.c.l.b16 %v403
        %v438 = vunpack.c.h.b16 %v403
        %v439 = vunpack.c.l.b16 %v404
        %v440 = vunpack.c.h.b16 %v404
        %v441 = vunpack.c.l.b16 %v405
        %v442 = vunpack.c.h.b16 %v405
        %v443 = vunpack.c.l.b16 %v406
        %v444 = vunpack.c.h.b16 %v406
        %v445 = vunpack.c.l.b16 %v407
        %v446 = vunpack.c.h.b16 %v407
        %v447 = vpack.c.b16 %v435, %v431
        %v448 = vpack.c.b16 %v436, %v432
        %v449 = vpack.c.b16 %v437, %v433
        %v450 = vpack.c.b16 %v438, %v434
        %v451 = vpack.c.b16 %v443, %v439
        %v452 = vpack.c.b16 %v444, %v440
        %v453 = vpack.c.b16 %v445, %v441
        %v454 = vpack.c.b16 %v446, %v442
        %vm463 = vcmask 261120
        %v465 = vsel %vm463, %v422, 0
        %467 = vmatpush.bf16.msra.mxu0 0
        %468 = vmatpush.bf16.msra.mxu0 0
        %469 = vmatpush.bf16.msra.mxu0 0
        %470 = vmatpush.bf16.msra.mxu0 0
        %471 = vmatpush.bf16.msra.mxu0 0
        %472 = vmatpush.bf16.msra.mxu0 0
        %473 = vmatpush.bf16.msra.mxu0 %v451
        %474 = vmatpush.bf16.msra.mxu0 %v447
        %475 = vmatmul.bf16.gmra.mxu0 %v465
        %v476 = vpop.f32.mrf.mxu0
        %v477 = vadd.f32 %v410, %v476
        %v478 = vpop.f32.mrf.mxu0
        %v479 = vadd.f32 %v410, %v478
        %480 = vdwg.mxu0
        %481 = vmatpush.bf16.msra.mxu0 0
        %482 = vmatpush.bf16.msra.mxu0 0
        %483 = vmatpush.bf16.msra.mxu0 0
        %484 = vmatpush.bf16.msra.mxu0 0
        %485 = vmatpush.bf16.msra.mxu0 0
        %486 = vmatpush.bf16.msra.mxu0 0
        %487 = vmatpush.bf16.msra.mxu0 %v452
        %488 = vmatpush.bf16.msra.mxu0 %v448
        %489 = vmatmul.bf16.gmra.mxu0 %v465
        %v490 = vpop.f32.mrf.mxu0
        %v491 = vadd.f32 %v411, %v490
        %v492 = vpop.f32.mrf.mxu0
        %v493 = vadd.f32 %v411, %v492
        %494 = vdwg.mxu0
        %495 = vmatpush.bf16.msra.mxu0 0
        %496 = vmatpush.bf16.msra.mxu0 0
        %497 = vmatpush.bf16.msra.mxu0 0
        %498 = vmatpush.bf16.msra.mxu0 0
        %499 = vmatpush.bf16.msra.mxu0 0
        %500 = vmatpush.bf16.msra.mxu0 0
        %501 = vmatpush.bf16.msra.mxu0 %v453
        %502 = vmatpush.bf16.msra.mxu0 %v449
        %503 = vmatmul.bf16.gmra.mxu0 %v465
        %v504 = vpop.f32.mrf.mxu0
        %v505 = vadd.f32 %v412, %v504
        %v506 = vpop.f32.mrf.mxu0
        %v507 = vadd.f32 %v412, %v506
        %508 = vdwg.mxu0
        %509 = vmatpush.bf16.msra.mxu0 0
        %510 = vmatpush.bf16.msra.mxu0 0
        %511 = vmatpush.bf16.msra.mxu0 0
        %512 = vmatpush.bf16.msra.mxu0 0
        %513 = vmatpush.bf16.msra.mxu0 0
        %514 = vmatpush.bf16.msra.mxu0 0
        %515 = vmatpush.bf16.msra.mxu0 %v454
        %516 = vmatpush.bf16.msra.mxu0 %v450
        %517 = vmatmul.bf16.gmra.mxu0 %v465
        %v518 = vpop.f32.mrf.mxu0
        %v519 = vadd.f32 %v413, %v518
        %v520 = vpop.f32.mrf.mxu0
        %v521 = vadd.f32 %v413, %v520
        %522 = vdwg.mxu0
        %v523 = vmax.f32 %v477, 0.0
        %v524 = vmax.f32 %v491, 0.0
        %v525 = vmax.f32 %v505, 0.0
        %v526 = vmax.f32 %v519, 0.0
        %v527 = vmax.f32 %v479, 0.0
        %v528 = vmax.f32 %v493, 0.0
        %v529 = vmax.f32 %v507, 0.0
        %v530 = vmax.f32 %v521, 0.0
        %v531 = vpack.c.bf16 %v527, %v523
        %v532 = vpack.c.bf16 %v528, %v524
        %v533 = vpack.c.bf16 %v529, %v525
        %v534 = vpack.c.bf16 %v530, %v526
        %v535 = vld [vmem:[#allocation2] sm:$0xff]
        %v536 = vld [vmem:[#allocation2 + $0x8] sm:$0xff]
        %v537 = vld [vmem:[%s382] sm:$0xf]
        %v538 = vld [vmem:[%s382 + $0x4] sm:$0xf]
        %v539 = vld [vmem:[%s382 + $0x8] sm:$0xf]
        %v540 = vld [vmem:[%s382 + $0xc] sm:$0xf]
        %v541 = vld [vmem:[%s382 + $0x10] sm:$0xf]
        %v542 = vld [vmem:[%s382 + $0x14] sm:$0xf]
        %v543 = vld [vmem:[%s382 + $0x18] sm:$0xf]
        %v544 = vld [vmem:[%s382 + $0x1c] sm:$0xf]
        %v545 = vld [vmem:[%s382 + $0x20] sm:$0xf]
        %v546 = vld [vmem:[%s382 + $0x24] sm:$0xf]
        %v547 = vld [vmem:[%s382 + $0x28] sm:$0xf]
        %v548 = vld [vmem:[%s382 + $0x2c] sm:$0xf]
        %v549 = vld [vmem:[%s382 + $0x30] sm:$0xf]
        %v550 = vld [vmem:[%s382 + $0x34] sm:$0xf]
        %v551 = vld [vmem:[%s382 + $0x38] sm:$0xf]
        %v552 = vld [vmem:[%s382 + $0x3c] sm:$0xf]
        %v553 = vld [vmem:[%s382 + $0x40] sm:$0xf]
        %v554 = vld [vmem:[%s382 + $0x44] sm:$0xf]
        %v555 = vld [vmem:[%s382 + $0x48] sm:$0xf]
        %v556 = vld [vmem:[%s382 + $0x4c] sm:$0xf]
        %v557 = vld [vmem:[%s382 + $0x50] sm:$0xf]
        %v558 = vld [vmem:[%s382 + $0x54] sm:$0xf]
        %v559 = vld [vmem:[%s382 + $0x58] sm:$0xf]
        %v560 = vld [vmem:[%s382 + $0x5c] sm:$0xf]
        %v561 = vld [vmem:[%s382 + $0x60] sm:$0xf]
        %v562 = vld [vmem:[%s382 + $0x64] sm:$0xf]
        %v563 = vld [vmem:[%s382 + $0x68] sm:$0xf]
        %v564 = vld [vmem:[%s382 + $0x6c] sm:$0xf]
        %v565 = vld [vmem:[%s382 + $0x70] sm:$0xf]
        %v566 = vld [vmem:[%s382 + $0x74] sm:$0xf]
        %v567 = vld [vmem:[%s382 + $0x78] sm:$0xf]
        %v568 = vld [vmem:[%s382 + $0x7c] sm:$0xf]
        %v569 = vld [vmem:[%s382 + $0x80] sm:$0xf]
        %v570 = vld [vmem:[%s382 + $0x84] sm:$0xf]
        %v571 = vld [vmem:[%s382 + $0x88] sm:$0xf]
        %v572 = vld [vmem:[%s382 + $0x8c] sm:$0xf]
        %v573 = vld [vmem:[%s382 + $0x90] sm:$0xf]
        %v574 = vld [vmem:[%s382 + $0x94] sm:$0xf]
        %v575 = vld [vmem:[%s382 + $0x98] sm:$0xf]
        %v576 = vld [vmem:[%s382 + $0x9c] sm:$0xf]
        %v577 = vld [vmem:[%s382 + $0xa0] sm:$0xf]
        %v578 = vld [vmem:[%s382 + $0xa4] sm:$0xf]
        %v579 = vld [vmem:[%s382 + $0xa8] sm:$0xf]
        %v580 = vld [vmem:[%s382 + $0xac] sm:$0xf]
        %v581 = vld [vmem:[%s382 + $0xb0] sm:$0xf]
        %v582 = vld [vmem:[%s382 + $0xb4] sm:$0xf]
        %v583 = vld [vmem:[%s382 + $0xb8] sm:$0xf]
        %v584 = vld [vmem:[%s382 + $0xbc] sm:$0xf]
        %v585 = vld [vmem:[%s382 + $0xc0] sm:$0xf]
        %v586 = vld [vmem:[%s382 + $0xc4] sm:$0xf]
        %v587 = vld [vmem:[%s382 + $0xc8] sm:$0xf]
        %v588 = vld [vmem:[%s382 + $0xcc] sm:$0xf]
        %v589 = vld [vmem:[%s382 + $0xd0] sm:$0xf]
        %v590 = vld [vmem:[%s382 + $0xd4] sm:$0xf]
        %v591 = vld [vmem:[%s382 + $0xd8] sm:$0xf]
        %v592 = vld [vmem:[%s382 + $0xdc] sm:$0xf]
        %v593 = vld [vmem:[%s382 + $0xe0] sm:$0xf]
        %v594 = vld [vmem:[%s382 + $0xe4] sm:$0xf]
        %v595 = vld [vmem:[%s382 + $0xe8] sm:$0xf]
        %v596 = vld [vmem:[%s382 + $0xec] sm:$0xf]
        %v597 = vld [vmem:[%s382 + $0xf0] sm:$0xf]
        %v598 = vld [vmem:[%s382 + $0xf4] sm:$0xf]
        %v599 = vld [vmem:[%s382 + $0xf8] sm:$0xf]
        %v600 = vld [vmem:[%s382 + $0xfc] sm:$0xf]
        %v665 = vunpack.c.l.b16 %v537
        %v666 = vunpack.c.l.b16 %v538
        %v667 = vunpack.c.l.b16 %v539
        %v668 = vunpack.c.l.b16 %v540
        %v669 = vunpack.c.l.b16 %v541
        %v670 = vunpack.c.l.b16 %v542
        %v671 = vunpack.c.l.b16 %v543
        %v672 = vunpack.c.l.b16 %v544
        %v673 = vunpack.c.l.b16 %v545
        %v674 = vunpack.c.l.b16 %v546
        %v675 = vunpack.c.l.b16 %v547
        %v676 = vunpack.c.l.b16 %v548
        %v677 = vunpack.c.l.b16 %v549
        %v678 = vunpack.c.l.b16 %v550
        %v679 = vunpack.c.l.b16 %v551
        %v680 = vunpack.c.l.b16 %v552
        %v681 = vunpack.c.l.b16 %v553
        %v682 = vunpack.c.l.b16 %v554
        %v683 = vunpack.c.l.b16 %v555
        %v684 = vunpack.c.l.b16 %v556
        %v685 = vunpack.c.l.b16 %v557
        %v686 = vunpack.c.l.b16 %v558
        %v687 = vunpack.c.l.b16 %v559
        %v688 = vunpack.c.l.b16 %v560
        %v689 = vunpack.c.l.b16 %v561
        %v690 = vunpack.c.l.b16 %v562
        %v691 = vunpack.c.l.b16 %v563
        %v692 = vunpack.c.l.b16 %v564
        %v693 = vunpack.c.l.b16 %v565
        %v694 = vunpack.c.l.b16 %v566
        %v695 = vunpack.c.l.b16 %v567
        %v696 = vunpack.c.l.b16 %v568
        %v697 = vunpack.c.l.b16 %v569
        %v698 = vunpack.c.l.b16 %v570
        %v699 = vunpack.c.l.b16 %v571
        %v700 = vunpack.c.l.b16 %v572
        %v701 = vunpack.c.l.b16 %v573
        %v702 = vunpack.c.l.b16 %v574
        %v703 = vunpack.c.l.b16 %v575
        %v704 = vunpack.c.l.b16 %v576
        %v705 = vunpack.c.l.b16 %v577
        %v706 = vunpack.c.l.b16 %v578
        %v707 = vunpack.c.l.b16 %v579
        %v708 = vunpack.c.l.b16 %v580
        %v709 = vunpack.c.l.b16 %v581
        %v710 = vunpack.c.l.b16 %v582
        %v711 = vunpack.c.l.b16 %v583
        %v712 = vunpack.c.l.b16 %v584
        %v713 = vunpack.c.l.b16 %v585
        %v714 = vunpack.c.l.b16 %v586
        %v715 = vunpack.c.l.b16 %v587
        %v716 = vunpack.c.l.b16 %v588
        %v717 = vunpack.c.l.b16 %v589
        %v718 = vunpack.c.l.b16 %v590
        %v719 = vunpack.c.l.b16 %v591
        %v720 = vunpack.c.l.b16 %v592
        %v721 = vunpack.c.l.b16 %v593
        %v722 = vunpack.c.l.b16 %v594
        %v723 = vunpack.c.l.b16 %v595
        %v724 = vunpack.c.l.b16 %v596
        %v725 = vunpack.c.l.b16 %v597
        %v726 = vunpack.c.l.b16 %v598
        %v727 = vunpack.c.l.b16 %v599
        %v728 = vunpack.c.l.b16 %v600
        %v729 = vpack.c.b16 %v666, %v665
        %v730 = vpack.c.b16 %v668, %v667
        %v731 = vpack.c.b16 %v670, %v669
        %v732 = vpack.c.b16 %v672, %v671
        %v733 = vpack.c.b16 %v674, %v673
        %v734 = vpack.c.b16 %v676, %v675
        %v735 = vpack.c.b16 %v678, %v677
        %v736 = vpack.c.b16 %v680, %v679
        %v737 = vpack.c.b16 %v682, %v681
        %v738 = vpack.c.b16 %v684, %v683
        %v739 = vpack.c.b16 %v686, %v685
        %v740 = vpack.c.b16 %v688, %v687
        %v741 = vpack.c.b16 %v690, %v689
        %v742 = vpack.c.b16 %v692, %v691
        %v743 = vpack.c.b16 %v694, %v693
        %v744 = vpack.c.b16 %v696, %v695
        %v745 = vpack.c.b16 %v698, %v697
        %v746 = vpack.c.b16 %v700, %v699
        %v747 = vpack.c.b16 %v702, %v701
        %v748 = vpack.c.b16 %v704, %v703
        %v749 = vpack.c.b16 %v706, %v705
        %v750 = vpack.c.b16 %v708, %v707
        %v751 = vpack.c.b16 %v710, %v709
        %v752 = vpack.c.b16 %v712, %v711
        %v753 = vpack.c.b16 %v714, %v713
        %v754 = vpack.c.b16 %v716, %v715
        %v755 = vpack.c.b16 %v718, %v717
        %v756 = vpack.c.b16 %v720, %v719
        %v757 = vpack.c.b16 %v722, %v721
        %v758 = vpack.c.b16 %v724, %v723
        %v759 = vpack.c.b16 %v726, %v725
        %v760 = vpack.c.b16 %v728, %v727
        %793 = vmatpush.bf16.msra.mxu0 %v736
        %794 = vmatpush.bf16.msra.mxu0 %v735
        %795 = vmatpush.bf16.msra.mxu0 %v734
        %796 = vmatpush.bf16.msra.mxu0 %v733
        %797 = vmatpush.bf16.msra.mxu0 %v732
        %798 = vmatpush.bf16.msra.mxu0 %v731
        %799 = vmatpush.bf16.msra.mxu0 %v730
        %800 = vmatpush.bf16.msra.mxu0 %v729
        %801 = vmatmul.bf16.gmra.mxu0 %v531
        %v802 = vpop.f32.mrf.mxu0
        %v803 = vadd.f32 0.0, %v802
        %v804 = vpop.f32.mrf.mxu0
        %v805 = vadd.f32 0.0, %v804
        %806 = vdwg.mxu0
        %807 = vmatpush.bf16.msra.mxu0 %v744
        %808 = vmatpush.bf16.msra.mxu0 %v743
        %809 = vmatpush.bf16.msra.mxu0 %v742
        %810 = vmatpush.bf16.msra.mxu0 %v741
        %811 = vmatpush.bf16.msra.mxu0 %v740
        %812 = vmatpush.bf16.msra.mxu0 %v739
        %813 = vmatpush.bf16.msra.mxu0 %v738
        %814 = vmatpush.bf16.msra.mxu0 %v737
        %815 = vmatmul.bf16.gmra.mxu0 %v532
        %v816 = vpop.f32.mrf.mxu0
        %v817 = vadd.f32 %v803, %v816
        %v818 = vpop.f32.mrf.mxu0
        %v819 = vadd.f32 %v805, %v818
        %820 = vdwg.mxu0
        %821 = vmatpush.bf16.msra.mxu0 %v752
        %822 = vmatpush.bf16.msra.mxu0 %v751
        %823 = vmatpush.bf16.msra.mxu0 %v750
        %824 = vmatpush.bf16.msra.mxu0 %v749
        %825 = vmatpush.bf16.msra.mxu0 %v748
        %826 = vmatpush.bf16.msra.mxu0 %v747
        %827 = vmatpush.bf16.msra.mxu0 %v746
        %828 = vmatpush.bf16.msra.mxu0 %v745
        %829 = vmatmul.bf16.gmra.mxu0 %v533
        %v830 = vpop.f32.mrf.mxu0
        %v831 = vadd.f32 %v817, %v830
        %v832 = vpop.f32.mrf.mxu0
        %v833 = vadd.f32 %v819, %v832
        %834 = vdwg.mxu0
        %835 = vmatpush.bf16.msra.mxu0 %v760
        %836 = vmatpush.bf16.msra.mxu0 %v759
        %837 = vmatpush.bf16.msra.mxu0 %v758
        %838 = vmatpush.bf16.msra.mxu0 %v757
        %839 = vmatpush.bf16.msra.mxu0 %v756
        %840 = vmatpush.bf16.msra.mxu0 %v755
        %841 = vmatpush.bf16.msra.mxu0 %v754
        %842 = vmatpush.bf16.msra.mxu0 %v753
        %843 = vmatmul.bf16.gmra.mxu0 %v534
        %v844 = vpop.f32.mrf.mxu0
        %v845 = vadd.f32 %v831, %v844
        %v846 = vpop.f32.mrf.mxu0
        %v847 = vadd.f32 %v833, %v846
        %848 = vdwg.mxu0
        %v849 = vadd.f32 %v535, %v845
        %v850 = vadd.f32 %v536, %v847
        %851 = vst.msk [vmem:[#allocation2] sm:$0xff] %vm463, %v849
        %852 = vst.msk [vmem:[#allocation2 + $0x8] sm:$0xff] %vm463, %v850
        %p853 = scmp.eq.s32.totalorder %s23, 3
        // Predicated region
        $region76: #{transformer_v1_forward.13} parent=66 // pred_check
          %p854 = pneg %p853
        $region77: #{transformer_v1_forward.13} parent=66 // pred_check_branch
          %856 = sbr.rel (%p854) target = $region79
        $region78: #{transformer_v1_forward.13} parent=66 // pred_region
          %v857 = vld [vmem:[#allocation2] sm:$0xff]
          %v858 = vld [vmem:[#allocation2 + $0x8] sm:$0xff]
          %v859 = vld [vmem:[%s4] sm:$0x1]
          %v861 = vperm.slane %v859, 0
          %v863 = vadd.f32 %v857, %v861
          %v864 = vadd.f32 %v858, %v861
          %v865 = vunpack.c.l.bf16 %v398
          %v866 = vunpack.c.l.bf16 %v399
          %v867 = vadd.f32 %v863, %v865
          %v868 = vadd.f32 %v864, %v866
          %v869 = vld [vmem:[%s5] sm:$0x1]
          %v870 = vld [vmem:[%s6] sm:$0x1]
          %v871 = vsel %vm463, %v867, 0.0
          %872 = vadd.xlane.f32.xlu0 %v871
          %v873 = vpop.xlane.xlu0 %872
          %v874 = vsel %vm463, %v868, 0.0
          %875 = vadd.xlane.f32.xlu0 %v874
          %v876 = vpop.xlane.xlu0 %875
          %v877 = vrcp.pop 32.0
          %v878 = vmul.f32 32.0, %v877
          %v879 = vsub.f32 1.0, %v878
          %v880 = vmul.f32 %v877, %v879
          %v881 = vadd.f32 %v877, %v880
          %vm882 = vweird.f32 %v877
          %v883 = vsel %vm882, %v877, %v881
          %v884 = vmul.f32 %v873, %v883
          %v885 = vmul.f32 %v876, %v883
          %v886 = vsub.f32 %v867, %v884
          %v887 = vsub.f32 %v868, %v885
          %v888 = vmul.f32 %v886, %v886
          %v889 = vmul.f32 %v887, %v887
          %v890 = vsel %vm463, %v888, 0.0
          %891 = vadd.xlane.f32.xlu0 %v890
          %v892 = vpop.xlane.xlu0 %891
          %v893 = vsel %vm463, %v889, 0.0
          %894 = vadd.xlane.f32.xlu0 %v893
          %v895 = vpop.xlane.xlu0 %894
          %v896 = vmul.f32 %v892, %v883
          %v897 = vmul.f32 %v895, %v883
          %v898 = vadd.f32 %v896, 1e-05
          %v899 = vadd.f32 %v897, 1e-05
          %v900 = vrsqrt.pop %v898
          %v901 = vmul.f32 %v900, %v898
          %v902 = vmul.f32 %v901, %v900
          %v903 = vmul.f32 0.5, %v902
          %v904 = vsub.f32 1.5, %v903
          %v905 = vmul.f32 %v900, %v904
          %vm906 = vweird.f32 %v898
          %vm907 = vweird.f32 %v900
          %vm908 = vmor %vm906, %vm907
          %v909 = vsel %vm908, %v900, %v905
          %v910 = vrsqrt.pop %v899
          %v911 = vmul.f32 %v910, %v899
          %v912 = vmul.f32 %v911, %v910
          %v913 = vmul.f32 0.5, %v912
          %v914 = vsub.f32 1.5, %v913
          %v915 = vmul.f32 %v910, %v914
          %vm916 = vweird.f32 %v899
          %vm917 = vweird.f32 %v910
          %vm918 = vmor %vm916, %vm917
          %v919 = vsel %vm918, %v910, %v915
          %v920 = vmul.f32 %v886, %v909
          %v921 = vmul.f32 %v887, %v919
          %v923 = vperm.slane %v869, 0
          %v925 = vmul.f32 %v920, %v923
          %v926 = vmul.f32 %v921, %v923
          %v928 = vperm.slane %v870, 0
          %v930 = vadd.f32 %v925, %v928
          %v931 = vadd.f32 %v926, %v928
          %v932 = vpack.c.bf16 %v930, %v930
          %v933 = vpack.c.bf16 %v931, %v931
          %vm934 = vcmask 257024
          %935 = vst.msk [vmem:[%s388] sm:$0xf] %vm934, %v932
          %936 = vst.msk [vmem:[%s388 + $0x4] sm:$0xf] %vm934, %v933
        $region79: #{transformer_v1_forward.13} parent=66 // pred_fallthru
          _
        %s937 = smul.u32 2, %s22
        %p938 = scmp.lt.s32.totalorder %s937, 1
        %s939 = scalar_select %p938, %s937, 1
        %s940 = smul.addr %s939, 4
        %s941 = scalar_lea.vmem %s7, %s940
        // Predicated region
        $region80: #{transformer_v1_forward.13} parent=66 // pred_check
          %p942 = pneg %p215
        $region81: #{transformer_v1_forward.13} parent=66 // pred_check_branch
          %944 = sbr.rel (%p942) target = $region83
        $region82: #{transformer_v1_forward.13} parent=66 // pred_region
          %s945 = smul.u32 2, %s22
        $region83: #{transformer_v1_forward.13} parent=66 // pred_fallthru
          _
        // Predicated region
        $region84: #{transformer_v1_forward.13} parent=66 // pred_check
          %p946 = pneg %p215
        $region85: #{transformer_v1_forward.13} parent=66 // pred_check_branch
          %948 = sbr.rel (%p946) target = $region87
        $region86: #{transformer_v1_forward.13} parent=66 // pred_region
          %s949 = smul.u32 2, %s22
          %p950 = scmp.lt.s32.totalorder %s949, 1
          %s951 = scalar_select %p950, %s949, 1
          %s952 = smul.addr %s951, 4
          %s953 = scalar_lea.vmem %s7, %s952
        $region87: #{transformer_v1_forward.13} parent=66 // pred_fallthru
          _
      $region67: #{transformer_v1_forward.13} parent=5 // pred_fallthru
        _
      %p954 = scmp.le.s32.totalorder 2, %s13
      // Predicated region
      $region88: #{transformer_v1_forward.13} parent=5 // pred_check
        %p955 = pneg %p954
      $region89: #{transformer_v1_forward.13} parent=5 // pred_check_branch
        %957 = sbr.rel (%p955) target = $region91
      $region90: #{transformer_v1_forward.13} parent=5 // pred_region
        %s958 = ssub.s32 %s13, 2
      $region91: #{transformer_v1_forward.13} parent=5 // pred_fallthru
        _
    $region6: #{transformer_v1_forward.13} parent=1 // loop_footer
      %s17 = sadd.s32 1, %s13
    $region7: #{transformer_v1_forward.13} parent=1 // loop_footer_branch
      %12 = sbr.rel target = $region3
    $region8: #{transformer_v1_forward.13} parent=1 // loop_exit
      _

// kernel: transformer_v1_forward.16
$region0: #{transformer_v1_forward.16}
  #allocation0 [shape = 'u32[]', space=smem, size = 0x4, offset = 0x4, fixed_abs, tag = 'smem constant byte address 0x4 - core index']
  #allocation1 [shape = 'u32[72,128]{1,0:T(1,128)}', space=vmem, size = 0x9000, scoped, tag = 'internal scratch']
  %s0 = inlined_call_operand.vmem [shape: bf16[16,32], index: 0, kind: input, shape index: {}]
  %s1 = inlined_call_operand.vmem [shape: f32[1,32], index: 1, kind: input, shape index: {}]
  %s2 = inlined_call_operand.vmem [shape: f32[1,32], index: 2, kind: input, shape index: {}]
  %s3 = inlined_call_operand.vmem [shape: bf16[16,32], index: 3, kind: output, shape index: {}]
  %s4 = sld [smem:[#allocation0]]
  $region22: #{transformer_v1_forward.16} parent=0
    _
  %s6 = ssub.s32 1, %s4
  %s7 = scalar_select 0, %s6, %s4
  // Predicated region
  $region2: #{transformer_v1_forward.16} parent=0 // pred_check
    _
  $region3: #{transformer_v1_forward.16} parent=0 // pred_check_branch
    %9 = sbr.rel (0) target = $region5
  $region4: #{transformer_v1_forward.16} parent=0 // pred_region
    _
  $region5: #{transformer_v1_forward.16} parent=0 // pred_fallthru
    _
  // Predicated region
  $region6: #{transformer_v1_forward.16} parent=0 // pred_check
    _
  $region7: #{transformer_v1_forward.16} parent=0 // pred_check_branch
    %11 = sbr.rel (0) target = $region9
  $region8: #{transformer_v1_forward.16} parent=0 // pred_region
    _
  $region9: #{transformer_v1_forward.16} parent=0 // pred_fallthru
    _
  // Predicated region
  $region10: #{transformer_v1_forward.16} parent=0 // pred_check
    _
  $region11: #{transformer_v1_forward.16} parent=0 // pred_check_branch
    %13 = sbr.rel (0) target = $region13
  $region12: #{transformer_v1_forward.16} parent=0 // pred_region
    _
  $region13: #{transformer_v1_forward.16} parent=0 // pred_fallthru
    _
  %v14 = vld [vmem:[%s0] sm:$0xf]
  %v15 = vld [vmem:[%s0 + $0x4] sm:$0xf]
  %v16 = vunpack.c.l.bf16 %v14
  %v17 = vunpack.c.l.bf16 %v15
  %v18 = vld [vmem:[%s1] sm:$0x1]
  %v19 = vld [vmem:[%s2] sm:$0x1]
  %vm20 = vcmask 261120
  %v21 = vsel %vm20, %v16, 0.0
  %22 = vadd.xlane.f32.xlu0 %v21
  %v23 = vpop.xlane.xlu0 %22
  %v24 = vsel %vm20, %v17, 0.0
  %25 = vadd.xlane.f32.xlu0 %v24
  %v26 = vpop.xlane.xlu0 %25
  %v27 = vrcp.pop 32.0
  %v28 = vmul.f32 32.0, %v27
  %v29 = vsub.f32 1.0, %v28
  %v30 = vmul.f32 %v27, %v29
  %v31 = vadd.f32 %v27, %v30
  %vm32 = vweird.f32 %v27
  %v33 = vsel %vm32, %v27, %v31
  %v34 = vmul.f32 %v23, %v33
  %v35 = vmul.f32 %v26, %v33
  %v36 = vsub.f32 %v16, %v34
  %v37 = vsub.f32 %v17, %v35
  %v38 = vmul.f32 %v36, %v36
  %v39 = vmul.f32 %v37, %v37
  %v40 = vsel %vm20, %v38, 0.0
  %41 = vadd.xlane.f32.xlu0 %v40
  %v42 = vpop.xlane.xlu0 %41
  %v43 = vsel %vm20, %v39, 0.0
  %44 = vadd.xlane.f32.xlu0 %v43
  %v45 = vpop.xlane.xlu0 %44
  %v46 = vmul.f32 %v42, %v33
  %v47 = vmul.f32 %v45, %v33
  %v48 = vadd.f32 %v46, 1e-05
  %v49 = vadd.f32 %v47, 1e-05
  %v50 = vrsqrt.pop %v48
  %v51 = vmul.f32 %v50, %v48
  %v52 = vmul.f32 %v51, %v50
  %v53 = vmul.f32 0.5, %v52
  %v54 = vsub.f32 1.5, %v53
  %v55 = vmul.f32 %v50, %v54
  %vm56 = vweird.f32 %v48
  %vm57 = vweird.f32 %v50
  %vm58 = vmor %vm56, %vm57
  %v59 = vsel %vm58, %v50, %v55
  %v60 = vrsqrt.pop %v49
  %v61 = vmul.f32 %v60, %v49
  %v62 = vmul.f32 %v61, %v60
  %v63 = vmul.f32 0.5, %v62
  %v64 = vsub.f32 1.5, %v63
  %v65 = vmul.f32 %v60, %v64
  %vm66 = vweird.f32 %v49
  %vm67 = vweird.f32 %v60
  %vm68 = vmor %vm66, %vm67
  %v69 = vsel %vm68, %v60, %v65
  %v70 = vmul.f32 %v36, %v59
  %v71 = vmul.f32 %v37, %v69
  %v73 = vperm.slane %v18, 0
  %v75 = vmul.f32 %v70, %v73
  %v76 = vmul.f32 %v71, %v73
  %v78 = vperm.slane %v19, 0
  %v80 = vadd.f32 %v75, %v78
  %v81 = vadd.f32 %v76, %v78
  %v82 = vpack.c.bf16 %v80, %v80
  %v83 = vpack.c.bf16 %v81, %v81
  %vm84 = vcmask 257024
  %85 = vst.msk [vmem:[%s3] sm:$0xf] %vm84, %v82
  %86 = vst.msk [vmem:[%s3 + $0x4] sm:$0xf] %vm84, %v83
  // Predicated region
  $region14: #{transformer_v1_forward.16} parent=0 // pred_check
    _
  $region15: #{transformer_v1_forward.16} parent=0 // pred_check_branch
    %88 = sbr.rel (0) target = $region17
  $region16: #{transformer_v1_forward.16} parent=0 // pred_region
    _
  $region17: #{transformer_v1_forward.16} parent=0 // pred_fallthru
    _
  // Predicated region
  $region18: #{transformer_v1_forward.16} parent=0 // pred_check
    _
  $region19: #{transformer_v1_forward.16} parent=0 // pred_check_branch
    %90 = sbr.rel (0) target = $region21
  $region20: #{transformer_v1_forward.16} parent=0 // pred_region
    _
  $region21: #{transformer_v1_forward.16} parent=0 // pred_fallthru
    _

// kernel: transformer_v1_forward.23
$region0: #{transformer_v1_forward.23}
  #allocation0 [shape = 'u32[]', space=smem, size = 0x4, offset = 0x4, fixed_abs, tag = 'smem constant byte address 0x4 - core index']
  #allocation1 [shape = 'u32[72,128]{1,0:T(1,128)}', space=vmem, size = 0x9000, scoped, tag = 'internal scratch']
  %s0 = inlined_call_operand.vmem [shape: bf16[16,32], index: 0, kind: input, shape index: {}]
  %s1 = inlined_call_operand.vmem [shape: f32[1,32], index: 1, kind: input, shape index: {}]
  %s2 = inlined_call_operand.vmem [shape: f32[1,32], index: 2, kind: input, shape index: {}]
  %s3 = inlined_call_operand.vmem [shape: bf16[32,4], index: 3, kind: input, shape index: {}]
  %s4 = inlined_call_operand.vmem [shape: f32[1,4], index: 4, kind: input, shape index: {}]
  %s5 = inlined_call_operand.vmem [shape: f32[16,4], index: 5, kind: output, shape index: {}]
  %s6 = sld [smem:[#allocation0]]
  $region30: #{transformer_v1_forward.23} parent=0
    _
  %s8 = ssub.s32 1, %s6
  %s9 = scalar_select 0, %s8, %s6
  // Predicated region
  $region2: #{transformer_v1_forward.23} parent=0 // pred_check
    _
  $region3: #{transformer_v1_forward.23} parent=0 // pred_check_branch
    %11 = sbr.rel (0) target = $region5
  $region4: #{transformer_v1_forward.23} parent=0 // pred_region
    _
  $region5: #{transformer_v1_forward.23} parent=0 // pred_fallthru
    _
  // Predicated region
  $region6: #{transformer_v1_forward.23} parent=0 // pred_check
    _
  $region7: #{transformer_v1_forward.23} parent=0 // pred_check_branch
    %13 = sbr.rel (0) target = $region9
  $region8: #{transformer_v1_forward.23} parent=0 // pred_region
    _
  $region9: #{transformer_v1_forward.23} parent=0 // pred_fallthru
    _
  // Predicated region
  $region10: #{transformer_v1_forward.23} parent=0 // pred_check
    _
  $region11: #{transformer_v1_forward.23} parent=0 // pred_check_branch
    %15 = sbr.rel (0) target = $region13
  $region12: #{transformer_v1_forward.23} parent=0 // pred_region
    _
  $region13: #{transformer_v1_forward.23} parent=0 // pred_fallthru
    _
  // Predicated region
  $region14: #{transformer_v1_forward.23} parent=0 // pred_check
    _
  $region15: #{transformer_v1_forward.23} parent=0 // pred_check_branch
    %17 = sbr.rel (0) target = $region17
  $region16: #{transformer_v1_forward.23} parent=0 // pred_region
    _
  $region17: #{transformer_v1_forward.23} parent=0 // pred_fallthru
    _
  // Predicated region
  $region18: #{transformer_v1_forward.23} parent=0 // pred_check
    _
  $region19: #{transformer_v1_forward.23} parent=0 // pred_check_branch
    %19 = sbr.rel (0) target = $region21
  $region20: #{transformer_v1_forward.23} parent=0 // pred_region
    _
  $region21: #{transformer_v1_forward.23} parent=0 // pred_fallthru
    _
  %v21 = vld [vmem:[%s0] sm:$0xf]
  %v22 = vld [vmem:[%s0 + $0x4] sm:$0xf]
  %v23 = vunpack.c.l.bf16 %v21
  %v24 = vunpack.c.l.bf16 %v22
  %v25 = vld [vmem:[%s1] sm:$0x1]
  %v26 = vld [vmem:[%s2] sm:$0x1]
  %vm27 = vcmask 261120
  %v28 = vsel %vm27, %v23, 0.0
  %29 = vadd.xlane.f32.xlu0 %v28
  %v30 = vpop.xlane.xlu0 %29
  %v31 = vsel %vm27, %v24, 0.0
  %32 = vadd.xlane.f32.xlu0 %v31
  %v33 = vpop.xlane.xlu0 %32
  %v34 = vrcp.pop 32.0
  %v35 = vmul.f32 32.0, %v34
  %v36 = vsub.f32 1.0, %v35
  %v37 = vmul.f32 %v34, %v36
  %v38 = vadd.f32 %v34, %v37
  %vm39 = vweird.f32 %v34
  %v40 = vsel %vm39, %v34, %v38
  %v41 = vmul.f32 %v30, %v40
  %v42 = vmul.f32 %v33, %v40
  %v43 = vsub.f32 %v23, %v41
  %v44 = vsub.f32 %v24, %v42
  %v45 = vmul.f32 %v43, %v43
  %v46 = vmul.f32 %v44, %v44
  %v47 = vsel %vm27, %v45, 0.0
  %48 = vadd.xlane.f32.xlu0 %v47
  %v49 = vpop.xlane.xlu0 %48
  %v50 = vsel %vm27, %v46, 0.0
  %51 = vadd.xlane.f32.xlu0 %v50
  %v52 = vpop.xlane.xlu0 %51
  %v53 = vmul.f32 %v49, %v40
  %v54 = vmul.f32 %v52, %v40
  %v55 = vadd.f32 %v53, 1e-05
  %v56 = vadd.f32 %v54, 1e-05
  %v57 = vrsqrt.pop %v55
  %v58 = vmul.f32 %v57, %v55
  %v59 = vmul.f32 %v58, %v57
  %v60 = vmul.f32 0.5, %v59
  %v61 = vsub.f32 1.5, %v60
  %v62 = vmul.f32 %v57, %v61
  %vm63 = vweird.f32 %v55
  %vm64 = vweird.f32 %v57
  %vm65 = vmor %vm63, %vm64
  %v66 = vsel %vm65, %v57, %v62
  %v67 = vrsqrt.pop %v56
  %v68 = vmul.f32 %v67, %v56
  %v69 = vmul.f32 %v68, %v67
  %v70 = vmul.f32 0.5, %v69
  %v71 = vsub.f32 1.5, %v70
  %v72 = vmul.f32 %v67, %v71
  %vm73 = vweird.f32 %v56
  %vm74 = vweird.f32 %v67
  %vm75 = vmor %vm73, %vm74
  %v76 = vsel %vm75, %v67, %v72
  %v77 = vmul.f32 %v43, %v66
  %v78 = vmul.f32 %v44, %v76
  %v80 = vperm.slane %v25, 0
  %v82 = vmul.f32 %v77, %v80
  %v83 = vmul.f32 %v78, %v80
  %v85 = vperm.slane %v26, 0
  %v87 = vadd.f32 %v82, %v85
  %v88 = vadd.f32 %v83, %v85
  %v89 = vpack.c.bf16 %v88, %v87
  %v90 = vld [vmem:[%s3] sm:$0xf]
  %v91 = vld [vmem:[%s3 + $0x4] sm:$0xf]
  %v92 = vld [vmem:[%s3 + $0x8] sm:$0xf]
  %v93 = vld [vmem:[%s3 + $0xc] sm:$0xf]
  %v94 = vld [vmem:[%s4] sm:$0x1]
  %v96 = vperm.slane %v94, 0
  %v102 = vunpack.c.l.b16 %v90
  %v103 = vunpack.c.l.b16 %v91
  %v104 = vunpack.c.l.b16 %v92
  %v105 = vunpack.c.l.b16 %v93
  %v106 = vpack.c.b16 %v103, %v102
  %v107 = vpack.c.b16 %v105, %v104
  %v111 = vsel %vm27, %v89, 0
  %113 = vmatpush.bf16.msra.mxu0 0
  %114 = vmatpush.bf16.msra.mxu0 0
  %115 = vmatpush.bf16.msra.mxu0 0
  %116 = vmatpush.bf16.msra.mxu0 0
  %117 = vmatpush.bf16.msra.mxu0 0
  %118 = vmatpush.bf16.msra.mxu0 0
  %119 = vmatpush.bf16.msra.mxu0 %v107
  %120 = vmatpush.bf16.msra.mxu0 %v106
  %121 = vmatmul.bf16.gmra.mxu0 %v111
  %v122 = vpop.f32.mrf.mxu0
  %v123 = vadd.f32 %v96, %v122
  %v124 = vpop.f32.mrf.mxu0
  %v125 = vadd.f32 %v96, %v124
  %126 = vdwg.mxu0
  %vm127 = vcmask 31744
  %128 = vst.msk [vmem:[%s5] sm:$0xff] %vm127, %v123
  %129 = vst.msk [vmem:[%s5 + $0x8] sm:$0xff] %vm127, %v125
  // Predicated region
  $region22: #{transformer_v1_forward.23} parent=0 // pred_check
    _
  $region23: #{transformer_v1_forward.23} parent=0 // pred_check_branch
    %131 = sbr.rel (0) target = $region25
  $region24: #{transformer_v1_forward.23} parent=0 // pred_region
    _
  $region25: #{transformer_v1_forward.23} parent=0 // pred_fallthru
    _
  // Predicated region
  $region26: #{transformer_v1_forward.23} parent=0 // pred_check
    _
  $region27: #{transformer_v1_forward.23} parent=0 // pred_check_branch
    %133 = sbr.rel (0) target = $region29
  $region28: #{transformer_v1_forward.23} parent=0 // pred_region
    _
  $region29: #{transformer_v1_forward.23} parent=0 // pred_fallthru
    _

// kernel: transformer_v1_forward.18
$region0: #{transformer_v1_forward.18}
  #allocation0 [shape = 'u32[]', space=smem, size = 0x4, offset = 0x4, fixed_abs, tag = 'smem constant byte address 0x4 - core index']
  #allocation1 [shape = 'u32[72,128]{1,0:T(1,128)}', space=vmem, size = 0x9000, scoped, tag = 'internal scratch']
  %s0 = inlined_call_operand.vmem [shape: bf16[2,8,32], index: 0, kind: input, shape index: {}]
  %s1 = inlined_call_operand.vmem [shape: bf16[2,8,32], index: 1, kind: input, shape index: {}]
  %s2 = inlined_call_operand.vmem [shape: bf16[32,32], index: 2, kind: input, shape index: {}]
  %s3 = inlined_call_operand.vmem [shape: f32[1,32], index: 3, kind: input, shape index: {}]
  %s4 = inlined_call_operand.vmem [shape: bf16[32,64], index: 4, kind: input, shape index: {}]
  %s5 = inlined_call_operand.vmem [shape: f32[1,64], index: 5, kind: input, shape index: {}]
  %s6 = inlined_call_operand.vmem [shape: bf16[32,32], index: 6, kind: input, shape index: {}]
  %s7 = inlined_call_operand.vmem [shape: f32[1,32], index: 7, kind: input, shape index: {}]
  %s8 = inlined_call_operand.vmem [shape: f32[1,32], index: 8, kind: input, shape index: {}]
  %s9 = inlined_call_operand.vmem [shape: f32[1,32], index: 9, kind: input, shape index: {}]
  %s10 = inlined_call_operand.vmem [shape: bf16[2,8,32], index: 10, kind: output, shape index: {}]
  %s11 = sld [smem:[#allocation0]]
  $region73: #{transformer_v1_forward.18} parent=0
    _
  %s13 = ssub.s32 1, %s11
  %s14 = scalar_select 0, %s13, %s11
  loop: start=0, step=1, limit=4
  $region2: #{transformer_v1_forward.18} parent=0 // loop_pre_header
    _
  $region3: #{transformer_v1_forward.18} parent=0 // loop_header
    %s16 = sphi 0, %s20
    %p17 = scmp.ge.s32.totalorder %s16, 4
    %s26 = sphi 0, %s28
    %s29 = sphi 0, %s26
    %s30 = sphi 0, %s29
    %s46 = sphi 0, %s30
    %s52 = sphi 0, %s54
    %s55 = sphi 0, %s52
    %s56 = sphi 0, %s55
    %s72 = sphi 0, %s56
    %s76 = sphi 0, %s76
    %s78 = sphi 0, %s76
    %s79 = sphi 0, %s78
    %s93 = sphi 0, %s79
    %s97 = sphi 0, %s97
    %s99 = sphi 0, %s97
    %s100 = sphi 0, %s99
    %s114 = sphi 0, %s100
    %s118 = sphi 0, %s118
    %s120 = sphi 0, %s118
    %s121 = sphi 0, %s120
    %s135 = sphi 0, %s121
    %s139 = sphi 0, %s139
    %s141 = sphi 0, %s139
    %s142 = sphi 0, %s141
    %s156 = sphi 0, %s142
    %s160 = sphi 0, %s160
    %s162 = sphi 0, %s160
    %s163 = sphi 0, %s162
    %s177 = sphi 0, %s163
    %s181 = sphi 0, %s181
    %s183 = sphi 0, %s181
    %s184 = sphi 0, %s183
    %s198 = sphi 0, %s184
    %s202 = sphi 0, %s202
    %s204 = sphi 0, %s202
    %s205 = sphi 0, %s204
    %s219 = sphi 0, %s205
    %s223 = sphi 0, %s223
    %s225 = sphi 0, %s223
    %s226 = sphi 0, %s225
    %s240 = sphi 0, %s226
    %s246 = sphi 0, %s248
    %s249 = sphi 0, %s246
    %s250 = sphi 0, %s249
    %s266 = sphi 0, %s250
  $region4: #{transformer_v1_forward.18} parent=0 // loop_header_branch
    %19 = sbr.rel (%p17) target = $region8
  $region5: #{transformer_v1_forward.18} parent=0 // loop_body
    %s21 = ssub.s32 %s16, 1
    %s22 = ssub.s32 %s16, 2
    %s23 = sadd.s32 %s16, 1
    %s24 = ssub.s32 %s16, %s23
    %p25 = scmp.eq.s32.totalorder %s24, 0
    %s27 = sadd.s32 %s26, 1
    %s28 = scalar_select %p25, %s26, %s27
    %p31 = pneg %p25
    %p32 = scmp.eq.s32.totalorder %s16, 1
    %p33 = por %p31, %p32
    %p34 = scmp.ne.s32.totalorder %s26, %s29
    %p35 = scmp.eq.s32.totalorder %s16, 0
    %p36 = por %p34, %p35
    %p37 = scmp.ne.s32.totalorder %s26, %s29
    %p38 = scmp.eq.s32.totalorder %s21, 1
    %p39 = por %p37, %p38
    %p40 = scmp.ne.s32.totalorder %s29, %s30
    %p41 = scmp.eq.s32.totalorder %s21, 0
    %p42 = por %p40, %p41
    %p43 = scmp.ne.s32.totalorder %s29, %s30
    %p44 = scmp.eq.s32.totalorder %s22, 1
    %p45 = por %p43, %p44
    %p47 = scmp.ne.s32.totalorder %s30, %s46
    %p48 = scmp.eq.s32.totalorder %s22, 0
    %p49 = por %p47, %p48
    %s50 = ssub.s32 %s16, %s23
    %p51 = scmp.eq.s32.totalorder %s50, 0
    %s53 = sadd.s32 %s52, 1
    %s54 = scalar_select %p51, %s52, %s53
    %p57 = pneg %p51
    %p58 = scmp.eq.s32.totalorder %s16, 1
    %p59 = por %p57, %p58
    %p60 = scmp.ne.s32.totalorder %s52, %s55
    %p61 = scmp.eq.s32.totalorder %s16, 0
    %p62 = por %p60, %p61
    %p63 = scmp.ne.s32.totalorder %s52, %s55
    %p64 = scmp.eq.s32.totalorder %s21, 1
    %p65 = por %p63, %p64
    %p66 = scmp.ne.s32.totalorder %s55, %s56
    %p67 = scmp.eq.s32.totalorder %s21, 0
    %p68 = por %p66, %p67
    %p69 = scmp.ne.s32.totalorder %s55, %s56
    %p70 = scmp.eq.s32.totalorder %s22, 1
    %p71 = por %p69, %p70
    %p73 = scmp.ne.s32.totalorder %s56, %s72
    %p74 = scmp.eq.s32.totalorder %s22, 0
    %p75 = por %p73, %p74
    %s77 = sadd.s32 %s76, 1
    %p80 = scmp.eq.s32.totalorder %s16, 1
    %p81 = scmp.ne.s32.totalorder %s76, %s78
    %p82 = scmp.eq.s32.totalorder %s16, 0
    %p83 = por %p81, %p82
    %p84 = scmp.ne.s32.totalorder %s76, %s78
    %p85 = scmp.eq.s32.totalorder %s21, 1
    %p86 = por %p84, %p85
    %p87 = scmp.ne.s32.totalorder %s78, %s79
    %p88 = scmp.eq.s32.totalorder %s21, 0
    %p89 = por %p87, %p88
    %p90 = scmp.ne.s32.totalorder %s78, %s79
    %p91 = scmp.eq.s32.totalorder %s22, 1
    %p92 = por %p90, %p91
    %p94 = scmp.ne.s32.totalorder %s79, %s93
    %p95 = scmp.eq.s32.totalorder %s22, 0
    %p96 = por %p94, %p95
    %s98 = sadd.s32 %s97, 1
    %p101 = scmp.eq.s32.totalorder %s16, 1
    %p102 = scmp.ne.s32.totalorder %s97, %s99
    %p103 = scmp.eq.s32.totalorder %s16, 0
    %p104 = por %p102, %p103
    %p105 = scmp.ne.s32.totalorder %s97, %s99
    %p106 = scmp.eq.s32.totalorder %s21, 1
    %p107 = por %p105, %p106
    %p108 = scmp.ne.s32.totalorder %s99, %s100
    %p109 = scmp.eq.s32.totalorder %s21, 0
    %p110 = por %p108, %p109
    %p111 = scmp.ne.s32.totalorder %s99, %s100
    %p112 = scmp.eq.s32.totalorder %s22, 1
    %p113 = por %p111, %p112
    %p115 = scmp.ne.s32.totalorder %s100, %s114
    %p116 = scmp.eq.s32.totalorder %s22, 0
    %p117 = por %p115, %p116
    %s119 = sadd.s32 %s118, 1
    %p122 = scmp.eq.s32.totalorder %s16, 1
    %p123 = scmp.ne.s32.totalorder %s118, %s120
    %p124 = scmp.eq.s32.totalorder %s16, 0
    %p125 = por %p123, %p124
    %p126 = scmp.ne.s32.totalorder %s118, %s120
    %p127 = scmp.eq.s32.totalorder %s21, 1
    %p128 = por %p126, %p127
    %p129 = scmp.ne.s32.totalorder %s120, %s121
    %p130 = scmp.eq.s32.totalorder %s21, 0
    %p131 = por %p129, %p130
    %p132 = scmp.ne.s32.totalorder %s120, %s121
    %p133 = scmp.eq.s32.totalorder %s22, 1
    %p134 = por %p132, %p133
    %p136 = scmp.ne.s32.totalorder %s121, %s135
    %p137 = scmp.eq.s32.totalorder %s22, 0
    %p138 = por %p136, %p137
    %s140 = sadd.s32 %s139, 1
    %p143 = scmp.eq.s32.totalorder %s16, 1
    %p144 = scmp.ne.s32.totalorder %s139, %s141
    %p145 = scmp.eq.s32.totalorder %s16, 0
    %p146 = por %p144, %p145
    %p147 = scmp.ne.s32.totalorder %s139, %s141
    %p148 = scmp.eq.s32.totalorder %s21, 1
    %p149 = por %p147, %p148
    %p150 = scmp.ne.s32.totalorder %s141, %s142
    %p151 = scmp.eq.s32.totalorder %s21, 0
    %p152 = por %p150, %p151
    %p153 = scmp.ne.s32.totalorder %s141, %s142
    %p154 = scmp.eq.s32.totalorder %s22, 1
    %p155 = por %p153, %p154
    %p157 = scmp.ne.s32.totalorder %s142, %s156
    %p158 = scmp.eq.s32.totalorder %s22, 0
    %p159 = por %p157, %p158
    %s161 = sadd.s32 %s160, 1
    %p164 = scmp.eq.s32.totalorder %s16, 1
    %p165 = scmp.ne.s32.totalorder %s160, %s162
    %p166 = scmp.eq.s32.totalorder %s16, 0
    %p167 = por %p165, %p166
    %p168 = scmp.ne.s32.totalorder %s160, %s162
    %p169 = scmp.eq.s32.totalorder %s21, 1
    %p170 = por %p168, %p169
    %p171 = scmp.ne.s32.totalorder %s162, %s163
    %p172 = scmp.eq.s32.totalorder %s21, 0
    %p173 = por %p171, %p172
    %p174 = scmp.ne.s32.totalorder %s162, %s163
    %p175 = scmp.eq.s32.totalorder %s22, 1
    %p176 = por %p174, %p175
    %p178 = scmp.ne.s32.totalorder %s163, %s177
    %p179 = scmp.eq.s32.totalorder %s22, 0
    %p180 = por %p178, %p179
    %s182 = sadd.s32 %s181, 1
    %p185 = scmp.eq.s32.totalorder %s16, 1
    %p186 = scmp.ne.s32.totalorder %s181, %s183
    %p187 = scmp.eq.s32.totalorder %s16, 0
    %p188 = por %p186, %p187
    %p189 = scmp.ne.s32.totalorder %s181, %s183
    %p190 = scmp.eq.s32.totalorder %s21, 1
    %p191 = por %p189, %p190
    %p192 = scmp.ne.s32.totalorder %s183, %s184
    %p193 = scmp.eq.s32.totalorder %s21, 0
    %p194 = por %p192, %p193
    %p195 = scmp.ne.s32.totalorder %s183, %s184
    %p196 = scmp.eq.s32.totalorder %s22, 1
    %p197 = por %p195, %p196
    %p199 = scmp.ne.s32.totalorder %s184, %s198
    %p200 = scmp.eq.s32.totalorder %s22, 0
    %p201 = por %p199, %p200
    %s203 = sadd.s32 %s202, 1
    %p206 = scmp.eq.s32.totalorder %s16, 1
    %p207 = scmp.ne.s32.totalorder %s202, %s204
    %p208 = scmp.eq.s32.totalorder %s16, 0
    %p209 = por %p207, %p208
    %p210 = scmp.ne.s32.totalorder %s202, %s204
    %p211 = scmp.eq.s32.totalorder %s21, 1
    %p212 = por %p210, %p211
    %p213 = scmp.ne.s32.totalorder %s204, %s205
    %p214 = scmp.eq.s32.totalorder %s21, 0
    %p215 = por %p213, %p214
    %p216 = scmp.ne.s32.totalorder %s204, %s205
    %p217 = scmp.eq.s32.totalorder %s22, 1
    %p218 = por %p216, %p217
    %p220 = scmp.ne.s32.totalorder %s205, %s219
    %p221 = scmp.eq.s32.totalorder %s22, 0
    %p222 = por %p220, %p221
    %s224 = sadd.s32 %s223, 1
    %p227 = scmp.eq.s32.totalorder %s16, 1
    %p228 = scmp.ne.s32.totalorder %s223, %s225
    %p229 = scmp.eq.s32.totalorder %s16, 0
    %p230 = por %p228, %p229
    %p231 = scmp.ne.s32.totalorder %s223, %s225
    %p232 = scmp.eq.s32.totalorder %s21, 1
    %p233 = por %p231, %p232
    %p234 = scmp.ne.s32.totalorder %s225, %s226
    %p235 = scmp.eq.s32.totalorder %s21, 0
    %p236 = por %p234, %p235
    %p237 = scmp.ne.s32.totalorder %s225, %s226
    %p238 = scmp.eq.s32.totalorder %s22, 1
    %p239 = por %p237, %p238
    %p241 = scmp.ne.s32.totalorder %s226, %s240
    %p242 = scmp.eq.s32.totalorder %s22, 0
    %p243 = por %p241, %p242
    %s244 = ssub.s32 %s16, %s23
    %p245 = scmp.eq.s32.totalorder %s244, 0
    %s247 = sadd.s32 %s246, 1
    %s248 = scalar_select %p245, %s246, %s247
    %p251 = pneg %p245
    %p252 = scmp.eq.s32.totalorder %s16, 1
    %p253 = por %p251, %p252
    %p254 = scmp.ne.s32.totalorder %s246, %s249
    %p255 = scmp.eq.s32.totalorder %s16, 0
    %p256 = por %p254, %p255
    %p257 = scmp.ne.s32.totalorder %s246, %s249
    %p258 = scmp.eq.s32.totalorder %s21, 1
    %p259 = por %p257, %p258
    %p260 = scmp.ne.s32.totalorder %s249, %s250
    %p261 = scmp.eq.s32.totalorder %s21, 0
    %p262 = por %p260, %p261
    %p263 = scmp.ne.s32.totalorder %s249, %s250
    %p264 = scmp.eq.s32.totalorder %s22, 1
    %p265 = por %p263, %p264
    %p267 = scmp.ne.s32.totalorder %s250, %s266
    %p268 = scmp.eq.s32.totalorder %s22, 0
    %p269 = por %p267, %p268
    %p270 = scmp.le.s32.totalorder 1, %s16
    %p271 = scmp.lt.s32.totalorder %s16, 3
    %p272 = pnand %p270, %p271
    %p273 = pneg %p272
    // Predicated region
    $region9: #{transformer_v1_forward.18} parent=5 // pred_check
      _
    $region10: #{transformer_v1_forward.18} parent=5 // pred_check_branch
      %275 = sbr.rel (%p272) target = $region12
    $region11: #{transformer_v1_forward.18} parent=5 // pred_region
      %s276 = ssub.s32 %s16, 1
      // Predicated region
      $region13: #{transformer_v1_forward.18} parent=11 // pred_check
        %p277 = pneg %p89
      $region14: #{transformer_v1_forward.18} parent=11 // pred_check_branch
        %279 = sbr.rel (%p277) target = $region16
      $region15: #{transformer_v1_forward.18} parent=11 // pred_region
        _
      $region16: #{transformer_v1_forward.18} parent=11 // pred_fallthru
        _
      // Predicated region
      $region17: #{transformer_v1_forward.18} parent=11 // pred_check
        %p280 = pneg %p110
      $region18: #{transformer_v1_forward.18} parent=11 // pred_check_branch
        %282 = sbr.rel (%p280) target = $region20
      $region19: #{transformer_v1_forward.18} parent=11 // pred_region
        _
      $region20: #{transformer_v1_forward.18} parent=11 // pred_fallthru
        _
      // Predicated region
      $region21: #{transformer_v1_forward.18} parent=11 // pred_check
        %p283 = pneg %p131
      $region22: #{transformer_v1_forward.18} parent=11 // pred_check_branch
        %285 = sbr.rel (%p283) target = $region24
      $region23: #{transformer_v1_forward.18} parent=11 // pred_region
        _
      $region24: #{transformer_v1_forward.18} parent=11 // pred_fallthru
        _
      // Predicated region
      $region25: #{transformer_v1_forward.18} parent=11 // pred_check
        %p286 = pneg %p152
      $region26: #{transformer_v1_forward.18} parent=11 // pred_check_branch
        %288 = sbr.rel (%p286) target = $region28
      $region27: #{transformer_v1_forward.18} parent=11 // pred_region
        _
      $region28: #{transformer_v1_forward.18} parent=11 // pred_fallthru
        _
      // Predicated region
      $region29: #{transformer_v1_forward.18} parent=11 // pred_check
        %p289 = pneg %p173
      $region30: #{transformer_v1_forward.18} parent=11 // pred_check_branch
        %291 = sbr.rel (%p289) target = $region32
      $region31: #{transformer_v1_forward.18} parent=11 // pred_region
        _
      $region32: #{transformer_v1_forward.18} parent=11 // pred_fallthru
        _
      // Predicated region
      $region33: #{transformer_v1_forward.18} parent=11 // pred_check
        %p292 = pneg %p194
      $region34: #{transformer_v1_forward.18} parent=11 // pred_check_branch
        %294 = sbr.rel (%p292) target = $region36
      $region35: #{transformer_v1_forward.18} parent=11 // pred_region
        _
      $region36: #{transformer_v1_forward.18} parent=11 // pred_fallthru
        _
      // Predicated region
      $region37: #{transformer_v1_forward.18} parent=11 // pred_check
        %p295 = pneg %p215
      $region38: #{transformer_v1_forward.18} parent=11 // pred_check_branch
        %297 = sbr.rel (%p295) target = $region40
      $region39: #{transformer_v1_forward.18} parent=11 // pred_region
        _
      $region40: #{transformer_v1_forward.18} parent=11 // pred_fallthru
        _
      // Predicated region
      $region41: #{transformer_v1_forward.18} parent=11 // pred_check
        %p298 = pneg %p236
      $region42: #{transformer_v1_forward.18} parent=11 // pred_check_branch
        %300 = sbr.rel (%p298) target = $region44
      $region43: #{transformer_v1_forward.18} parent=11 // pred_region
        _
      $region44: #{transformer_v1_forward.18} parent=11 // pred_fallthru
        _
    $region12: #{transformer_v1_forward.18} parent=5 // pred_fallthru
      _
    %p301 = scmp.lt.s32.totalorder %s16, 2
    // Predicated region
    $region45: #{transformer_v1_forward.18} parent=5 // pred_check
      %p302 = pneg %p301
    $region46: #{transformer_v1_forward.18} parent=5 // pred_check_branch
      %304 = sbr.rel (%p302) target = $region48
    $region47: #{transformer_v1_forward.18} parent=5 // pred_region
      // Predicated region
      $region49: #{transformer_v1_forward.18} parent=47 // pred_check
        %p305 = pneg %p36
      $region50: #{transformer_v1_forward.18} parent=47 // pred_check_branch
        %307 = sbr.rel (%p305) target = $region52
      $region51: #{transformer_v1_forward.18} parent=47 // pred_region
        %p308 = scmp.lt.s32.totalorder %s16, 1
        %s309 = scalar_select %p308, %s16, 1
        %s310 = smul.addr %s309, 4
        %s311 = scalar_lea.vmem %s0, %s310
      $region52: #{transformer_v1_forward.18} parent=47 // pred_fallthru
        _
      // Predicated region
      $region53: #{transformer_v1_forward.18} parent=47 // pred_check
        %p312 = pneg %p62
      $region54: #{transformer_v1_forward.18} parent=47 // pred_check_branch
        %314 = sbr.rel (%p312) target = $region56
      $region55: #{transformer_v1_forward.18} parent=47 // pred_region
        %p315 = scmp.lt.s32.totalorder %s16, 1
        %s316 = scalar_select %p315, %s16, 1
        %s317 = smul.addr %s316, 4
        %s318 = scalar_lea.vmem %s1, %s317
      $region56: #{transformer_v1_forward.18} parent=47 // pred_fallthru
        _
    $region48: #{transformer_v1_forward.18} parent=5 // pred_fallthru
      _
    %p319 = scmp.le.s32.totalorder 1, %s16
    %p320 = scmp.lt.s32.totalorder %s16, 3
    %p321 = pnand %p319, %p320
    %p322 = pneg %p321
    // Predicated region
    $region57: #{transformer_v1_forward.18} parent=5 // pred_check
      _
    $region58: #{transformer_v1_forward.18} parent=5 // pred_check_branch
      %324 = sbr.rel (%p321) target = $region60
    $region59: #{transformer_v1_forward.18} parent=5 // pred_region
      %s325 = ssub.s32 %s16, 1
      %p326 = scmp.lt.s32.totalorder %s21, 1
      %s327 = scalar_select %p326, %s21, 1
      %s328 = smul.addr %s327, 4
      %s329 = scalar_lea.vmem %s0, %s328
      %p330 = pneg %p42
      %p331 = pneg %p39
      %p332 = scmp.lt.s32.totalorder %s21, 1
      %s333 = scalar_select %p332, %s21, 1
      %s334 = smul.addr %s333, 4
      %s335 = scalar_lea.vmem %s1, %s334
      %p336 = pneg %p68
      %p337 = pneg %p65
      %p338 = pneg %p89
      %p339 = pneg %p86
      %p340 = pneg %p110
      %p341 = pneg %p107
      %p342 = pneg %p131
      %p343 = pneg %p128
      %p344 = pneg %p152
      %p345 = pneg %p149
      %p346 = pneg %p173
      %p347 = pneg %p170
      %p348 = pneg %p194
      %p349 = pneg %p191
      %p350 = pneg %p215
      %p351 = pneg %p212
      %p352 = pneg %p236
      %p353 = pneg %p233
      %p354 = pneg %p262
      %p355 = pneg %p259
      %p356 = scmp.lt.s32.totalorder %s21, 1
      %s357 = scalar_select %p356, %s21, 1
      %s358 = smul.addr %s357, 4
      %s359 = scalar_lea.vmem %s10, %s358
      %p360 = scmp.lt.s32.totalorder %s21, 1
      %s361 = scalar_select %p360, %s21, 1
      %s362 = smul.addr %s361, 4
      %s363 = scalar_lea.vmem %s0, %s362
      %p364 = scmp.lt.s32.totalorder %s21, 1
      %s365 = scalar_select %p364, %s21, 1
      %s366 = smul.addr %s365, 4
      %s367 = scalar_lea.vmem %s1, %s366
      %p368 = scmp.lt.s32.totalorder %s21, 1
      %s369 = scalar_select %p368, %s21, 1
      %s370 = smul.addr %s369, 4
      %s371 = scalar_lea.vmem %s10, %s370
      %v373 = vld [vmem:[%s363] sm:$0xf]
      %v374 = vld [vmem:[%s367] sm:$0xf]
      %v375 = vld [vmem:[%s2] sm:$0xf]
      %v376 = vld [vmem:[%s2 + $0x4] sm:$0xf]
      %v377 = vld [vmem:[%s2 + $0x8] sm:$0xf]
      %v378 = vld [vmem:[%s2 + $0xc] sm:$0xf]
      %v379 = vld [vmem:[%s3] sm:$0x1]
      %v381 = vperm.slane %v379, 0
      %v387 = vunpack.c.l.b16 %v375
      %v388 = vunpack.c.l.b16 %v376
      %v389 = vunpack.c.l.b16 %v377
      %v390 = vunpack.c.l.b16 %v378
      %v391 = vpack.c.b16 %v388, %v387
      %v392 = vpack.c.b16 %v390, %v389
      %vm395 = vcmask 261120
      %v397 = vsel %vm395, %v373, 0
      %399 = vmatpush.bf16.msra.mxu0 0
      %400 = vmatpush.bf16.msra.mxu0 0
      %401 = vmatpush.bf16.msra.mxu0 0
      %402 = vmatpush.bf16.msra.mxu0 0
      %403 = vmatpush.bf16.msra.mxu0 0
      %404 = vmatpush.bf16.msra.mxu0 0
      %405 = vmatpush.bf16.msra.mxu0 %v392
      %406 = vmatpush.bf16.msra.mxu0 %v391
      %407 = vmatmul.bf16.gmra.mxu0 %v397
      %v408 = vpop.f32.mrf.mxu0
      %v409 = vadd.f32 %v381, %v408
      %v410 = vpop.f32.mrf.mxu0
      %411 = vdwg.mxu0
      %v412 = vpack.c.bf16 %v409, %v409
      %v413 = vld [vmem:[%s4] sm:$0xf]
      %v414 = vld [vmem:[%s4 + $0x4] sm:$0xf]
      %v415 = vld [vmem:[%s4 + $0x8] sm:$0xf]
      %v416 = vld [vmem:[%s4 + $0xc] sm:$0xf]
      %v417 = vld [vmem:[%s5] sm:$0x1]
      %v419 = vperm.slane %v417, 0
      %v425 = vunpack.c.l.b16 %v413
      %v426 = vunpack.c.l.b16 %v414
      %v427 = vunpack.c.l.b16 %v415
      %v428 = vunpack.c.l.b16 %v416
      %v429 = vpack.c.b16 %v426, %v425
      %v430 = vpack.c.b16 %v428, %v427
      %v434 = vsel %vm395, %v374, 0
      %436 = vmatpush.bf16.msra.mxu0 0
      %437 = vmatpush.bf16.msra.mxu0 0
      %438 = vmatpush.bf16.msra.mxu0 0
      %439 = vmatpush.bf16.msra.mxu0 0
      %440 = vmatpush.bf16.msra.mxu0 0
      %441 = vmatpush.bf16.msra.mxu0 0
      %442 = vmatpush.bf16.msra.mxu0 %v430
      %443 = vmatpush.bf16.msra.mxu0 %v429
      %444 = vmatmul.bf16.gmra.mxu0 %v434
      %v445 = vpop.f32.mrf.mxu0
      %v446 = vadd.f32 %v419, %v445
      %v447 = vpop.f32.mrf.mxu0
      %448 = vdwg.mxu0
      %v449 = vpack.c.bf16 %v446, %v446
      %vm450 = vcmask 31744
      %v452 = vsel %vm450, %v412, 0
      %v455 = vsel %vm450, %v449, 0
      %457 = vmatpush.bf16.xpose.msra.mxu0 0
      %458 = vmatpush.bf16.xpose.msra.mxu0 0
      %459 = vmatpush.bf16.xpose.msra.mxu0 0
      %460 = vmatpush.bf16.xpose.msra.mxu0 0
      %461 = vmatpush.bf16.xpose.msra.mxu0 0
      %462 = vmatpush.bf16.xpose.msra.mxu0 0
      %463 = vmatpush.bf16.xpose.msra.mxu0 0
      %464 = vmatpush.bf16.xpose.msra.mxu0 %v455
      %465 = vmatmul.bf16.gmra.mxu0 %v452
      %v466 = vpop.f32.mrf.mxu0
      %v467 = vadd.f32 0.0, %v466
      %v468 = vpop.f32.mrf.mxu0
      %469 = vdwg.mxu0
      %v470 = vmul.f32 %v467, 0.5
      %vm471 = vcmask 64512
      %v472 = vsel %vm471, %v470, -inf
      %473 = vmax.xlane.f32.xlu0 %v472
      %v474 = vpop.xlane.xlu0 %473
      %v475 = vsub.f32 %v470, %v474
      %v476 = vmul.f32 %v475, 1.442695
      %v477 = vpow.pop %v476
      %v478 = vsel %vm471, %v477, 0.0
      %479 = vadd.xlane.f32.xlu0 %v478
      %v480 = vpop.xlane.xlu0 %479
      %v481 = vrcp.pop %v480
      %v482 = vmul.f32 %v480, %v481
      %v483 = vsub.f32 1.0, %v482
      %v484 = vmul.f32 %v481, %v483
      %v485 = vadd.f32 %v481, %v484
      %vm486 = vweird.f32 %v480
      %vm487 = vweird.f32 %v481
      %vm488 = vmor %vm486, %vm487
      %v489 = vsel %vm488, %v481, %v485
      %v490 = vand.u32 2147483647, %v480
      %vm491 = vcmp.eq.f32.partialorder %v490, 8.507059e+37
      %v492 = vand.u32 %v480, 2147483648
      %v493 = vor.u32 1.1754944e-38, %v492
      %v494 = vsel %vm491, %v493, %v489
      %v495 = vmul.f32 %v477, %v494
      %v496 = vpack.c.bf16 %v495, %v495
      %v498 = vunpack.c.l.b16 %v449
      %v499 = vpack.c.b16 %v498, %v498
      %500 = vrot.lane.b32.xlu0 %v499, 96
      %v501 = vpop.permute.xlu0 %500
      %v503 = vsel %vm471, %v496, 0
      %vm505 = vcmask 1043456
      %v507 = vsel %vm505, %v501, 0
      %509 = vmatpush.bf16.msra.mxu0 0
      %510 = vmatpush.bf16.msra.mxu0 0
      %511 = vmatpush.bf16.msra.mxu0 0
      %512 = vmatpush.bf16.msra.mxu0 0
      %513 = vmatpush.bf16.msra.mxu0 0
      %514 = vmatpush.bf16.msra.mxu0 0
      %515 = vmatpush.bf16.msra.mxu0 0
      %516 = vmatpush.bf16.msra.mxu0 %v507
      %517 = vmatmul.bf16.gmra.mxu0 %v503
      %v518 = vpop.f32.mrf.mxu0
      %v519 = vadd.f32 0.0, %v518
      %v520 = vpop.f32.mrf.mxu0
      %521 = vdwg.mxu0
      %v523 = vunpack.c.l.b16 %v412
      %v524 = vpack.c.b16 %v523, %v523
      %525 = vrot.lane.b32.xlu0 %v524, 124
      %v526 = vpop.permute.xlu0 %525
      %527 = vrot.lane.b32.xlu0 %v499, 124
      %v528 = vpop.permute.xlu0 %527
      %v530 = vsel %vm450, %v526, 0
      %v533 = vsel %vm450, %v528, 0
      %535 = vmatpush.bf16.xpose.msra.mxu0 0
      %536 = vmatpush.bf16.xpose.msra.mxu0 0
      %537 = vmatpush.bf16.xpose.msra.mxu0 0
      %538 = vmatpush.bf16.xpose.msra.mxu0 0
      %539 = vmatpush.bf16.xpose.msra.mxu0 0
      %540 = vmatpush.bf16.xpose.msra.mxu0 0
      %541 = vmatpush.bf16.xpose.msra.mxu0 0
      %542 = vmatpush.bf16.xpose.msra.mxu0 %v533
      %543 = vmatmul.bf16.gmra.mxu0 %v530
      %v544 = vpop.f32.mrf.mxu0
      %v545 = vadd.f32 0.0, %v544
      %v546 = vpop.f32.mrf.mxu0
      %547 = vdwg.mxu0
      %v548 = vmul.f32 %v545, 0.5
      %v549 = vsel %vm471, %v548, -inf
      %550 = vmax.xlane.f32.xlu0 %v549
      %v551 = vpop.xlane.xlu0 %550
      %v552 = vsub.f32 %v548, %v551
      %v553 = vmul.f32 %v552, 1.442695
      %v554 = vpow.pop %v553
      %v555 = vsel %vm471, %v554, 0.0
      %556 = vadd.xlane.f32.xlu0 %v555
      %v557 = vpop.xlane.xlu0 %556
      %v558 = vrcp.pop %v557
      %v559 = vmul.f32 %v557, %v558
      %v560 = vsub.f32 1.0, %v559
      %v561 = vmul.f32 %v558, %v560
      %v562 = vadd.f32 %v558, %v561
      %vm563 = vweird.f32 %v557
      %vm564 = vweird.f32 %v558
      %vm565 = vmor %vm563, %vm564
      %v566 = vsel %vm565, %v558, %v562
      %v567 = vand.u32 2147483647, %v557
      %vm568 = vcmp.eq.f32.partialorder %v567, 8.507059e+37
      %v569 = vand.u32 %v557, 2147483648
      %v570 = vor.u32 1.1754944e-38, %v569
      %v571 = vsel %vm568, %v570, %v566
      %v572 = vmul.f32 %v554, %v571
      %v573 = vpack.c.bf16 %v572, %v572
      %574 = vrot.lane.b32.xlu0 %v499, 92
      %v575 = vpop.permute.xlu0 %574
      %v577 = vsel %vm471, %v573, 0
      %v580 = vsel %vm505, %v575, 0
      %582 = vmatpush.bf16.msra.mxu0 0
      %583 = vmatpush.bf16.msra.mxu0 0
      %584 = vmatpush.bf16.msra.mxu0 0
      %585 = vmatpush.bf16.msra.mxu0 0
      %586 = vmatpush.bf16.msra.mxu0 0
      %587 = vmatpush.bf16.msra.mxu0 0
      %588 = vmatpush.bf16.msra.mxu0 0
      %589 = vmatpush.bf16.msra.mxu0 %v580
      %590 = vmatmul.bf16.gmra.mxu0 %v577
      %v591 = vpop.f32.mrf.mxu0
      %v592 = vadd.f32 0.0, %v591
      %v593 = vpop.f32.mrf.mxu0
      %594 = vdwg.mxu0
      %595 = vrot.lane.b32.xlu0 %v524, 120
      %v596 = vpop.permute.xlu0 %595
      %597 = vrot.lane.b32.xlu0 %v499, 120
      %v598 = vpop.permute.xlu0 %597
      %v600 = vsel %vm450, %v596, 0
      %v603 = vsel %vm450, %v598, 0
      %605 = vmatpush.bf16.xpose.msra.mxu0 0
      %606 = vmatpush.bf16.xpose.msra.mxu0 0
      %607 = vmatpush.bf16.xpose.msra.mxu0 0
      %608 = vmatpush.bf16.xpose.msra.mxu0 0
      %609 = vmatpush.bf16.xpose.msra.mxu0 0
      %610 = vmatpush.bf16.xpose.msra.mxu0 0
      %611 = vmatpush.bf16.xpose.msra.mxu0 0
      %612 = vmatpush.bf16.xpose.msra.mxu0 %v603
      %613 = vmatmul.bf16.gmra.mxu0 %v600
      %v614 = vpop.f32.mrf.mxu0
      %v615 = vadd.f32 0.0, %v614
      %v616 = vpop.f32.mrf.mxu0
      %617 = vdwg.mxu0
      %v618 = vmul.f32 %v615, 0.5
      %v619 = vsel %vm471, %v618, -inf
      %620 = vmax.xlane.f32.xlu0 %v619
      %v621 = vpop.xlane.xlu0 %620
      %v622 = vsub.f32 %v618, %v621
      %v623 = vmul.f32 %v622, 1.442695
      %v624 = vpow.pop %v623
      %v625 = vsel %vm471, %v624, 0.0
      %626 = vadd.xlane.f32.xlu0 %v625
      %v627 = vpop.xlane.xlu0 %626
      %v628 = vrcp.pop %v627
      %v629 = vmul.f32 %v627, %v628
      %v630 = vsub.f32 1.0, %v629
      %v631 = vmul.f32 %v628, %v630
      %v632 = vadd.f32 %v628, %v631
      %vm633 = vweird.f32 %v627
      %vm634 = vweird.f32 %v628
      %vm635 = vmor %vm633, %vm634
      %v636 = vsel %vm635, %v628, %v632
      %v637 = vand.u32 2147483647, %v627
      %vm638 = vcmp.eq.f32.partialorder %v637, 8.507059e+37
      %v639 = vand.u32 %v627, 2147483648
      %v640 = vor.u32 1.1754944e-38, %v639
      %v641 = vsel %vm638, %v640, %v636
      %v642 = vmul.f32 %v624, %v641
      %v643 = vpack.c.bf16 %v642, %v642
      %644 = vrot.lane.b32.xlu0 %v499, 88
      %v645 = vpop.permute.xlu0 %644
      %v647 = vsel %vm471, %v643, 0
      %v650 = vsel %vm505, %v645, 0
      %652 = vmatpush.bf16.msra.mxu0 0
      %653 = vmatpush.bf16.msra.mxu0 0
      %654 = vmatpush.bf16.msra.mxu0 0
      %655 = vmatpush.bf16.msra.mxu0 0
      %656 = vmatpush.bf16.msra.mxu0 0
      %657 = vmatpush.bf16.msra.mxu0 0
      %658 = vmatpush.bf16.msra.mxu0 0
      %659 = vmatpush.bf16.msra.mxu0 %v650
      %660 = vmatmul.bf16.gmra.mxu0 %v647
      %v661 = vpop.f32.mrf.mxu0
      %v662 = vadd.f32 0.0, %v661
      %v663 = vpop.f32.mrf.mxu0
      %664 = vdwg.mxu0
      %665 = vrot.lane.b32.xlu0 %v524, 116
      %v666 = vpop.permute.xlu0 %665
      %667 = vrot.lane.b32.xlu0 %v499, 116
      %v668 = vpop.permute.xlu0 %667
      %v670 = vsel %vm450, %v666, 0
      %v673 = vsel %vm450, %v668, 0
      %675 = vmatpush.bf16.xpose.msra.mxu0 0
      %676 = vmatpush.bf16.xpose.msra.mxu0 0
      %677 = vmatpush.bf16.xpose.msra.mxu0 0
      %678 = vmatpush.bf16.xpose.msra.mxu0 0
      %679 = vmatpush.bf16.xpose.msra.mxu0 0
      %680 = vmatpush.bf16.xpose.msra.mxu0 0
      %681 = vmatpush.bf16.xpose.msra.mxu0 0
      %682 = vmatpush.bf16.xpose.msra.mxu0 %v673
      %683 = vmatmul.bf16.gmra.mxu0 %v670
      %v684 = vpop.f32.mrf.mxu0
      %v685 = vadd.f32 0.0, %v684
      %v686 = vpop.f32.mrf.mxu0
      %687 = vdwg.mxu0
      %v688 = vmul.f32 %v685, 0.5
      %v689 = vsel %vm471, %v688, -inf
      %690 = vmax.xlane.f32.xlu0 %v689
      %v691 = vpop.xlane.xlu0 %690
      %v692 = vsub.f32 %v688, %v691
      %v693 = vmul.f32 %v692, 1.442695
      %v694 = vpow.pop %v693
      %v695 = vsel %vm471, %v694, 0.0
      %696 = vadd.xlane.f32.xlu0 %v695
      %v697 = vpop.xlane.xlu0 %696
      %v698 = vrcp.pop %v697
      %v699 = vmul.f32 %v697, %v698
      %v700 = vsub.f32 1.0, %v699
      %v701 = vmul.f32 %v698, %v700
      %v702 = vadd.f32 %v698, %v701
      %vm703 = vweird.f32 %v697
      %vm704 = vweird.f32 %v698
      %vm705 = vmor %vm703, %vm704
      %v706 = vsel %vm705, %v698, %v702
      %v707 = vand.u32 2147483647, %v697
      %vm708 = vcmp.eq.f32.partialorder %v707, 8.507059e+37
      %v709 = vand.u32 %v697, 2147483648
      %v710 = vor.u32 1.1754944e-38, %v709
      %v711 = vsel %vm708, %v710, %v706
      %v712 = vmul.f32 %v694, %v711
      %v713 = vpack.c.bf16 %v712, %v712
      %714 = vrot.lane.b32.xlu0 %v499, 84
      %v715 = vpop.permute.xlu0 %714
      %v717 = vsel %vm471, %v713, 0
      %v720 = vsel %vm505, %v715, 0
      %722 = vmatpush.bf16.msra.mxu0 0
      %723 = vmatpush.bf16.msra.mxu0 0
      %724 = vmatpush.bf16.msra.mxu0 0
      %725 = vmatpush.bf16.msra.mxu0 0
      %726 = vmatpush.bf16.msra.mxu0 0
      %727 = vmatpush.bf16.msra.mxu0 0
      %728 = vmatpush.bf16.msra.mxu0 0
      %729 = vmatpush.bf16.msra.mxu0 %v720
      %730 = vmatmul.bf16.gmra.mxu0 %v717
      %v731 = vpop.f32.mrf.mxu0
      %v732 = vadd.f32 0.0, %v731
      %v733 = vpop.f32.mrf.mxu0
      %734 = vdwg.mxu0
      %735 = vrot.lane.b32.xlu0 %v524, 112
      %v736 = vpop.permute.xlu0 %735
      %737 = vrot.lane.b32.xlu0 %v499, 112
      %v738 = vpop.permute.xlu0 %737
      %v740 = vsel %vm450, %v736, 0
      %v743 = vsel %vm450, %v738, 0
      %745 = vmatpush.bf16.xpose.msra.mxu0 0
      %746 = vmatpush.bf16.xpose.msra.mxu0 0
      %747 = vmatpush.bf16.xpose.msra.mxu0 0
      %748 = vmatpush.bf16.xpose.msra.mxu0 0
      %749 = vmatpush.bf16.xpose.msra.mxu0 0
      %750 = vmatpush.bf16.xpose.msra.mxu0 0
      %751 = vmatpush.bf16.xpose.msra.mxu0 0
      %752 = vmatpush.bf16.xpose.msra.mxu0 %v743
      %753 = vmatmul.bf16.gmra.mxu0 %v740
      %v754 = vpop.f32.mrf.mxu0
      %v755 = vadd.f32 0.0, %v754
      %v756 = vpop.f32.mrf.mxu0
      %757 = vdwg.mxu0
      %v758 = vmul.f32 %v755, 0.5
      %v759 = vsel %vm471, %v758, -inf
      %760 = vmax.xlane.f32.xlu0 %v759
      %v761 = vpop.xlane.xlu0 %760
      %v762 = vsub.f32 %v758, %v761
      %v763 = vmul.f32 %v762, 1.442695
      %v764 = vpow.pop %v763
      %v765 = vsel %vm471, %v764, 0.0
      %766 = vadd.xlane.f32.xlu0 %v765
      %v767 = vpop.xlane.xlu0 %766
      %v768 = vrcp.pop %v767
      %v769 = vmul.f32 %v767, %v768
      %v770 = vsub.f32 1.0, %v769
      %v771 = vmul.f32 %v768, %v770
      %v772 = vadd.f32 %v768, %v771
      %vm773 = vweird.f32 %v767
      %vm774 = vweird.f32 %v768
      %vm775 = vmor %vm773, %vm774
      %v776 = vsel %vm775, %v768, %v772
      %v777 = vand.u32 2147483647, %v767
      %vm778 = vcmp.eq.f32.partialorder %v777, 8.507059e+37
      %v779 = vand.u32 %v767, 2147483648
      %v780 = vor.u32 1.1754944e-38, %v779
      %v781 = vsel %vm778, %v780, %v776
      %v782 = vmul.f32 %v764, %v781
      %v783 = vpack.c.bf16 %v782, %v782
      %784 = vrot.lane.b32.xlu0 %v499, 80
      %v785 = vpop.permute.xlu0 %784
      %v787 = vsel %vm471, %v783, 0
      %v790 = vsel %vm505, %v785, 0
      %792 = vmatpush.bf16.msra.mxu0 0
      %793 = vmatpush.bf16.msra.mxu0 0
      %794 = vmatpush.bf16.msra.mxu0 0
      %795 = vmatpush.bf16.msra.mxu0 0
      %796 = vmatpush.bf16.msra.mxu0 0
      %797 = vmatpush.bf16.msra.mxu0 0
      %798 = vmatpush.bf16.msra.mxu0 0
      %799 = vmatpush.bf16.msra.mxu0 %v790
      %800 = vmatmul.bf16.gmra.mxu0 %v787
      %v801 = vpop.f32.mrf.mxu0
      %v802 = vadd.f32 0.0, %v801
      %v803 = vpop.f32.mrf.mxu0
      %804 = vdwg.mxu0
      %805 = vrot.lane.b32.xlu0 %v524, 108
      %v806 = vpop.permute.xlu0 %805
      %807 = vrot.lane.b32.xlu0 %v499, 108
      %v808 = vpop.permute.xlu0 %807
      %v810 = vsel %vm450, %v806, 0
      %v813 = vsel %vm450, %v808, 0
      %815 = vmatpush.bf16.xpose.msra.mxu0 0
      %816 = vmatpush.bf16.xpose.msra.mxu0 0
      %817 = vmatpush.bf16.xpose.msra.mxu0 0
      %818 = vmatpush.bf16.xpose.msra.mxu0 0
      %819 = vmatpush.bf16.xpose.msra.mxu0 0
      %820 = vmatpush.bf16.xpose.msra.mxu0 0
      %821 = vmatpush.bf16.xpose.msra.mxu0 0
      %822 = vmatpush.bf16.xpose.msra.mxu0 %v813
      %823 = vmatmul.bf16.gmra.mxu0 %v810
      %v824 = vpop.f32.mrf.mxu0
      %v825 = vadd.f32 0.0, %v824
      %v826 = vpop.f32.mrf.mxu0
      %827 = vdwg.mxu0
      %v828 = vmul.f32 %v825, 0.5
      %v829 = vsel %vm471, %v828, -inf
      %830 = vmax.xlane.f32.xlu0 %v829
      %v831 = vpop.xlane.xlu0 %830
      %v832 = vsub.f32 %v828, %v831
      %v833 = vmul.f32 %v832, 1.442695
      %v834 = vpow.pop %v833
      %v835 = vsel %vm471, %v834, 0.0
      %836 = vadd.xlane.f32.xlu0 %v835
      %v837 = vpop.xlane.xlu0 %836
      %v838 = vrcp.pop %v837
      %v839 = vmul.f32 %v837, %v838
      %v840 = vsub.f32 1.0, %v839
      %v841 = vmul.f32 %v838, %v840
      %v842 = vadd.f32 %v838, %v841
      %vm843 = vweird.f32 %v837
      %vm844 = vweird.f32 %v838
      %vm845 = vmor %vm843, %vm844
      %v846 = vsel %vm845, %v838, %v842
      %v847 = vand.u32 2147483647, %v837
      %vm848 = vcmp.eq.f32.partialorder %v847, 8.507059e+37
      %v849 = vand.u32 %v837, 2147483648
      %v850 = vor.u32 1.1754944e-38, %v849
      %v851 = vsel %vm848, %v850, %v846
      %v852 = vmul.f32 %v834, %v851
      %v853 = vpack.c.bf16 %v852, %v852
      %854 = vrot.lane.b32.xlu0 %v499, 76
      %v855 = vpop.permute.xlu0 %854
      %v857 = vsel %vm471, %v853, 0
      %v860 = vsel %vm505, %v855, 0
      %862 = vmatpush.bf16.msra.mxu0 0
      %863 = vmatpush.bf16.msra.mxu0 0
      %864 = vmatpush.bf16.msra.mxu0 0
      %865 = vmatpush.bf16.msra.mxu0 0
      %866 = vmatpush.bf16.msra.mxu0 0
      %867 = vmatpush.bf16.msra.mxu0 0
      %868 = vmatpush.bf16.msra.mxu0 0
      %869 = vmatpush.bf16.msra.mxu0 %v860
      %870 = vmatmul.bf16.gmra.mxu0 %v857
      %v871 = vpop.f32.mrf.mxu0
      %v872 = vadd.f32 0.0, %v871
      %v873 = vpop.f32.mrf.mxu0
      %874 = vdwg.mxu0
      %875 = vrot.lane.b32.xlu0 %v524, 104
      %v876 = vpop.permute.xlu0 %875
      %877 = vrot.lane.b32.xlu0 %v499, 104
      %v878 = vpop.permute.xlu0 %877
      %v880 = vsel %vm450, %v876, 0
      %v883 = vsel %vm450, %v878, 0
      %885 = vmatpush.bf16.xpose.msra.mxu0 0
      %886 = vmatpush.bf16.xpose.msra.mxu0 0
      %887 = vmatpush.bf16.xpose.msra.mxu0 0
      %888 = vmatpush.bf16.xpose.msra.mxu0 0
      %889 = vmatpush.bf16.xpose.msra.mxu0 0
      %890 = vmatpush.bf16.xpose.msra.mxu0 0
      %891 = vmatpush.bf16.xpose.msra.mxu0 0
      %892 = vmatpush.bf16.xpose.msra.mxu0 %v883
      %893 = vmatmul.bf16.gmra.mxu0 %v880
      %v894 = vpop.f32.mrf.mxu0
      %v895 = vadd.f32 0.0, %v894
      %v896 = vpop.f32.mrf.mxu0
      %897 = vdwg.mxu0
      %v898 = vmul.f32 %v895, 0.5
      %v899 = vsel %vm471, %v898, -inf
      %900 = vmax.xlane.f32.xlu0 %v899
      %v901 = vpop.xlane.xlu0 %900
      %v902 = vsub.f32 %v898, %v901
      %v903 = vmul.f32 %v902, 1.442695
      %v904 = vpow.pop %v903
      %v905 = vsel %vm471, %v904, 0.0
      %906 = vadd.xlane.f32.xlu0 %v905
      %v907 = vpop.xlane.xlu0 %906
      %v908 = vrcp.pop %v907
      %v909 = vmul.f32 %v907, %v908
      %v910 = vsub.f32 1.0, %v909
      %v911 = vmul.f32 %v908, %v910
      %v912 = vadd.f32 %v908, %v911
      %vm913 = vweird.f32 %v907
      %vm914 = vweird.f32 %v908
      %vm915 = vmor %vm913, %vm914
      %v916 = vsel %vm915, %v908, %v912
      %v917 = vand.u32 2147483647, %v907
      %vm918 = vcmp.eq.f32.partialorder %v917, 8.507059e+37
      %v919 = vand.u32 %v907, 2147483648
      %v920 = vor.u32 1.1754944e-38, %v919
      %v921 = vsel %vm918, %v920, %v916
      %v922 = vmul.f32 %v904, %v921
      %v923 = vpack.c.bf16 %v922, %v922
      %924 = vrot.lane.b32.xlu0 %v499, 72
      %v925 = vpop.permute.xlu0 %924
      %v927 = vsel %vm471, %v923, 0
      %v930 = vsel %vm505, %v925, 0
      %932 = vmatpush.bf16.msra.mxu0 0
      %933 = vmatpush.bf16.msra.mxu0 0
      %934 = vmatpush.bf16.msra.mxu0 0
      %935 = vmatpush.bf16.msra.mxu0 0
      %936 = vmatpush.bf16.msra.mxu0 0
      %937 = vmatpush.bf16.msra.mxu0 0
      %938 = vmatpush.bf16.msra.mxu0 0
      %939 = vmatpush.bf16.msra.mxu0 %v930
      %940 = vmatmul.bf16.gmra.mxu0 %v927
      %v941 = vpop.f32.mrf.mxu0
      %v942 = vadd.f32 0.0, %v941
      %v943 = vpop.f32.mrf.mxu0
      %944 = vdwg.mxu0
      %945 = vrot.lane.b32.xlu0 %v524, 100
      %v946 = vpop.permute.xlu0 %945
      %947 = vrot.lane.b32.xlu0 %v499, 100
      %v948 = vpop.permute.xlu0 %947
      %v950 = vsel %vm450, %v946, 0
      %v953 = vsel %vm450, %v948, 0
      %955 = vmatpush.bf16.xpose.msra.mxu0 0
      %956 = vmatpush.bf16.xpose.msra.mxu0 0
      %957 = vmatpush.bf16.xpose.msra.mxu0 0
      %958 = vmatpush.bf16.xpose.msra.mxu0 0
      %959 = vmatpush.bf16.xpose.msra.mxu0 0
      %960 = vmatpush.bf16.xpose.msra.mxu0 0
      %961 = vmatpush.bf16.xpose.msra.mxu0 0
      %962 = vmatpush.bf16.xpose.msra.mxu0 %v953
      %963 = vmatmul.bf16.gmra.mxu0 %v950
      %v964 = vpop.f32.mrf.mxu0
      %v965 = vadd.f32 0.0, %v964
      %v966 = vpop.f32.mrf.mxu0
      %967 = vdwg.mxu0
      %v968 = vmul.f32 %v965, 0.5
      %v969 = vsel %vm471, %v968, -inf
      %970 = vmax.xlane.f32.xlu0 %v969
      %v971 = vpop.xlane.xlu0 %970
      %v972 = vsub.f32 %v968, %v971
      %v973 = vmul.f32 %v972, 1.442695
      %v974 = vpow.pop %v973
      %v975 = vsel %vm471, %v974, 0.0
      %976 = vadd.xlane.f32.xlu0 %v975
      %v977 = vpop.xlane.xlu0 %976
      %v978 = vrcp.pop %v977
      %v979 = vmul.f32 %v977, %v978
      %v980 = vsub.f32 1.0, %v979
      %v981 = vmul.f32 %v978, %v980
      %v982 = vadd.f32 %v978, %v981
      %vm983 = vweird.f32 %v977
      %vm984 = vweird.f32 %v978
      %vm985 = vmor %vm983, %vm984
      %v986 = vsel %vm985, %v978, %v982
      %v987 = vand.u32 2147483647, %v977
      %vm988 = vcmp.eq.f32.partialorder %v987, 8.507059e+37
      %v989 = vand.u32 %v977, 2147483648
      %v990 = vor.u32 1.1754944e-38, %v989
      %v991 = vsel %vm988, %v990, %v986
      %v992 = vmul.f32 %v974, %v991
      %v993 = vpack.c.bf16 %v992, %v992
      %994 = vrot.lane.b32.xlu0 %v499, 68
      %v995 = vpop.permute.xlu0 %994
      %v997 = vsel %vm471, %v993, 0
      %v1000 = vsel %vm505, %v995, 0
      %1002 = vmatpush.bf16.msra.mxu0 0
      %1003 = vmatpush.bf16.msra.mxu0 0
      %1004 = vmatpush.bf16.msra.mxu0 0
      %1005 = vmatpush.bf16.msra.mxu0 0
      %1006 = vmatpush.bf16.msra.mxu0 0
      %1007 = vmatpush.bf16.msra.mxu0 0
      %1008 = vmatpush.bf16.msra.mxu0 0
      %1009 = vmatpush.bf16.msra.mxu0 %v1000
      %1010 = vmatmul.bf16.gmra.mxu0 %v997
      %v1011 = vpop.f32.mrf.mxu0
      %v1012 = vadd.f32 0.0, %v1011
      %v1013 = vpop.f32.mrf.mxu0
      %1014 = vdwg.mxu0
      %1016 = vrot.lane.b32.xlu0 %v592, 4
      %v1017 = vpop.permute.xlu0 %1016
      %1020 = vrot.lane.b32.xlu0 %v662, 8
      %v1021 = vpop.permute.xlu0 %1020
      %1024 = vrot.lane.b32.xlu0 %v732, 12
      %v1025 = vpop.permute.xlu0 %1024
      %1028 = vrot.lane.b32.xlu0 %v802, 16
      %v1029 = vpop.permute.xlu0 %1028
      %1032 = vrot.lane.b32.xlu0 %v872, 20
      %v1033 = vpop.permute.xlu0 %1032
      %1036 = vrot.lane.b32.xlu0 %v942, 24
      %v1037 = vpop.permute.xlu0 %1036
      %1040 = vrot.lane.b32.xlu0 %v1012, 28
      %v1041 = vpop.permute.xlu0 %1040
      %v1043 = vsel %vm450, %v519, %v1017
      %v1044 = vsel %vm471, %v1043, %v1021
      %vm1045 = vcmask 97280
      %v1046 = vsel %vm1045, %v1044, %v1025
      %vm1047 = vcmask 130048
      %v1048 = vsel %vm1047, %v1046, %v1029
      %vm1049 = vcmask 162816
      %v1050 = vsel %vm1049, %v1048, %v1033
      %vm1051 = vcmask 195584
      %v1052 = vsel %vm1051, %v1050, %v1037
      %vm1053 = vcmask 228352
      %v1054 = vsel %vm1053, %v1052, %v1041
      %v1055 = vpack.c.bf16 %v1054, %v1054
      %v1056 = vld [vmem:[%s6] sm:$0xf]
      %v1057 = vld [vmem:[%s6 + $0x4] sm:$0xf]
      %v1058 = vld [vmem:[%s6 + $0x8] sm:$0xf]
      %v1059 = vld [vmem:[%s6 + $0xc] sm:$0xf]
      %v1060 = vld [vmem:[%s7] sm:$0x1]
      %v1062 = vperm.slane %v1060, 0
      %v1068 = vunpack.c.l.b16 %v1056
      %v1069 = vunpack.c.l.b16 %v1057
      %v1070 = vunpack.c.l.b16 %v1058
      %v1071 = vunpack.c.l.b16 %v1059
      %v1072 = vpack.c.b16 %v1069, %v1068
      %v1073 = vpack.c.b16 %v1071, %v1070
      %v1077 = vsel %vm395, %v1055, 0
      %1079 = vmatpush.bf16.msra.mxu0 0
      %1080 = vmatpush.bf16.msra.mxu0 0
      %1081 = vmatpush.bf16.msra.mxu0 0
      %1082 = vmatpush.bf16.msra.mxu0 0
      %1083 = vmatpush.bf16.msra.mxu0 0
      %1084 = vmatpush.bf16.msra.mxu0 0
      %1085 = vmatpush.bf16.msra.mxu0 %v1073
      %1086 = vmatpush.bf16.msra.mxu0 %v1072
      %1087 = vmatmul.bf16.gmra.mxu0 %v1077
      %v1088 = vpop.f32.mrf.mxu0
      %v1089 = vadd.f32 %v1062, %v1088
      %v1090 = vpop.f32.mrf.mxu0
      %1091 = vdwg.mxu0
      %v1092 = vunpack.c.l.bf16 %v373
      %v1093 = vadd.f32 %v1089, %v1092
      %v1094 = vld [vmem:[%s8] sm:$0x1]
      %v1095 = vld [vmem:[%s9] sm:$0x1]
      %v1096 = vsel %vm395, %v1093, 0.0
      %1097 = vadd.xlane.f32.xlu0 %v1096
      %v1098 = vpop.xlane.xlu0 %1097
      %v1099 = vrcp.pop 32.0
      %v1100 = vmul.f32 32.0, %v1099
      %v1101 = vsub.f32 1.0, %v1100
      %v1102 = vmul.f32 %v1099, %v1101
      %v1103 = vadd.f32 %v1099, %v1102
      %vm1104 = vweird.f32 %v1099
      %v1105 = vsel %vm1104, %v1099, %v1103
      %v1106 = vmul.f32 %v1098, %v1105
      %v1107 = vsub.f32 %v1093, %v1106
      %v1108 = vmul.f32 %v1107, %v1107
      %v1109 = vsel %vm395, %v1108, 0.0
      %1110 = vadd.xlane.f32.xlu0 %v1109
      %v1111 = vpop.xlane.xlu0 %1110
      %v1112 = vmul.f32 %v1111, %v1105
      %v1113 = vadd.f32 %v1112, 1e-05
      %v1114 = vrsqrt.pop %v1113
      %v1115 = vmul.f32 %v1114, %v1113
      %v1116 = vmul.f32 %v1115, %v1114
      %v1117 = vmul.f32 0.5, %v1116
      %v1118 = vsub.f32 1.5, %v1117
      %v1119 = vmul.f32 %v1114, %v1118
      %vm1120 = vweird.f32 %v1113
      %vm1121 = vweird.f32 %v1114
      %vm1122 = vmor %vm1120, %vm1121
      %v1123 = vsel %vm1122, %v1114, %v1119
      %v1124 = vmul.f32 %v1107, %v1123
      %v1126 = vperm.slane %v1094, 0
      %v1128 = vmul.f32 %v1124, %v1126
      %v1130 = vperm.slane %v1095, 0
      %v1132 = vadd.f32 %v1128, %v1130
      %v1133 = vpack.c.bf16 %v1132, %v1132
      %vm1134 = vcmask 257024
      %1135 = vst.msk [vmem:[%s371] sm:$0xf] %vm1134, %v1133
      %p1136 = scmp.lt.s32.totalorder %s21, 1
      %s1137 = scalar_select %p1136, %s21, 1
      %s1138 = smul.addr %s1137, 4
      %s1139 = scalar_lea.vmem %s10, %s1138
      // Predicated region
      $region61: #{transformer_v1_forward.18} parent=59 // pred_check
        %p1140 = pneg %p259
      $region62: #{transformer_v1_forward.18} parent=59 // pred_check_branch
        %1142 = sbr.rel (%p1140) target = $region64
      $region63: #{transformer_v1_forward.18} parent=59 // pred_region
        _
      $region64: #{transformer_v1_forward.18} parent=59 // pred_fallthru
        _
    $region60: #{transformer_v1_forward.18} parent=5 // pred_fallthru
      _
    %p1143 = scmp.le.s32.totalorder 2, %s16
    // Predicated region
    $region65: #{transformer_v1_forward.18} parent=5 // pred_check
      %p1144 = pneg %p1143
    $region66: #{transformer_v1_forward.18} parent=5 // pred_check_branch
      %1146 = sbr.rel (%p1144) target = $region68
    $region67: #{transformer_v1_forward.18} parent=5 // pred_region
      %s1147 = ssub.s32 %s16, 2
      // Predicated region
      $region69: #{transformer_v1_forward.18} parent=67 // pred_check
        %p1148 = pneg %p265
      $region70: #{transformer_v1_forward.18} parent=67 // pred_check_branch
        %1150 = sbr.rel (%p1148) target = $region72
      $region71: #{transformer_v1_forward.18} parent=67 // pred_region
        %p1151 = scmp.lt.s32.totalorder %s22, 1
        %s1152 = scalar_select %p1151, %s22, 1
        %s1153 = smul.addr %s1152, 4
        %s1154 = scalar_lea.vmem %s10, %s1153
      $region72: #{transformer_v1_forward.18} parent=67 // pred_fallthru
        _
    $region68: #{transformer_v1_forward.18} parent=5 // pred_fallthru
      _
  $region6: #{transformer_v1_forward.18} parent=0 // loop_footer
    %s20 = sadd.s32 1, %s16
  $region7: #{transformer_v1_forward.18} parent=0 // loop_footer_branch
    %15 = sbr.rel target = $region3
  $region8: #{transformer_v1_forward.18} parent=0 // loop_exit
    _

</llo_original>
